<compile_context>
chip_gen: v6e
topology: v6e:2x2x1
jax: 0.10.0
libtpu: 0.0.40
codegen_flags: <defaults>
</compile_context>

<pallas_src>
import jax
import jax.numpy as jnp
from jax import lax
from jax.experimental import pallas as pl
from jax.experimental.pallas import tpu as pltpu


def _round_up(x, m):
    return ((x + m - 1) // m) * m


# --------------------------------------------------------------------------- #
# Kernel
# --------------------------------------------------------------------------- #
def lstm_kernel(x_ref, wih_ref, whh_ref, b_ref, wproj_ref, bproj_ref,
                out_ref, gx_ref, hs_ref):
    """Single invocation: full recurrence + deferred output head.

    x_ref     : (T, Dp)      padded inputs (batch==1 flattened away)
    wih_ref   : (Dp, 4*Hp)   W_ih^T, gate cols [i, f, o, g], each Hp wide
    whh_ref   : (Hp, 4*Hp)   W_hh^T, same layout
    b_ref     : (1, 4*Hp)    b_ih + b_hh, same layout
    wproj_ref : (Hp, 1)      middle Linear folded with decoder weight
    bproj_ref : (1,) SMEM    folded output bias (bm*wd + bd)
    out_ref   : (T, 1)
    gx_ref    : (T, 4*Hp)    VMEM scratch: hoisted x @ W_ih^T + bias
    hs_ref    : (T, Hp)      VMEM scratch: h_t history for deferred head
    """
    T = x_ref.shape[0]
    Hp = whh_ref.shape[0]

    # ---- Hoisted, non-recurrent input projection: one well-shaped MXU pass.
    gx_ref[...] = (
        jnp.dot(x_ref[...], wih_ref[...], preferred_element_type=jnp.float32)
        + b_ref[...])

    whh = whh_ref[...]  # loop-invariant; read once

    # ---- Serial recurrence (strictly sequential in t).
    def step(t, carry):
        h, c = carry                                        # (1, Hp) each
        gates = gx_ref[pl.ds(t, 1), :] + jnp.dot(
            h, whh, preferred_element_type=jnp.float32)     # (1, 4*Hp)

        # Gate column order is [i, f, o, g], each 128-lane aligned:
        # one wide sigmoid covers i, f, o; one tanh covers g.
        sig = jax.nn.sigmoid(gates[:, 0:3 * Hp])
        i_g = sig[:, 0:Hp]
        f_g = sig[:, Hp:2 * Hp]
        o_g = sig[:, 2 * Hp:3 * Hp]
        g_g = jnp.tanh(gates[:, 3 * Hp:4 * Hp])

        c_new = f_g * c + i_g * g_g
        h_new = o_g * jnp.tanh(c_new)

        hs_ref[pl.ds(t, 1), :] = h_new
        return (h_new, c_new)

    zeros = jnp.zeros((1, Hp), jnp.float32)                 # h0 = c0 = 0
    lax.fori_loop(0, T, step, (zeros, zeros), unroll=True)

    # ---- Deferred output head: middle Linear(H->1) (+ eval-mode dropout,
    #      identity) folded with decoder Linear(1->1), one matmul + scalar add.
    out_ref[...] = (
        jnp.dot(hs_ref[...], wproj_ref[...], preferred_element_type=jnp.float32)
        + bproj_ref[0])


# --------------------------------------------------------------------------- #
# Parameter preparation (transpose, gate reorder [i,f,g,o] -> [i,f,o,g],
# lane padding, folding of middle+decoder head)
# --------------------------------------------------------------------------- #
def prepare_params(raw, input_size, hidden_size, Dp, Hp):
    H = hidden_size

    def _pad_cols(a, target):
        return jnp.pad(a, ((0, 0), (0, target - a.shape[1])))

    def reorder_pad_gates(w_t):
        # w_t: (K, 4H) with PyTorch gate column order [i, f, g, o]
        # -> (K, 4*Hp) with order [i, f, o, g], each gate zero-padded to Hp.
        i = w_t[:, 0:H]
        f = w_t[:, H:2 * H]
        g = w_t[:, 2 * H:3 * H]
        o = w_t[:, 3 * H:4 * H]
        return jnp.concatenate(
            [_pad_cols(i, Hp), _pad_cols(f, Hp), _pad_cols(o, Hp),
             _pad_cols(g, Hp)], axis=1)

    wih_t = reorder_pad_gates(raw["w_ih"].T)                   # (Din, 4*Hp)
    wih_t = jnp.pad(wih_t, ((0, Dp - input_size), (0, 0)))     # (Dp,  4*Hp)

    whh_t = reorder_pad_gates(raw["w_hh"].T)                   # (H,  4*Hp)
    whh_t = jnp.pad(whh_t, ((0, Hp - H), (0, 0)))              # (Hp, 4*Hp)

    bias = reorder_pad_gates((raw["b_ih"] + raw["b_hh"]).reshape(1, 4 * H))

    # Fold: dec = (h @ wm^T + bm) * wd + bd = h @ (wm^T * wd) + (bm*wd + bd)
    wd = raw["w_dec"][0, 0]
    wproj = raw["w_mid"].T * wd                                # (H, 1)
    wproj = jnp.pad(wproj, ((0, Hp - H), (0, 0)))              # (Hp, 1)
    bproj = (raw["b_mid"][0] * wd + raw["b_dec"][0]).reshape(1)  # (1,)

    return {
        "wih_t": wih_t.astype(jnp.float32),
        "whh_t": whh_t.astype(jnp.float32),
        "bias": bias.astype(jnp.float32),
        "wproj": wproj.astype(jnp.float32),
        "bproj": bproj.astype(jnp.float32),
    }


# --------------------------------------------------------------------------- #
# Wrapper
# --------------------------------------------------------------------------- #
def lstm_torch_forward(inputs, raw_params):
    """inputs: (T, B, input_size) f32, B must be 1.  Returns (T, 1) like the module."""
    T, B, Din = inputs.shape
    assert B == 1, "LSTMTORCH's reshape(T, 1) contract requires batch == 1"
    H = raw_params["w_hh"].shape[1]

    Hp = max(128, _round_up(H, 128))    # lane-align each gate block
    Dp = max(128, _round_up(Din, 128))  # lane-align the input-feature axis

    p = prepare_params(raw_params, Din, H, Dp, Hp)

    x_p = jnp.pad(inputs.reshape(T, Din), ((0, 0), (0, Dp - Din)))  # (T, Dp)

    out = pl.pallas_call(
        lstm_kernel,
        out_shape=jax.ShapeDtypeStruct((T, 1), jnp.float32),
        in_specs=[
            pl.BlockSpec(memory_space=pltpu.MemorySpace.VMEM),   # x        (T, Dp)
            pl.BlockSpec(memory_space=pltpu.MemorySpace.VMEM),   # W_ih^T   (Dp, 4Hp)
            pl.BlockSpec(memory_space=pltpu.MemorySpace.VMEM),   # W_hh^T   (Hp, 4Hp)
            pl.BlockSpec(memory_space=pltpu.MemorySpace.VMEM),   # bias     (1, 4Hp)
            pl.BlockSpec(memory_space=pltpu.MemorySpace.VMEM),   # wproj    (Hp, 1)
            pl.BlockSpec(memory_space=pltpu.MemorySpace.SMEM),   # bproj    (1,)
        ],
        out_specs=pl.BlockSpec(memory_space=pltpu.MemorySpace.VMEM),
        scratch_shapes=[
            pltpu.VMEM((T, 4 * Hp), jnp.float32),   # hoisted gates_x
            pltpu.VMEM((T, Hp), jnp.float32),       # h_t history
        ],
    )(x_p, p["wih_t"], p["whh_t"], p["bias"], p["wproj"], p["bproj"])

    return out   # (T, 1)


# --------------------------------------------------------------------------- #
# Pure-JAX reference (original layout / gate order, unfolded head)
# --------------------------------------------------------------------------- #
def reference_forward(inputs, raw):
    T, B, Din = inputs.shape
    H = raw["w_hh"].shape[1]
    wih_t = raw["w_ih"].T                                  # (Din, 4H)
    whh_t = raw["w_hh"].T                                  # (H,   4H)
    bias = (raw["b_ih"] + raw["b_hh"]).reshape(1, 4 * H)

    def step(carry, x_t):
        h, c = carry
        gates = x_t @ wih_t + h @ whh_t + bias
        i_g = jax.nn.sigmoid(gates[:, 0:H])
        f_g = jax.nn.sigmoid(gates[:, H:2 * H])
        g_g = jnp.tanh(gates[:, 2 * H:3 * H])
        o_g = jax.nn.sigmoid(gates[:, 3 * H:4 * H])
        c_new = f_g * c + i_g * g_g
        h_new = o_g * jnp.tanh(c_new)
        return (h_new, c_new), h_new

    h0 = jnp.zeros((B, H), jnp.float32)
    c0 = jnp.zeros((B, H), jnp.float32)
    _, hs = lax.scan(step, (h0, c0), inputs)               # (T, B, H)
    mid = hs @ raw["w_mid"].T + raw["b_mid"]               # (T, B, 1)
    dec = mid * raw["w_dec"][0, 0] + raw["b_dec"][0]       # (T, B, 1)
    return dec.reshape(T, 1)


# --------------------------------------------------------------------------- #
# Init (mimics PyTorch's U(-1/sqrt(fan_in), 1/sqrt(fan_in)))
# --------------------------------------------------------------------------- #
def init_params(key, input_size, hidden_size):
    H = hidden_size
    k = 1.0 / jnp.sqrt(jnp.float32(H))
    keys = jax.random.split(key, 8)
    u = lambda kk, shape, bound: jax.random.uniform(
        kk, shape, jnp.float32, -bound, bound)
    return {
        "w_ih": u(keys[0], (4 * H, input_size), k),   # weight_ih_l0 [i,f,g,o]
        "w_hh": u(keys[1], (4 * H, H), k),            # weight_hh_l0
        "b_ih": u(keys[2], (4 * H,), k),
        "b_hh": u(keys[3], (4 * H,), k),
        "w_mid": u(keys[4], (1, H), k),               # Linear(64, 1)
        "b_mid": u(keys[5], (1,), k),
        "w_dec": u(keys[6], (1, 1), 1.0),             # Linear(1, 1)
        "b_dec": u(keys[7], (1,), 1.0),
    }


if __name__ == "__main__":
    # Small shapes consistent with the module: seq=16, batch=1, input=43, hidden=64.
    T, B, Din, H = 16, 1, 43, 64

    key = jax.random.PRNGKey(0)
    k_in, k_par = jax.random.split(key)
    x = jax.random.normal(k_in, (T, B, Din), jnp.float32)
    raw = init_params(k_par, Din, H)

    out = lstm_torch_forward(x, raw)
    out = jax.block_until_ready(out)

    ref = reference_forward(x, raw)
    assert out.shape == (T, 1)
    assert jnp.allclose(out, ref, atol=1e-4, rtol=1e-4), "mismatch vs reference"

    print("KERNEL_OK")
</pallas_src>

<mosaic_0001>
module attributes {stable_mosaic.version = 11 : i64} {
  func.func @lstm_kernel(%arg0: memref<16x128xf32, #tpu.memory_space<vmem>>, %arg1: memref<128x512xf32, #tpu.memory_space<vmem>>, %arg2: memref<128x512xf32, #tpu.memory_space<vmem>>, %arg3: memref<1x512xf32, #tpu.memory_space<vmem>>, %arg4: memref<128x1xf32, #tpu.memory_space<vmem>>, %arg5: memref<1xf32, #tpu.memory_space<smem>>, %arg6: memref<16x1xf32, #tpu.memory_space<vmem>>, %arg7: memref<16x512xf32, #tpu.memory_space<vmem>>, %arg8: memref<16x128xf32, #tpu.memory_space<vmem>>) attributes {dimension_semantics = [], scalar_prefetch = 0 : i64, scratch_operands = 2 : i64, tpu.core_type = #tpu.core_type<tc>} {
    %c0 = arith.constant 0 : index
    %c0_0 = arith.constant 0 : index
    %0 = vector.load %arg0[%c0, %c0_0] : memref<16x128xf32, #tpu.memory_space<vmem>>, vector<16x128xf32>
    %c0_1 = arith.constant 0 : index
    %c0_2 = arith.constant 0 : index
    %1 = vector.load %arg1[%c0_1, %c0_2] : memref<128x512xf32, #tpu.memory_space<vmem>>, vector<128x512xf32>
    %cst = arith.constant dense<0.000000e+00> : vector<16x512xf32>
    %2 = tpu.matmul %0, %1, %cst {dimension_numbers = #tpu.dot_dimension_numbers<[1], [0], [0], [1], [0, 0, 1, 1], [], []>} : vector<16x128xf32>, vector<128x512xf32>, vector<16x512xf32> -> vector<16x512xf32>
    %c0_3 = arith.constant 0 : index
    %c0_4 = arith.constant 0 : index
    %3 = vector.load %arg3[%c0_3, %c0_4] : memref<1x512xf32, #tpu.memory_space<vmem>>, vector<1x512xf32>
    %4 = vector.broadcast %3 : vector<1x512xf32> to vector<16x512xf32>
    %5 = arith.addf %2, %4 : vector<16x512xf32>
    %c0_5 = arith.constant 0 : index
    %c0_6 = arith.constant 0 : index
    %6 = vector.load %arg7[%c0_5, %c0_6] : memref<16x512xf32, #tpu.memory_space<vmem>>, vector<16x512xf32>
    tpu.vector_store %arg7[%c0_5, %c0_6], %5 {strides = array<i32>} : memref<16x512xf32, #tpu.memory_space<vmem>>, vector<16x512xf32>,
    %c0_7 = arith.constant 0 : index
    %c0_8 = arith.constant 0 : index
    %7 = vector.load %arg2[%c0_7, %c0_8] : memref<128x512xf32, #tpu.memory_space<vmem>>, vector<128x512xf32>
    %cst_9 = arith.constant 0.000000e+00 : f32
    %8 = vector.broadcast %cst_9 : f32 to vector<1x128xf32>
    %c0_i32 = arith.constant 0 : i32
    %9 = arith.index_cast %c0_i32 : i32 to index
    %c0_10 = arith.constant 0 : index
    %10 = vector.load %arg7[%9, %c0_10] : memref<16x512xf32, #tpu.memory_space<vmem>>, vector<1x512xf32>
    %cst_11 = arith.constant dense<0.000000e+00> : vector<1x512xf32>
    %11 = tpu.matmul %8, %7, %cst_11 {dimension_numbers = #tpu.dot_dimension_numbers<[1], [0], [0], [1], [0, 0, 1, 1], [], []>} : vector<1x128xf32>, vector<128x512xf32>, vector<1x512xf32> -> vector<1x512xf32>
    %12 = arith.addf %10, %11 : vector<1x512xf32>
    %13 = vector.extract_strided_slice %12 {offsets = [0, 0], sizes = [1, 384], strides = [1, 1]} : vector<1x512xf32> to vector<1x384xf32>
    %14 = arith.negf %13 : vector<1x384xf32>
    %15 = math.exp %14 : vector<1x384xf32>
    %cst_12 = arith.constant 1.000000e+00 : f32
    %16 = vector.broadcast %cst_12 : f32 to vector<1x384xf32>
    %17 = arith.addf %16, %15 : vector<1x384xf32>
    %18 = arith.divf %16, %17 : vector<1x384xf32>
    %19 = vector.extract_strided_slice %18 {offsets = [0, 0], sizes = [1, 128], strides = [1, 1]} : vector<1x384xf32> to vector<1x128xf32>
    %20 = vector.extract_strided_slice %18 {offsets = [0, 128], sizes = [1, 128], strides = [1, 1]} : vector<1x384xf32> to vector<1x128xf32>
    %21 = vector.extract_strided_slice %18 {offsets = [0, 256], sizes = [1, 128], strides = [1, 1]} : vector<1x384xf32> to vector<1x128xf32>
    %22 = vector.extract_strided_slice %12 {offsets = [0, 384], sizes = [1, 128], strides = [1, 1]} : vector<1x512xf32> to vector<1x128xf32>
    %23 = math.tanh %22 : vector<1x128xf32>
    %24 = arith.mulf %20, %8 : vector<1x128xf32>
    %25 = arith.mulf %19, %23 : vector<1x128xf32>
    %26 = arith.addf %24, %25 : vector<1x128xf32>
    %27 = math.tanh %26 : vector<1x128xf32>
    %28 = arith.mulf %21, %27 : vector<1x128xf32>
    %29 = arith.index_cast %c0_i32 : i32 to index
    %c0_13 = arith.constant 0 : index
    %30 = vector.load %arg8[%29, %c0_13] : memref<16x128xf32, #tpu.memory_space<vmem>>, vector<1x128xf32>
    tpu.vector_store %arg8[%29, %c0_13], %28 {strides = array<i32>} : memref<16x128xf32, #tpu.memory_space<vmem>>, vector<1x128xf32>,
    %c1_i32 = arith.constant 1 : i32
    %31 = arith.index_cast %c1_i32 : i32 to index
    %c0_14 = arith.constant 0 : index
    %32 = vector.load %arg7[%31, %c0_14] : memref<16x512xf32, #tpu.memory_space<vmem>>, vector<1x512xf32>
    %cst_15 = arith.constant dense<0.000000e+00> : vector<1x512xf32>
    %33 = tpu.matmul %28, %7, %cst_15 {dimension_numbers = #tpu.dot_dimension_numbers<[1], [0], [0], [1], [0, 0, 1, 1], [], []>} : vector<1x128xf32>, vector<128x512xf32>, vector<1x512xf32> -> vector<1x512xf32>
    %34 = arith.addf %32, %33 : vector<1x512xf32>
    %35 = vector.extract_strided_slice %34 {offsets = [0, 0], sizes = [1, 384], strides = [1, 1]} : vector<1x512xf32> to vector<1x384xf32>
    %36 = arith.negf %35 : vector<1x384xf32>
    %37 = math.exp %36 : vector<1x384xf32>
    %cst_16 = arith.constant 1.000000e+00 : f32
    %38 = vector.broadcast %cst_16 : f32 to vector<1x384xf32>
    %39 = arith.addf %38, %37 : vector<1x384xf32>
    %40 = arith.divf %38, %39 : vector<1x384xf32>
    %41 = vector.extract_strided_slice %40 {offsets = [0, 0], sizes = [1, 128], strides = [1, 1]} : vector<1x384xf32> to vector<1x128xf32>
    %42 = vector.extract_strided_slice %40 {offsets = [0, 128], sizes = [1, 128], strides = [1, 1]} : vector<1x384xf32> to vector<1x128xf32>
    %43 = vector.extract_strided_slice %40 {offsets = [0, 256], sizes = [1, 128], strides = [1, 1]} : vector<1x384xf32> to vector<1x128xf32>
    %44 = vector.extract_strided_slice %34 {offsets = [0, 384], sizes = [1, 128], strides = [1, 1]} : vector<1x512xf32> to vector<1x128xf32>
    %45 = math.tanh %44 : vector<1x128xf32>
    %46 = arith.mulf %42, %26 : vector<1x128xf32>
    %47 = arith.mulf %41, %45 : vector<1x128xf32>
    %48 = arith.addf %46, %47 : vector<1x128xf32>
    %49 = math.tanh %48 : vector<1x128xf32>
    %50 = arith.mulf %43, %49 : vector<1x128xf32>
    %51 = arith.index_cast %c1_i32 : i32 to index
    %c0_17 = arith.constant 0 : index
    %52 = vector.load %arg8[%51, %c0_17] : memref<16x128xf32, #tpu.memory_space<vmem>>, vector<1x128xf32>
    tpu.vector_store %arg8[%51, %c0_17], %50 {strides = array<i32>} : memref<16x128xf32, #tpu.memory_space<vmem>>, vector<1x128xf32>,
    %c2_i32 = arith.constant 2 : i32
    %53 = arith.index_cast %c2_i32 : i32 to index
    %c0_18 = arith.constant 0 : index
    %54 = vector.load %arg7[%53, %c0_18] : memref<16x512xf32, #tpu.memory_space<vmem>>, vector<1x512xf32>
    %cst_19 = arith.constant dense<0.000000e+00> : vector<1x512xf32>
    %55 = tpu.matmul %50, %7, %cst_19 {dimension_numbers = #tpu.dot_dimension_numbers<[1], [0], [0], [1], [0, 0, 1, 1], [], []>} : vector<1x128xf32>, vector<128x512xf32>, vector<1x512xf32> -> vector<1x512xf32>
    %56 = arith.addf %54, %55 : vector<1x512xf32>
    %57 = vector.extract_strided_slice %56 {offsets = [0, 0], sizes = [1, 384], strides = [1, 1]} : vector<1x512xf32> to vector<1x384xf32>
    %58 = arith.negf %57 : vector<1x384xf32>
    %59 = math.exp %58 : vector<1x384xf32>
    %cst_20 = arith.constant 1.000000e+00 : f32
    %60 = vector.broadcast %cst_20 : f32 to vector<1x384xf32>
    %61 = arith.addf %60, %59 : vector<1x384xf32>
    %62 = arith.divf %60, %61 : vector<1x384xf32>
    %63 = vector.extract_strided_slice %62 {offsets = [0, 0], sizes = [1, 128], strides = [1, 1]} : vector<1x384xf32> to vector<1x128xf32>
    %64 = vector.extract_strided_slice %62 {offsets = [0, 128], sizes = [1, 128], strides = [1, 1]} : vector<1x384xf32> to vector<1x128xf32>
    %65 = vector.extract_strided_slice %62 {offsets = [0, 256], sizes = [1, 128], strides = [1, 1]} : vector<1x384xf32> to vector<1x128xf32>
    %66 = vector.extract_strided_slice %56 {offsets = [0, 384], sizes = [1, 128], strides = [1, 1]} : vector<1x512xf32> to vector<1x128xf32>
    %67 = math.tanh %66 : vector<1x128xf32>
    %68 = arith.mulf %64, %48 : vector<1x128xf32>
    %69 = arith.mulf %63, %67 : vector<1x128xf32>
    %70 = arith.addf %68, %69 : vector<1x128xf32>
    %71 = math.tanh %70 : vector<1x128xf32>
    %72 = arith.mulf %65, %71 : vector<1x128xf32>
    %73 = arith.index_cast %c2_i32 : i32 to index
    %c0_21 = arith.constant 0 : index
    %74 = vector.load %arg8[%73, %c0_21] : memref<16x128xf32, #tpu.memory_space<vmem>>, vector<1x128xf32>
    tpu.vector_store %arg8[%73, %c0_21], %72 {strides = array<i32>} : memref<16x128xf32, #tpu.memory_space<vmem>>, vector<1x128xf32>,
    %c3_i32 = arith.constant 3 : i32
    %75 = arith.index_cast %c3_i32 : i32 to index
    %c0_22 = arith.constant 0 : index
    %76 = vector.load %arg7[%75, %c0_22] : memref<16x512xf32, #tpu.memory_space<vmem>>, vector<1x512xf32>
    %cst_23 = arith.constant dense<0.000000e+00> : vector<1x512xf32>
    %77 = tpu.matmul %72, %7, %cst_23 {dimension_numbers = #tpu.dot_dimension_numbers<[1], [0], [0], [1], [0, 0, 1, 1], [], []>} : vector<1x128xf32>, vector<128x512xf32>, vector<1x512xf32> -> vector<1x512xf32>
    %78 = arith.addf %76, %77 : vector<1x512xf32>
    %79 = vector.extract_strided_slice %78 {offsets = [0, 0], sizes = [1, 384], strides = [1, 1]} : vector<1x512xf32> to vector<1x384xf32>
    %80 = arith.negf %79 : vector<1x384xf32>
    %81 = math.exp %80 : vector<1x384xf32>
    %cst_24 = arith.constant 1.000000e+00 : f32
    %82 = vector.broadcast %cst_24 : f32 to vector<1x384xf32>
    %83 = arith.addf %82, %81 : vector<1x384xf32>
    %84 = arith.divf %82, %83 : vector<1x384xf32>
    %85 = vector.extract_strided_slice %84 {offsets = [0, 0], sizes = [1, 128], strides = [1, 1]} : vector<1x384xf32> to vector<1x128xf32>
    %86 = vector.extract_strided_slice %84 {offsets = [0, 128], sizes = [1, 128], strides = [1, 1]} : vector<1x384xf32> to vector<1x128xf32>
    %87 = vector.extract_strided_slice %84 {offsets = [0, 256], sizes = [1, 128], strides = [1, 1]} : vector<1x384xf32> to vector<1x128xf32>
    %88 = vector.extract_strided_slice %78 {offsets = [0, 384], sizes = [1, 128], strides = [1, 1]} : vector<1x512xf32> to vector<1x128xf32>
    %89 = math.tanh %88 : vector<1x128xf32>
    %90 = arith.mulf %86, %70 : vector<1x128xf32>
    %91 = arith.mulf %85, %89 : vector<1x128xf32>
    %92 = arith.addf %90, %91 : vector<1x128xf32>
    %93 = math.tanh %92 : vector<1x128xf32>
    %94 = arith.mulf %87, %93 : vector<1x128xf32>
    %95 = arith.index_cast %c3_i32 : i32 to index
    %c0_25 = arith.constant 0 : index
    %96 = vector.load %arg8[%95, %c0_25] : memref<16x128xf32, #tpu.memory_space<vmem>>, vector<1x128xf32>
    tpu.vector_store %arg8[%95, %c0_25], %94 {strides = array<i32>} : memref<16x128xf32, #tpu.memory_space<vmem>>, vector<1x128xf32>,
    %c4_i32 = arith.constant 4 : i32
    %97 = arith.index_cast %c4_i32 : i32 to index
    %c0_26 = arith.constant 0 : index
    %98 = vector.load %arg7[%97, %c0_26] : memref<16x512xf32, #tpu.memory_space<vmem>>, vector<1x512xf32>
    %cst_27 = arith.constant dense<0.000000e+00> : vector<1x512xf32>
    %99 = tpu.matmul %94, %7, %cst_27 {dimension_numbers = #tpu.dot_dimension_numbers<[1], [0], [0], [1], [0, 0, 1, 1], [], []>} : vector<1x128xf32>, vector<128x512xf32>, vector<1x512xf32> -> vector<1x512xf32>
    %100 = arith.addf %98, %99 : vector<1x512xf32>
    %101 = vector.extract_strided_slice %100 {offsets = [0, 0], sizes = [1, 384], strides = [1, 1]} : vector<1x512xf32> to vector<1x384xf32>
    %102 = arith.negf %101 : vector<1x384xf32>
    %103 = math.exp %102 : vector<1x384xf32>
    %cst_28 = arith.constant 1.000000e+00 : f32
    %104 = vector.broadcast %cst_28 : f32 to vector<1x384xf32>
    %105 = arith.addf %104, %103 : vector<1x384xf32>
    %106 = arith.divf %104, %105 : vector<1x384xf32>
    %107 = vector.extract_strided_slice %106 {offsets = [0, 0], sizes = [1, 128], strides = [1, 1]} : vector<1x384xf32> to vector<1x128xf32>
    %108 = vector.extract_strided_slice %106 {offsets = [0, 128], sizes = [1, 128], strides = [1, 1]} : vector<1x384xf32> to vector<1x128xf32>
    %109 = vector.extract_strided_slice %106 {offsets = [0, 256], sizes = [1, 128], strides = [1, 1]} : vector<1x384xf32> to vector<1x128xf32>
    %110 = vector.extract_strided_slice %100 {offsets = [0, 384], sizes = [1, 128], strides = [1, 1]} : vector<1x512xf32> to vector<1x128xf32>
    %111 = math.tanh %110 : vector<1x128xf32>
    %112 = arith.mulf %108, %92 : vector<1x128xf32>
    %113 = arith.mulf %107, %111 : vector<1x128xf32>
    %114 = arith.addf %112, %113 : vector<1x128xf32>
    %115 = math.tanh %114 : vector<1x128xf32>
    %116 = arith.mulf %109, %115 : vector<1x128xf32>
    %117 = arith.index_cast %c4_i32 : i32 to index
    %c0_29 = arith.constant 0 : index
    %118 = vector.load %arg8[%117, %c0_29] : memref<16x128xf32, #tpu.memory_space<vmem>>, vector<1x128xf32>
    tpu.vector_store %arg8[%117, %c0_29], %116 {strides = array<i32>} : memref<16x128xf32, #tpu.memory_space<vmem>>, vector<1x128xf32>,
    %c5_i32 = arith.constant 5 : i32
    %119 = arith.index_cast %c5_i32 : i32 to index
    %c0_30 = arith.constant 0 : index
    %120 = vector.load %arg7[%119, %c0_30] : memref<16x512xf32, #tpu.memory_space<vmem>>, vector<1x512xf32>
    %cst_31 = arith.constant dense<0.000000e+00> : vector<1x512xf32>
    %121 = tpu.matmul %116, %7, %cst_31 {dimension_numbers = #tpu.dot_dimension_numbers<[1], [0], [0], [1], [0, 0, 1, 1], [], []>} : vector<1x128xf32>, vector<128x512xf32>, vector<1x512xf32> -> vector<1x512xf32>
    %122 = arith.addf %120, %121 : vector<1x512xf32>
    %123 = vector.extract_strided_slice %122 {offsets = [0, 0], sizes = [1, 384], strides = [1, 1]} : vector<1x512xf32> to vector<1x384xf32>
    %124 = arith.negf %123 : vector<1x384xf32>
    %125 = math.exp %124 : vector<1x384xf32>
    %cst_32 = arith.constant 1.000000e+00 : f32
    %126 = vector.broadcast %cst_32 : f32 to vector<1x384xf32>
    %127 = arith.addf %126, %125 : vector<1x384xf32>
    %128 = arith.divf %126, %127 : vector<1x384xf32>
    %129 = vector.extract_strided_slice %128 {offsets = [0, 0], sizes = [1, 128], strides = [1, 1]} : vector<1x384xf32> to vector<1x128xf32>
    %130 = vector.extract_strided_slice %128 {offsets = [0, 128], sizes = [1, 128], strides = [1, 1]} : vector<1x384xf32> to vector<1x128xf32>
    %131 = vector.extract_strided_slice %128 {offsets = [0, 256], sizes = [1, 128], strides = [1, 1]} : vector<1x384xf32> to vector<1x128xf32>
    %132 = vector.extract_strided_slice %122 {offsets = [0, 384], sizes = [1, 128], strides = [1, 1]} : vector<1x512xf32> to vector<1x128xf32>
    %133 = math.tanh %132 : vector<1x128xf32>
    %134 = arith.mulf %130, %114 : vector<1x128xf32>
    %135 = arith.mulf %129, %133 : vector<1x128xf32>
    %136 = arith.addf %134, %135 : vector<1x128xf32>
    %137 = math.tanh %136 : vector<1x128xf32>
    %138 = arith.mulf %131, %137 : vector<1x128xf32>
    %139 = arith.index_cast %c5_i32 : i32 to index
    %c0_33 = arith.constant 0 : index
    %140 = vector.load %arg8[%139, %c0_33] : memref<16x128xf32, #tpu.memory_space<vmem>>, vector<1x128xf32>
    tpu.vector_store %arg8[%139, %c0_33], %138 {strides = array<i32>} : memref<16x128xf32, #tpu.memory_space<vmem>>, vector<1x128xf32>,
    %c6_i32 = arith.constant 6 : i32
    %141 = arith.index_cast %c6_i32 : i32 to index
    %c0_34 = arith.constant 0 : index
    %142 = vector.load %arg7[%141, %c0_34] : memref<16x512xf32, #tpu.memory_space<vmem>>, vector<1x512xf32>
    %cst_35 = arith.constant dense<0.000000e+00> : vector<1x512xf32>
    %143 = tpu.matmul %138, %7, %cst_35 {dimension_numbers = #tpu.dot_dimension_numbers<[1], [0], [0], [1], [0, 0, 1, 1], [], []>} : vector<1x128xf32>, vector<128x512xf32>, vector<1x512xf32> -> vector<1x512xf32>
    %144 = arith.addf %142, %143 : vector<1x512xf32>
    %145 = vector.extract_strided_slice %144 {offsets = [0, 0], sizes = [1, 384], strides = [1, 1]} : vector<1x512xf32> to vector<1x384xf32>
    %146 = arith.negf %145 : vector<1x384xf32>
    %147 = math.exp %146 : vector<1x384xf32>
    %cst_36 = arith.constant 1.000000e+00 : f32
    %148 = vector.broadcast %cst_36 : f32 to vector<1x384xf32>
    %149 = arith.addf %148, %147 : vector<1x384xf32>
    %150 = arith.divf %148, %149 : vector<1x384xf32>
    %151 = vector.extract_strided_slice %150 {offsets = [0, 0], sizes = [1, 128], strides = [1, 1]} : vector<1x384xf32> to vector<1x128xf32>
    %152 = vector.extract_strided_slice %150 {offsets = [0, 128], sizes = [1, 128], strides = [1, 1]} : vector<1x384xf32> to vector<1x128xf32>
    %153 = vector.extract_strided_slice %150 {offsets = [0, 256], sizes = [1, 128], strides = [1, 1]} : vector<1x384xf32> to vector<1x128xf32>
    %154 = vector.extract_strided_slice %144 {offsets = [0, 384], sizes = [1, 128], strides = [1, 1]} : vector<1x512xf32> to vector<1x128xf32>
    %155 = math.tanh %154 : vector<1x128xf32>
    %156 = arith.mulf %152, %136 : vector<1x128xf32>
    %157 = arith.mulf %151, %155 : vector<1x128xf32>
    %158 = arith.addf %156, %157 : vector<1x128xf32>
    %159 = math.tanh %158 : vector<1x128xf32>
    %160 = arith.mulf %153, %159 : vector<1x128xf32>
    %161 = arith.index_cast %c6_i32 : i32 to index
    %c0_37 = arith.constant 0 : index
    %162 = vector.load %arg8[%161, %c0_37] : memref<16x128xf32, #tpu.memory_space<vmem>>, vector<1x128xf32>
    tpu.vector_store %arg8[%161, %c0_37], %160 {strides = array<i32>} : memref<16x128xf32, #tpu.memory_space<vmem>>, vector<1x128xf32>,
    %c7_i32 = arith.constant 7 : i32
    %163 = arith.index_cast %c7_i32 : i32 to index
    %c0_38 = arith.constant 0 : index
    %164 = vector.load %arg7[%163, %c0_38] : memref<16x512xf32, #tpu.memory_space<vmem>>, vector<1x512xf32>
    %cst_39 = arith.constant dense<0.000000e+00> : vector<1x512xf32>
    %165 = tpu.matmul %160, %7, %cst_39 {dimension_numbers = #tpu.dot_dimension_numbers<[1], [0], [0], [1], [0, 0, 1, 1], [], []>} : vector<1x128xf32>, vector<128x512xf32>, vector<1x512xf32> -> vector<1x512xf32>
    %166 = arith.addf %164, %165 : vector<1x512xf32>
    %167 = vector.extract_strided_slice %166 {offsets = [0, 0], sizes = [1, 384], strides = [1, 1]} : vector<1x512xf32> to vector<1x384xf32>
    %168 = arith.negf %167 : vector<1x384xf32>
    %169 = math.exp %168 : vector<1x384xf32>
    %cst_40 = arith.constant 1.000000e+00 : f32
    %170 = vector.broadcast %cst_40 : f32 to vector<1x384xf32>
    %171 = arith.addf %170, %169 : vector<1x384xf32>
    %172 = arith.divf %170, %171 : vector<1x384xf32>
    %173 = vector.extract_strided_slice %172 {offsets = [0, 0], sizes = [1, 128], strides = [1, 1]} : vector<1x384xf32> to vector<1x128xf32>
    %174 = vector.extract_strided_slice %172 {offsets = [0, 128], sizes = [1, 128], strides = [1, 1]} : vector<1x384xf32> to vector<1x128xf32>
    %175 = vector.extract_strided_slice %172 {offsets = [0, 256], sizes = [1, 128], strides = [1, 1]} : vector<1x384xf32> to vector<1x128xf32>
    %176 = vector.extract_strided_slice %166 {offsets = [0, 384], sizes = [1, 128], strides = [1, 1]} : vector<1x512xf32> to vector<1x128xf32>
    %177 = math.tanh %176 : vector<1x128xf32>
    %178 = arith.mulf %174, %158 : vector<1x128xf32>
    %179 = arith.mulf %173, %177 : vector<1x128xf32>
    %180 = arith.addf %178, %179 : vector<1x128xf32>
    %181 = math.tanh %180 : vector<1x128xf32>
    %182 = arith.mulf %175, %181 : vector<1x128xf32>
    %183 = arith.index_cast %c7_i32 : i32 to index
    %c0_41 = arith.constant 0 : index
    %184 = vector.load %arg8[%183, %c0_41] : memref<16x128xf32, #tpu.memory_space<vmem>>, vector<1x128xf32>
    tpu.vector_store %arg8[%183, %c0_41], %182 {strides = array<i32>} : memref<16x128xf32, #tpu.memory_space<vmem>>, vector<1x128xf32>,
    %c8_i32 = arith.constant 8 : i32
    %185 = arith.index_cast %c8_i32 : i32 to index
    %c0_42 = arith.constant 0 : index
    %186 = vector.load %arg7[%185, %c0_42] : memref<16x512xf32, #tpu.memory_space<vmem>>, vector<1x512xf32>
    %cst_43 = arith.constant dense<0.000000e+00> : vector<1x512xf32>
    %187 = tpu.matmul %182, %7, %cst_43 {dimension_numbers = #tpu.dot_dimension_numbers<[1], [0], [0], [1], [0, 0, 1, 1], [], []>} : vector<1x128xf32>, vector<128x512xf32>, vector<1x512xf32> -> vector<1x512xf32>
    %188 = arith.addf %186, %187 : vector<1x512xf32>
    %189 = vector.extract_strided_slice %188 {offsets = [0, 0], sizes = [1, 384], strides = [1, 1]} : vector<1x512xf32> to vector<1x384xf32>
    %190 = arith.negf %189 : vector<1x384xf32>
    %191 = math.exp %190 : vector<1x384xf32>
    %cst_44 = arith.constant 1.000000e+00 : f32
    %192 = vector.broadcast %cst_44 : f32 to vector<1x384xf32>
    %193 = arith.addf %192, %191 : vector<1x384xf32>
    %194 = arith.divf %192, %193 : vector<1x384xf32>
    %195 = vector.extract_strided_slice %194 {offsets = [0, 0], sizes = [1, 128], strides = [1, 1]} : vector<1x384xf32> to vector<1x128xf32>
    %196 = vector.extract_strided_slice %194 {offsets = [0, 128], sizes = [1, 128], strides = [1, 1]} : vector<1x384xf32> to vector<1x128xf32>
    %197 = vector.extract_strided_slice %194 {offsets = [0, 256], sizes = [1, 128], strides = [1, 1]} : vector<1x384xf32> to vector<1x128xf32>
    %198 = vector.extract_strided_slice %188 {offsets = [0, 384], sizes = [1, 128], strides = [1, 1]} : vector<1x512xf32> to vector<1x128xf32>
    %199 = math.tanh %198 : vector<1x128xf32>
    %200 = arith.mulf %196, %180 : vector<1x128xf32>
    %201 = arith.mulf %195, %199 : vector<1x128xf32>
    %202 = arith.addf %200, %201 : vector<1x128xf32>
    %203 = math.tanh %202 : vector<1x128xf32>
    %204 = arith.mulf %197, %203 : vector<1x128xf32>
    %205 = arith.index_cast %c8_i32 : i32 to index
    %c0_45 = arith.constant 0 : index
    %206 = vector.load %arg8[%205, %c0_45] : memref<16x128xf32, #tpu.memory_space<vmem>>, vector<1x128xf32>
    tpu.vector_store %arg8[%205, %c0_45], %204 {strides = array<i32>} : memref<16x128xf32, #tpu.memory_space<vmem>>, vector<1x128xf32>,
    %c9_i32 = arith.constant 9 : i32
    %207 = arith.index_cast %c9_i32 : i32 to index
    %c0_46 = arith.constant 0 : index
    %208 = vector.load %arg7[%207, %c0_46] : memref<16x512xf32, #tpu.memory_space<vmem>>, vector<1x512xf32>
    %cst_47 = arith.constant dense<0.000000e+00> : vector<1x512xf32>
    %209 = tpu.matmul %204, %7, %cst_47 {dimension_numbers = #tpu.dot_dimension_numbers<[1], [0], [0], [1], [0, 0, 1, 1], [], []>} : vector<1x128xf32>, vector<128x512xf32>, vector<1x512xf32> -> vector<1x512xf32>
    %210 = arith.addf %208, %209 : vector<1x512xf32>
    %211 = vector.extract_strided_slice %210 {offsets = [0, 0], sizes = [1, 384], strides = [1, 1]} : vector<1x512xf32> to vector<1x384xf32>
    %212 = arith.negf %211 : vector<1x384xf32>
    %213 = math.exp %212 : vector<1x384xf32>
    %cst_48 = arith.constant 1.000000e+00 : f32
    %214 = vector.broadcast %cst_48 : f32 to vector<1x384xf32>
    %215 = arith.addf %214, %213 : vector<1x384xf32>
    %216 = arith.divf %214, %215 : vector<1x384xf32>
    %217 = vector.extract_strided_slice %216 {offsets = [0, 0], sizes = [1, 128], strides = [1, 1]} : vector<1x384xf32> to vector<1x128xf32>
    %218 = vector.extract_strided_slice %216 {offsets = [0, 128], sizes = [1, 128], strides = [1, 1]} : vector<1x384xf32> to vector<1x128xf32>
    %219 = vector.extract_strided_slice %216 {offsets = [0, 256], sizes = [1, 128], strides = [1, 1]} : vector<1x384xf32> to vector<1x128xf32>
    %220 = vector.extract_strided_slice %210 {offsets = [0, 384], sizes = [1, 128], strides = [1, 1]} : vector<1x512xf32> to vector<1x128xf32>
    %221 = math.tanh %220 : vector<1x128xf32>
    %222 = arith.mulf %218, %202 : vector<1x128xf32>
    %223 = arith.mulf %217, %221 : vector<1x128xf32>
    %224 = arith.addf %222, %223 : vector<1x128xf32>
    %225 = math.tanh %224 : vector<1x128xf32>
    %226 = arith.mulf %219, %225 : vector<1x128xf32>
    %227 = arith.index_cast %c9_i32 : i32 to index
    %c0_49 = arith.constant 0 : index
    %228 = vector.load %arg8[%227, %c0_49] : memref<16x128xf32, #tpu.memory_space<vmem>>, vector<1x128xf32>
    tpu.vector_store %arg8[%227, %c0_49], %226 {strides = array<i32>} : memref<16x128xf32, #tpu.memory_space<vmem>>, vector<1x128xf32>,
    %c10_i32 = arith.constant 10 : i32
    %229 = arith.index_cast %c10_i32 : i32 to index
    %c0_50 = arith.constant 0 : index
    %230 = vector.load %arg7[%229, %c0_50] : memref<16x512xf32, #tpu.memory_space<vmem>>, vector<1x512xf32>
    %cst_51 = arith.constant dense<0.000000e+00> : vector<1x512xf32>
    %231 = tpu.matmul %226, %7, %cst_51 {dimension_numbers = #tpu.dot_dimension_numbers<[1], [0], [0], [1], [0, 0, 1, 1], [], []>} : vector<1x128xf32>, vector<128x512xf32>, vector<1x512xf32> -> vector<1x512xf32>
    %232 = arith.addf %230, %231 : vector<1x512xf32>
    %233 = vector.extract_strided_slice %232 {offsets = [0, 0], sizes = [1, 384], strides = [1, 1]} : vector<1x512xf32> to vector<1x384xf32>
    %234 = arith.negf %233 : vector<1x384xf32>
    %235 = math.exp %234 : vector<1x384xf32>
    %cst_52 = arith.constant 1.000000e+00 : f32
    %236 = vector.broadcast %cst_52 : f32 to vector<1x384xf32>
    %237 = arith.addf %236, %235 : vector<1x384xf32>
    %238 = arith.divf %236, %237 : vector<1x384xf32>
    %239 = vector.extract_strided_slice %238 {offsets = [0, 0], sizes = [1, 128], strides = [1, 1]} : vector<1x384xf32> to vector<1x128xf32>
    %240 = vector.extract_strided_slice %238 {offsets = [0, 128], sizes = [1, 128], strides = [1, 1]} : vector<1x384xf32> to vector<1x128xf32>
    %241 = vector.extract_strided_slice %238 {offsets = [0, 256], sizes = [1, 128], strides = [1, 1]} : vector<1x384xf32> to vector<1x128xf32>
    %242 = vector.extract_strided_slice %232 {offsets = [0, 384], sizes = [1, 128], strides = [1, 1]} : vector<1x512xf32> to vector<1x128xf32>
    %243 = math.tanh %242 : vector<1x128xf32>
    %244 = arith.mulf %240, %224 : vector<1x128xf32>
    %245 = arith.mulf %239, %243 : vector<1x128xf32>
    %246 = arith.addf %244, %245 : vector<1x128xf32>
    %247 = math.tanh %246 : vector<1x128xf32>
    %248 = arith.mulf %241, %247 : vector<1x128xf32>
    %249 = arith.index_cast %c10_i32 : i32 to index
    %c0_53 = arith.constant 0 : index
    %250 = vector.load %arg8[%249, %c0_53] : memref<16x128xf32, #tpu.memory_space<vmem>>, vector<1x128xf32>
    tpu.vector_store %arg8[%249, %c0_53], %248 {strides = array<i32>} : memref<16x128xf32, #tpu.memory_space<vmem>>, vector<1x128xf32>,
    %c11_i32 = arith.constant 11 : i32
    %251 = arith.index_cast %c11_i32 : i32 to index
    %c0_54 = arith.constant 0 : index
    %252 = vector.load %arg7[%251, %c0_54] : memref<16x512xf32, #tpu.memory_space<vmem>>, vector<1x512xf32>
    %cst_55 = arith.constant dense<0.000000e+00> : vector<1x512xf32>
    %253 = tpu.matmul %248, %7, %cst_55 {dimension_numbers = #tpu.dot_dimension_numbers<[1], [0], [0], [1], [0, 0, 1, 1], [], []>} : vector<1x128xf32>, vector<128x512xf32>, vector<1x512xf32> -> vector<1x512xf32>
    %254 = arith.addf %252, %253 : vector<1x512xf32>
    %255 = vector.extract_strided_slice %254 {offsets = [0, 0], sizes = [1, 384], strides = [1, 1]} : vector<1x512xf32> to vector<1x384xf32>
    %256 = arith.negf %255 : vector<1x384xf32>
    %257 = math.exp %256 : vector<1x384xf32>
    %cst_56 = arith.constant 1.000000e+00 : f32
    %258 = vector.broadcast %cst_56 : f32 to vector<1x384xf32>
    %259 = arith.addf %258, %257 : vector<1x384xf32>
    %260 = arith.divf %258, %259 : vector<1x384xf32>
    %261 = vector.extract_strided_slice %260 {offsets = [0, 0], sizes = [1, 128], strides = [1, 1]} : vector<1x384xf32> to vector<1x128xf32>
    %262 = vector.extract_strided_slice %260 {offsets = [0, 128], sizes = [1, 128], strides = [1, 1]} : vector<1x384xf32> to vector<1x128xf32>
    %263 = vector.extract_strided_slice %260 {offsets = [0, 256], sizes = [1, 128], strides = [1, 1]} : vector<1x384xf32> to vector<1x128xf32>
    %264 = vector.extract_strided_slice %254 {offsets = [0, 384], sizes = [1, 128], strides = [1, 1]} : vector<1x512xf32> to vector<1x128xf32>
    %265 = math.tanh %264 : vector<1x128xf32>
    %266 = arith.mulf %262, %246 : vector<1x128xf32>
    %267 = arith.mulf %261, %265 : vector<1x128xf32>
    %268 = arith.addf %266, %267 : vector<1x128xf32>
    %269 = math.tanh %268 : vector<1x128xf32>
    %270 = arith.mulf %263, %269 : vector<1x128xf32>
    %271 = arith.index_cast %c11_i32 : i32 to index
    %c0_57 = arith.constant 0 : index
    %272 = vector.load %arg8[%271, %c0_57] : memref<16x128xf32, #tpu.memory_space<vmem>>, vector<1x128xf32>
    tpu.vector_store %arg8[%271, %c0_57], %270 {strides = array<i32>} : memref<16x128xf32, #tpu.memory_space<vmem>>, vector<1x128xf32>,
    %c12_i32 = arith.constant 12 : i32
    %273 = arith.index_cast %c12_i32 : i32 to index
    %c0_58 = arith.constant 0 : index
    %274 = vector.load %arg7[%273, %c0_58] : memref<16x512xf32, #tpu.memory_space<vmem>>, vector<1x512xf32>
    %cst_59 = arith.constant dense<0.000000e+00> : vector<1x512xf32>
    %275 = tpu.matmul %270, %7, %cst_59 {dimension_numbers = #tpu.dot_dimension_numbers<[1], [0], [0], [1], [0, 0, 1, 1], [], []>} : vector<1x128xf32>, vector<128x512xf32>, vector<1x512xf32> -> vector<1x512xf32>
    %276 = arith.addf %274, %275 : vector<1x512xf32>
    %277 = vector.extract_strided_slice %276 {offsets = [0, 0], sizes = [1, 384], strides = [1, 1]} : vector<1x512xf32> to vector<1x384xf32>
    %278 = arith.negf %277 : vector<1x384xf32>
    %279 = math.exp %278 : vector<1x384xf32>
    %cst_60 = arith.constant 1.000000e+00 : f32
    %280 = vector.broadcast %cst_60 : f32 to vector<1x384xf32>
    %281 = arith.addf %280, %279 : vector<1x384xf32>
    %282 = arith.divf %280, %281 : vector<1x384xf32>
    %283 = vector.extract_strided_slice %282 {offsets = [0, 0], sizes = [1, 128], strides = [1, 1]} : vector<1x384xf32> to vector<1x128xf32>
    %284 = vector.extract_strided_slice %282 {offsets = [0, 128], sizes = [1, 128], strides = [1, 1]} : vector<1x384xf32> to vector<1x128xf32>
    %285 = vector.extract_strided_slice %282 {offsets = [0, 256], sizes = [1, 128], strides = [1, 1]} : vector<1x384xf32> to vector<1x128xf32>
    %286 = vector.extract_strided_slice %276 {offsets = [0, 384], sizes = [1, 128], strides = [1, 1]} : vector<1x512xf32> to vector<1x128xf32>
    %287 = math.tanh %286 : vector<1x128xf32>
    %288 = arith.mulf %284, %268 : vector<1x128xf32>
    %289 = arith.mulf %283, %287 : vector<1x128xf32>
    %290 = arith.addf %288, %289 : vector<1x128xf32>
    %291 = math.tanh %290 : vector<1x128xf32>
    %292 = arith.mulf %285, %291 : vector<1x128xf32>
    %293 = arith.index_cast %c12_i32 : i32 to index
    %c0_61 = arith.constant 0 : index
    %294 = vector.load %arg8[%293, %c0_61] : memref<16x128xf32, #tpu.memory_space<vmem>>, vector<1x128xf32>
    tpu.vector_store %arg8[%293, %c0_61], %292 {strides = array<i32>} : memref<16x128xf32, #tpu.memory_space<vmem>>, vector<1x128xf32>,
    %c13_i32 = arith.constant 13 : i32
    %295 = arith.index_cast %c13_i32 : i32 to index
    %c0_62 = arith.constant 0 : index
    %296 = vector.load %arg7[%295, %c0_62] : memref<16x512xf32, #tpu.memory_space<vmem>>, vector<1x512xf32>
    %cst_63 = arith.constant dense<0.000000e+00> : vector<1x512xf32>
    %297 = tpu.matmul %292, %7, %cst_63 {dimension_numbers = #tpu.dot_dimension_numbers<[1], [0], [0], [1], [0, 0, 1, 1], [], []>} : vector<1x128xf32>, vector<128x512xf32>, vector<1x512xf32> -> vector<1x512xf32>
    %298 = arith.addf %296, %297 : vector<1x512xf32>
    %299 = vector.extract_strided_slice %298 {offsets = [0, 0], sizes = [1, 384], strides = [1, 1]} : vector<1x512xf32> to vector<1x384xf32>
    %300 = arith.negf %299 : vector<1x384xf32>
    %301 = math.exp %300 : vector<1x384xf32>
    %cst_64 = arith.constant 1.000000e+00 : f32
    %302 = vector.broadcast %cst_64 : f32 to vector<1x384xf32>
    %303 = arith.addf %302, %301 : vector<1x384xf32>
    %304 = arith.divf %302, %303 : vector<1x384xf32>
    %305 = vector.extract_strided_slice %304 {offsets = [0, 0], sizes = [1, 128], strides = [1, 1]} : vector<1x384xf32> to vector<1x128xf32>
    %306 = vector.extract_strided_slice %304 {offsets = [0, 128], sizes = [1, 128], strides = [1, 1]} : vector<1x384xf32> to vector<1x128xf32>
    %307 = vector.extract_strided_slice %304 {offsets = [0, 256], sizes = [1, 128], strides = [1, 1]} : vector<1x384xf32> to vector<1x128xf32>
    %308 = vector.extract_strided_slice %298 {offsets = [0, 384], sizes = [1, 128], strides = [1, 1]} : vector<1x512xf32> to vector<1x128xf32>
    %309 = math.tanh %308 : vector<1x128xf32>
    %310 = arith.mulf %306, %290 : vector<1x128xf32>
    %311 = arith.mulf %305, %309 : vector<1x128xf32>
    %312 = arith.addf %310, %311 : vector<1x128xf32>
    %313 = math.tanh %312 : vector<1x128xf32>
    %314 = arith.mulf %307, %313 : vector<1x128xf32>
    %315 = arith.index_cast %c13_i32 : i32 to index
    %c0_65 = arith.constant 0 : index
    %316 = vector.load %arg8[%315, %c0_65] : memref<16x128xf32, #tpu.memory_space<vmem>>, vector<1x128xf32>
    tpu.vector_store %arg8[%315, %c0_65], %314 {strides = array<i32>} : memref<16x128xf32, #tpu.memory_space<vmem>>, vector<1x128xf32>,
    %c14_i32 = arith.constant 14 : i32
    %317 = arith.index_cast %c14_i32 : i32 to index
    %c0_66 = arith.constant 0 : index
    %318 = vector.load %arg7[%317, %c0_66] : memref<16x512xf32, #tpu.memory_space<vmem>>, vector<1x512xf32>
    %cst_67 = arith.constant dense<0.000000e+00> : vector<1x512xf32>
    %319 = tpu.matmul %314, %7, %cst_67 {dimension_numbers = #tpu.dot_dimension_numbers<[1], [0], [0], [1], [0, 0, 1, 1], [], []>} : vector<1x128xf32>, vector<128x512xf32>, vector<1x512xf32> -> vector<1x512xf32>
    %320 = arith.addf %318, %319 : vector<1x512xf32>
    %321 = vector.extract_strided_slice %320 {offsets = [0, 0], sizes = [1, 384], strides = [1, 1]} : vector<1x512xf32> to vector<1x384xf32>
    %322 = arith.negf %321 : vector<1x384xf32>
    %323 = math.exp %322 : vector<1x384xf32>
    %cst_68 = arith.constant 1.000000e+00 : f32
    %324 = vector.broadcast %cst_68 : f32 to vector<1x384xf32>
    %325 = arith.addf %324, %323 : vector<1x384xf32>
    %326 = arith.divf %324, %325 : vector<1x384xf32>
    %327 = vector.extract_strided_slice %326 {offsets = [0, 0], sizes = [1, 128], strides = [1, 1]} : vector<1x384xf32> to vector<1x128xf32>
    %328 = vector.extract_strided_slice %326 {offsets = [0, 128], sizes = [1, 128], strides = [1, 1]} : vector<1x384xf32> to vector<1x128xf32>
    %329 = vector.extract_strided_slice %326 {offsets = [0, 256], sizes = [1, 128], strides = [1, 1]} : vector<1x384xf32> to vector<1x128xf32>
    %330 = vector.extract_strided_slice %320 {offsets = [0, 384], sizes = [1, 128], strides = [1, 1]} : vector<1x512xf32> to vector<1x128xf32>
    %331 = math.tanh %330 : vector<1x128xf32>
    %332 = arith.mulf %328, %312 : vector<1x128xf32>
    %333 = arith.mulf %327, %331 : vector<1x128xf32>
    %334 = arith.addf %332, %333 : vector<1x128xf32>
    %335 = math.tanh %334 : vector<1x128xf32>
    %336 = arith.mulf %329, %335 : vector<1x128xf32>
    %337 = arith.index_cast %c14_i32 : i32 to index
    %c0_69 = arith.constant 0 : index
    %338 = vector.load %arg8[%337, %c0_69] : memref<16x128xf32, #tpu.memory_space<vmem>>, vector<1x128xf32>
    tpu.vector_store %arg8[%337, %c0_69], %336 {strides = array<i32>} : memref<16x128xf32, #tpu.memory_space<vmem>>, vector<1x128xf32>,
    %c15_i32 = arith.constant 15 : i32
    %339 = arith.index_cast %c15_i32 : i32 to index
    %c0_70 = arith.constant 0 : index
    %340 = vector.load %arg7[%339, %c0_70] : memref<16x512xf32, #tpu.memory_space<vmem>>, vector<1x512xf32>
    %cst_71 = arith.constant dense<0.000000e+00> : vector<1x512xf32>
    %341 = tpu.matmul %336, %7, %cst_71 {dimension_numbers = #tpu.dot_dimension_numbers<[1], [0], [0], [1], [0, 0, 1, 1], [], []>} : vector<1x128xf32>, vector<128x512xf32>, vector<1x512xf32> -> vector<1x512xf32>
    %342 = arith.addf %340, %341 : vector<1x512xf32>
    %343 = vector.extract_strided_slice %342 {offsets = [0, 0], sizes = [1, 384], strides = [1, 1]} : vector<1x512xf32> to vector<1x384xf32>
    %344 = arith.negf %343 : vector<1x384xf32>
    %345 = math.exp %344 : vector<1x384xf32>
    %cst_72 = arith.constant 1.000000e+00 : f32
    %346 = vector.broadcast %cst_72 : f32 to vector<1x384xf32>
    %347 = arith.addf %346, %345 : vector<1x384xf32>
    %348 = arith.divf %346, %347 : vector<1x384xf32>
    %349 = vector.extract_strided_slice %348 {offsets = [0, 0], sizes = [1, 128], strides = [1, 1]} : vector<1x384xf32> to vector<1x128xf32>
    %350 = vector.extract_strided_slice %348 {offsets = [0, 128], sizes = [1, 128], strides = [1, 1]} : vector<1x384xf32> to vector<1x128xf32>
    %351 = vector.extract_strided_slice %348 {offsets = [0, 256], sizes = [1, 128], strides = [1, 1]} : vector<1x384xf32> to vector<1x128xf32>
    %352 = vector.extract_strided_slice %342 {offsets = [0, 384], sizes = [1, 128], strides = [1, 1]} : vector<1x512xf32> to vector<1x128xf32>
    %353 = math.tanh %352 : vector<1x128xf32>
    %354 = arith.mulf %350, %334 : vector<1x128xf32>
    %355 = arith.mulf %349, %353 : vector<1x128xf32>
    %356 = arith.addf %354, %355 : vector<1x128xf32>
    %357 = math.tanh %356 : vector<1x128xf32>
    %358 = arith.mulf %351, %357 : vector<1x128xf32>
    %359 = arith.index_cast %c15_i32 : i32 to index
    %c0_73 = arith.constant 0 : index
    %360 = vector.load %arg8[%359, %c0_73] : memref<16x128xf32, #tpu.memory_space<vmem>>, vector<1x128xf32>
    tpu.vector_store %arg8[%359, %c0_73], %358 {strides = array<i32>} : memref<16x128xf32, #tpu.memory_space<vmem>>, vector<1x128xf32>,
    %c16_i32 = arith.constant 16 : i32
    %c0_74 = arith.constant 0 : index
    %c0_75 = arith.constant 0 : index
    %361 = vector.load %arg8[%c0_74, %c0_75] : memref<16x128xf32, #tpu.memory_space<vmem>>, vector<16x128xf32>
    %c0_76 = arith.constant 0 : index
    %c0_77 = arith.constant 0 : index
    %362 = vector.load %arg4[%c0_76, %c0_77] : memref<128x1xf32, #tpu.memory_space<vmem>>, vector<128x1xf32>
    %cst_78 = arith.constant dense<0.000000e+00> : vector<16x1xf32>
    %363 = tpu.matmul %361, %362, %cst_78 {dimension_numbers = #tpu.dot_dimension_numbers<[1], [0], [0], [1], [0, 0, 1, 1], [], []>} : vector<16x128xf32>, vector<128x1xf32>, vector<16x1xf32> -> vector<16x1xf32>
    %c0_79 = arith.constant 0 : index
    %364 = memref.load %arg5[%c0_79] : memref<1xf32, #tpu.memory_space<smem>>
    %365 = vector.broadcast %364 : f32 to vector<16x1xf32>
    %366 = arith.addf %363, %365 : vector<16x1xf32>
    %c0_80 = arith.constant 0 : index
    %c0_81 = arith.constant 0 : index
    %367 = vector.load %arg6[%c0_80, %c0_81] : memref<16x1xf32, #tpu.memory_space<vmem>>, vector<16x1xf32>
    tpu.vector_store %arg6[%c0_80, %c0_81], %366 {strides = array<i32>} : memref<16x1xf32, #tpu.memory_space<vmem>>, vector<16x1xf32>,
    return
  }
}

</mosaic_0001>

<llo_original>
// kernel: tpu_custom_call.1
$region0: #{tpu_custom_call.1}
  #allocation0 [shape = 'u32[]', space=smem, size = 0x4, offset = 0x4, fixed_abs, tag = 'smem constant byte address 0x4 - core index']
  #allocation1 [shape = 'u32[144,128]{1,0:T(1,128)}', space=vmem, size = 0x12000, scoped, tag = 'internal scratch']
  #allocation2 [shape = 'f32[16,512]{1,0:T(8,128)}', space=vmem, size = 0x8000, scoped, tag = 'scratch operand']
  #allocation3 [shape = 'f32[16,128]{1,0:T(8,128)}', space=vmem, size = 0x2000, scoped, tag = 'scratch operand']
  #allocation4 [shape = 'f32[1]{0:T(128)S(6)}', space=smem, size = 0x200, scoped, tag = 'scoped memory for tpu_custom_call.1']
  %s0 = inlined_call_operand.vmem [shape: f32[16,128], index: 0, kind: input, shape index: {}]
  %s1 = inlined_call_operand.hbm [shape: f32[128,512], index: 1, kind: input, shape index: {}]
  %s2 = inlined_call_operand.hbm [shape: f32[128,512], index: 2, kind: input, shape index: {}]
  %s3 = inlined_call_operand.vmem [shape: f32[1,512], index: 3, kind: input, shape index: {}]
  %s4 = inlined_call_operand.vmem [shape: f32[128,1], index: 4, kind: input, shape index: {}]
  %s5 = inlined_call_operand.<no memory space> [shape: f32[1], index: 5, kind: input, shape index: {}]
  %s6 = inlined_call_operand.vmem [shape: f32[16,1], index: 6, kind: output, shape index: {}]
  %s7 = sld [smem:[#allocation0]]
  $region42: #{tpu_custom_call.1} parent=0
    _
  %s9 = ssub.s32 1, %s7
  %s10 = scalar_select 0, %s9, %s7
  %11 = sst [smem:[#allocation4]] %s5
  $region1: #{tpu_custom_call.1} parent=0
    #allocation5 [shape = 'u8[262144]{0}', space=vmem, size = 0x40000, scoped, tag = 'input window, operand 1, single buffered']
    #allocation6 [shape = 's32[1]{0}', space=sflag, size = 0x4, scoped, tag = 'scoped memory for tpu_custom_call.1']
    #allocation7 [shape = 'u8[262144]{0}', space=vmem, size = 0x40000, scoped, tag = 'input window, operand 2, single buffered']
    #allocation8 [shape = 's32[1]{0}', space=sflag, size = 0x4, scoped, tag = 'scoped memory for tpu_custom_call.1']
    %12 = vsyncpa [#allocation6], 0
    %13 = vsyncpa [#allocation8], 0
    // Predicated region
    $region2: #{tpu_custom_call.1} parent=1 // pred_check
      _
    $region3: #{tpu_custom_call.1} parent=1 // pred_check_branch
      %15 = sbr.rel (0) target = $region5
    $region4: #{tpu_custom_call.1} parent=1 // pred_region
      _
    $region5: #{tpu_custom_call.1} parent=1 // pred_fallthru
      _
    // Predicated region
    $region6: #{tpu_custom_call.1} parent=1 // pred_check
      _
    $region7: #{tpu_custom_call.1} parent=1 // pred_check_branch
      %17 = sbr.rel (0) target = $region9
    $region8: #{tpu_custom_call.1} parent=1 // pred_region
      %s19 = ssub.s32 8192, 8192
      %20 = vsyncadd [#allocation6], %s19
      %s21 = sshll.u32 [#allocation5], 4
      %s22 = int_to_ptr.vmem [resolvable:$true] %s21
      %27 = dma.hbm_to_vmem [thread:$0]  %s1, 8192, %s22, [#allocation6], 512, 512, 32
    $region9: #{tpu_custom_call.1} parent=1 // pred_fallthru
      _
    // Predicated region
    $region10: #{tpu_custom_call.1} parent=1 // pred_check
      _
    $region11: #{tpu_custom_call.1} parent=1 // pred_check_branch
      %29 = sbr.rel (0) target = $region13
    $region12: #{tpu_custom_call.1} parent=1 // pred_region
      %s31 = ssub.s32 8192, 8192
      %32 = vsyncadd [#allocation8], %s31
      %s33 = sshll.u32 [#allocation7], 4
      %s34 = int_to_ptr.vmem [resolvable:$true] %s33
      %39 = dma.hbm_to_vmem [thread:$0]  %s2, 8192, %s34, [#allocation8], 512, 512, 32
    $region13: #{tpu_custom_call.1} parent=1 // pred_fallthru
      _
    // Predicated region
    $region14: #{tpu_custom_call.1} parent=1 // pred_check
      _
    $region15: #{tpu_custom_call.1} parent=1 // pred_check_branch
      %41 = sbr.rel (0) target = $region17
    $region16: #{tpu_custom_call.1} parent=1 // pred_region
      _
    $region17: #{tpu_custom_call.1} parent=1 // pred_fallthru
      _
    // Predicated region
    $region18: #{tpu_custom_call.1} parent=1 // pred_check
      _
    $region19: #{tpu_custom_call.1} parent=1 // pred_check_branch
      %43 = sbr.rel (0) target = $region21
    $region20: #{tpu_custom_call.1} parent=1 // pred_region
      _
    $region21: #{tpu_custom_call.1} parent=1 // pred_fallthru
      _
    // Predicated region
    $region22: #{tpu_custom_call.1} parent=1 // pred_check
      _
    $region23: #{tpu_custom_call.1} parent=1 // pred_check_branch
      %45 = sbr.rel (0) target = $region25
    $region24: #{tpu_custom_call.1} parent=1 // pred_region
      _
    $region25: #{tpu_custom_call.1} parent=1 // pred_fallthru
      _
    // Predicated region
    $region26: #{tpu_custom_call.1} parent=1 // pred_check
      _
    $region27: #{tpu_custom_call.1} parent=1 // pred_check_branch
      %47 = sbr.rel (0) target = $region29
    $region28: #{tpu_custom_call.1} parent=1 // pred_region
      %48 = dma.done [#allocation6], 8192
    $region29: #{tpu_custom_call.1} parent=1 // pred_fallthru
      _
    // Predicated region
    $region30: #{tpu_custom_call.1} parent=1 // pred_check
      _
    $region31: #{tpu_custom_call.1} parent=1 // pred_check_branch
      %50 = sbr.rel (0) target = $region33
    $region32: #{tpu_custom_call.1} parent=1 // pred_region
      %51 = dma.done [#allocation8], 8192
    $region33: #{tpu_custom_call.1} parent=1 // pred_fallthru
      _
    %v52 = vld [vmem:[%s0] sm:$0xff]
    %v53 = vld [vmem:[%s0 + $0x8] sm:$0xff]
    %v54 = vld [vmem:[#allocation5] sm:$0xff]
    %v55 = vld [vmem:[#allocation5 + $0x8] sm:$0xff]
    %v56 = vld [vmem:[#allocation5 + $0x10] sm:$0xff]
    %v57 = vld [vmem:[#allocation5 + $0x18] sm:$0xff]
    %v58 = vld [vmem:[#allocation5 + $0x20] sm:$0xff]
    %v59 = vld [vmem:[#allocation5 + $0x28] sm:$0xff]
    %v60 = vld [vmem:[#allocation5 + $0x30] sm:$0xff]
    %v61 = vld [vmem:[#allocation5 + $0x38] sm:$0xff]
    %v62 = vld [vmem:[#allocation5 + $0x40] sm:$0xff]
    %v63 = vld [vmem:[#allocation5 + $0x48] sm:$0xff]
    %v64 = vld [vmem:[#allocation5 + $0x50] sm:$0xff]
    %v65 = vld [vmem:[#allocation5 + $0x58] sm:$0xff]
    %v66 = vld [vmem:[#allocation5 + $0x60] sm:$0xff]
    %v67 = vld [vmem:[#allocation5 + $0x68] sm:$0xff]
    %v68 = vld [vmem:[#allocation5 + $0x70] sm:$0xff]
    %v69 = vld [vmem:[#allocation5 + $0x78] sm:$0xff]
    %v70 = vld [vmem:[#allocation5 + $0x80] sm:$0xff]
    %v71 = vld [vmem:[#allocation5 + $0x88] sm:$0xff]
    %v72 = vld [vmem:[#allocation5 + $0x90] sm:$0xff]
    %v73 = vld [vmem:[#allocation5 + $0x98] sm:$0xff]
    %v74 = vld [vmem:[#allocation5 + $0xa0] sm:$0xff]
    %v75 = vld [vmem:[#allocation5 + $0xa8] sm:$0xff]
    %v76 = vld [vmem:[#allocation5 + $0xb0] sm:$0xff]
    %v77 = vld [vmem:[#allocation5 + $0xb8] sm:$0xff]
    %v78 = vld [vmem:[#allocation5 + $0xc0] sm:$0xff]
    %v79 = vld [vmem:[#allocation5 + $0xc8] sm:$0xff]
    %v80 = vld [vmem:[#allocation5 + $0xd0] sm:$0xff]
    %v81 = vld [vmem:[#allocation5 + $0xd8] sm:$0xff]
    %v82 = vld [vmem:[#allocation5 + $0xe0] sm:$0xff]
    %v83 = vld [vmem:[#allocation5 + $0xe8] sm:$0xff]
    %v84 = vld [vmem:[#allocation5 + $0xf0] sm:$0xff]
    %v85 = vld [vmem:[#allocation5 + $0xf8] sm:$0xff]
    %v86 = vld [vmem:[#allocation5 + $0x100] sm:$0xff]
    %v87 = vld [vmem:[#allocation5 + $0x108] sm:$0xff]
    %v88 = vld [vmem:[#allocation5 + $0x110] sm:$0xff]
    %v89 = vld [vmem:[#allocation5 + $0x118] sm:$0xff]
    %v90 = vld [vmem:[#allocation5 + $0x120] sm:$0xff]
    %v91 = vld [vmem:[#allocation5 + $0x128] sm:$0xff]
    %v92 = vld [vmem:[#allocation5 + $0x130] sm:$0xff]
    %v93 = vld [vmem:[#allocation5 + $0x138] sm:$0xff]
    %v94 = vld [vmem:[#allocation5 + $0x140] sm:$0xff]
    %v95 = vld [vmem:[#allocation5 + $0x148] sm:$0xff]
    %v96 = vld [vmem:[#allocation5 + $0x150] sm:$0xff]
    %v97 = vld [vmem:[#allocation5 + $0x158] sm:$0xff]
    %v98 = vld [vmem:[#allocation5 + $0x160] sm:$0xff]
    %v99 = vld [vmem:[#allocation5 + $0x168] sm:$0xff]
    %v100 = vld [vmem:[#allocation5 + $0x170] sm:$0xff]
    %v101 = vld [vmem:[#allocation5 + $0x178] sm:$0xff]
    %v102 = vld [vmem:[#allocation5 + $0x180] sm:$0xff]
    %v103 = vld [vmem:[#allocation5 + $0x188] sm:$0xff]
    %v104 = vld [vmem:[#allocation5 + $0x190] sm:$0xff]
    %v105 = vld [vmem:[#allocation5 + $0x198] sm:$0xff]
    %v106 = vld [vmem:[#allocation5 + $0x1a0] sm:$0xff]
    %v107 = vld [vmem:[#allocation5 + $0x1a8] sm:$0xff]
    %v108 = vld [vmem:[#allocation5 + $0x1b0] sm:$0xff]
    %v109 = vld [vmem:[#allocation5 + $0x1b8] sm:$0xff]
    %v110 = vld [vmem:[#allocation5 + $0x1c0] sm:$0xff]
    %v111 = vld [vmem:[#allocation5 + $0x1c8] sm:$0xff]
    %v112 = vld [vmem:[#allocation5 + $0x1d0] sm:$0xff]
    %v113 = vld [vmem:[#allocation5 + $0x1d8] sm:$0xff]
    %v114 = vld [vmem:[#allocation5 + $0x1e0] sm:$0xff]
    %v115 = vld [vmem:[#allocation5 + $0x1e8] sm:$0xff]
    %v116 = vld [vmem:[#allocation5 + $0x1f0] sm:$0xff]
    %v117 = vld [vmem:[#allocation5 + $0x1f8] sm:$0xff]
    %v118 = vld [vmem:[%s3] sm:$0xf]
    %v120 = vlaneseq
    %v121 = vshrl.u32 %v120, 7
    %v122 = vsub.s32 0, %v121
    %v123 = vrot.slane %v118, %v122
    %v124 = vlaneseq
    %v125 = vshrl.u32 %v124, 7
    %v126 = vsub.s32 1, %v125
    %v127 = vrot.slane %v118, %v126
    %v128 = vlaneseq
    %v129 = vshrl.u32 %v128, 7
    %v130 = vsub.s32 2, %v129
    %v131 = vrot.slane %v118, %v130
    %v132 = vlaneseq
    %v133 = vshrl.u32 %v132, 7
    %v134 = vsub.s32 3, %v133
    %v135 = vrot.slane %v118, %v134
    %140 = vmatprep.subr.mxu0 %v115
    %141 = vmatpush1.msra.mxu0 %v114
    %142 = vmatprep.subr.mxu0 %v111
    %143 = vmatpush1.msra.mxu0 %v110
    %144 = vmatprep.subr.mxu0 %v107
    %145 = vmatpush1.msra.mxu0 %v106
    %146 = vmatprep.subr.mxu0 %v103
    %147 = vmatpush1.msra.mxu0 %v102
    %148 = vmatprep.subr.mxu0 %v99
    %149 = vmatpush1.msra.mxu0 %v98
    %150 = vmatprep.subr.mxu0 %v95
    %151 = vmatpush1.msra.mxu0 %v94
    %152 = vmatprep.subr.mxu0 %v91
    %153 = vmatpush1.msra.mxu0 %v90
    %154 = vmatprep.subr.mxu0 %v87
    %155 = vmatpush1.msra.mxu0 %v86
    %156 = vmatprep.subr.mxu0 %v83
    %157 = vmatpush1.msra.mxu0 %v82
    %158 = vmatprep.subr.mxu0 %v79
    %159 = vmatpush1.msra.mxu0 %v78
    %160 = vmatprep.subr.mxu0 %v75
    %161 = vmatpush1.msra.mxu0 %v74
    %162 = vmatprep.subr.mxu0 %v71
    %163 = vmatpush1.msra.mxu0 %v70
    %164 = vmatprep.subr.mxu0 %v67
    %165 = vmatpush1.msra.mxu0 %v66
    %166 = vmatprep.subr.mxu0 %v63
    %167 = vmatpush1.msra.mxu0 %v62
    %168 = vmatprep.subr.mxu0 %v59
    %169 = vmatpush1.msra.mxu0 %v58
    %170 = vmatprep.subr.mxu0 %v55
    %171 = vmatpush1.msra.mxu0 %v54
    %172 = vmatprep.subr.mxu0 0.0
    %173 = vmatpush2.msra.mxu0 0.0
    %174 = vmatprep.subr.mxu0 0.0
    %175 = vmatpush2.msra.mxu0 0.0
    %176 = vmatprep.subr.mxu0 0.0
    %177 = vmatpush2.msra.mxu0 0.0
    %178 = vmatprep.subr.mxu0 0.0
    %179 = vmatpush2.msra.mxu0 0.0
    %180 = vmatprep.subr.mxu0 0.0
    %181 = vmatpush2.msra.mxu0 0.0
    %182 = vmatprep.subr.mxu0 0.0
    %183 = vmatpush2.msra.mxu0 0.0
    %184 = vmatprep.subr.mxu0 0.0
    %185 = vmatpush2.msra.mxu0 0.0
    %186 = vmatprep.subr.mxu0 0.0
    %187 = vmatpush2.msra.mxu0 0.0
    %188 = vmatprep.subr.mxu0 0.0
    %189 = vmatpush2.msra.mxu0 0.0
    %190 = vmatprep.subr.mxu0 0.0
    %191 = vmatpush2.msra.mxu0 0.0
    %192 = vmatprep.subr.mxu0 0.0
    %193 = vmatpush2.msra.mxu0 0.0
    %194 = vmatprep.subr.mxu0 0.0
    %195 = vmatpush2.msra.mxu0 0.0
    %196 = vmatprep.subr.mxu0 0.0
    %197 = vmatpush2.msra.mxu0 0.0
    %198 = vmatprep.subr.mxu0 0.0
    %199 = vmatpush2.msra.mxu0 0.0
    %200 = vmatprep.subr.mxu0 0.0
    %201 = vmatpush2.msra.mxu0 0.0
    %202 = vmatprep.subr.mxu0 0.0
    %203 = vmatpush2.msra.mxu0 0.0
    %204 = vmatprep.mubr.f32.mxu0 0.0
    %205 = vmatmul.mubr.f32.gmra.mxu0 %v52
    %v206 = vpop.f32.mrf.mxu0
    %v207 = vadd.f32 %v123, %v206
    %v208 = vpop.f32.mrf.mxu0
    %v209 = vadd.f32 %v127, %v208
    %210 = vmatprep.mubr.f32.mxu0 0.0
    %211 = vmatmul.mubr.f32.gmra.mxu0 %v53
    %v212 = vpop.f32.mrf.mxu0
    %v213 = vadd.f32 %v123, %v212
    %v214 = vpop.f32.mrf.mxu0
    %v215 = vadd.f32 %v127, %v214
    %216 = vdwg.mxu0
    %217 = vmatprep.subr.mxu0 %v117
    %218 = vmatpush1.msra.mxu0 %v116
    %219 = vmatprep.subr.mxu0 %v113
    %220 = vmatpush1.msra.mxu0 %v112
    %221 = vmatprep.subr.mxu0 %v109
    %222 = vmatpush1.msra.mxu0 %v108
    %223 = vmatprep.subr.mxu0 %v105
    %224 = vmatpush1.msra.mxu0 %v104
    %225 = vmatprep.subr.mxu0 %v101
    %226 = vmatpush1.msra.mxu0 %v100
    %227 = vmatprep.subr.mxu0 %v97
    %228 = vmatpush1.msra.mxu0 %v96
    %229 = vmatprep.subr.mxu0 %v93
    %230 = vmatpush1.msra.mxu0 %v92
    %231 = vmatprep.subr.mxu0 %v89
    %232 = vmatpush1.msra.mxu0 %v88
    %233 = vmatprep.subr.mxu0 %v85
    %234 = vmatpush1.msra.mxu0 %v84
    %235 = vmatprep.subr.mxu0 %v81
    %236 = vmatpush1.msra.mxu0 %v80
    %237 = vmatprep.subr.mxu0 %v77
    %238 = vmatpush1.msra.mxu0 %v76
    %239 = vmatprep.subr.mxu0 %v73
    %240 = vmatpush1.msra.mxu0 %v72
    %241 = vmatprep.subr.mxu0 %v69
    %242 = vmatpush1.msra.mxu0 %v68
    %243 = vmatprep.subr.mxu0 %v65
    %244 = vmatpush1.msra.mxu0 %v64
    %245 = vmatprep.subr.mxu0 %v61
    %246 = vmatpush1.msra.mxu0 %v60
    %247 = vmatprep.subr.mxu0 %v57
    %248 = vmatpush1.msra.mxu0 %v56
    %249 = vmatprep.subr.mxu0 0.0
    %250 = vmatpush2.msra.mxu0 0.0
    %251 = vmatprep.subr.mxu0 0.0
    %252 = vmatpush2.msra.mxu0 0.0
    %253 = vmatprep.subr.mxu0 0.0
    %254 = vmatpush2.msra.mxu0 0.0
    %255 = vmatprep.subr.mxu0 0.0
    %256 = vmatpush2.msra.mxu0 0.0
    %257 = vmatprep.subr.mxu0 0.0
    %258 = vmatpush2.msra.mxu0 0.0
    %259 = vmatprep.subr.mxu0 0.0
    %260 = vmatpush2.msra.mxu0 0.0
    %261 = vmatprep.subr.mxu0 0.0
    %262 = vmatpush2.msra.mxu0 0.0
    %263 = vmatprep.subr.mxu0 0.0
    %264 = vmatpush2.msra.mxu0 0.0
    %265 = vmatprep.subr.mxu0 0.0
    %266 = vmatpush2.msra.mxu0 0.0
    %267 = vmatprep.subr.mxu0 0.0
    %268 = vmatpush2.msra.mxu0 0.0
    %269 = vmatprep.subr.mxu0 0.0
    %270 = vmatpush2.msra.mxu0 0.0
    %271 = vmatprep.subr.mxu0 0.0
    %272 = vmatpush2.msra.mxu0 0.0
    %273 = vmatprep.subr.mxu0 0.0
    %274 = vmatpush2.msra.mxu0 0.0
    %275 = vmatprep.subr.mxu0 0.0
    %276 = vmatpush2.msra.mxu0 0.0
    %277 = vmatprep.subr.mxu0 0.0
    %278 = vmatpush2.msra.mxu0 0.0
    %279 = vmatprep.subr.mxu0 0.0
    %280 = vmatpush2.msra.mxu0 0.0
    %281 = vmatprep.mubr.f32.mxu0 0.0
    %282 = vmatmul.mubr.f32.gmra.mxu0 %v52
    %v283 = vpop.f32.mrf.mxu0
    %v284 = vadd.f32 %v131, %v283
    %v285 = vpop.f32.mrf.mxu0
    %v286 = vadd.f32 %v135, %v285
    %287 = vmatprep.mubr.f32.mxu0 0.0
    %288 = vmatmul.mubr.f32.gmra.mxu0 %v53
    %v289 = vpop.f32.mrf.mxu0
    %v290 = vadd.f32 %v131, %v289
    %v291 = vpop.f32.mrf.mxu0
    %v292 = vadd.f32 %v135, %v291
    %293 = vdwg.mxu0
    %294 = vst [vmem:[#allocation2] sm:$0xff] %v207
    %295 = vst [vmem:[#allocation2 + $0x8] sm:$0xff] %v209
    %296 = vst [vmem:[#allocation2 + $0x10] sm:$0xff] %v284
    %297 = vst [vmem:[#allocation2 + $0x18] sm:$0xff] %v286
    %298 = vst [vmem:[#allocation2 + $0x20] sm:$0xff] %v213
    %299 = vst [vmem:[#allocation2 + $0x28] sm:$0xff] %v215
    %300 = vst [vmem:[#allocation2 + $0x30] sm:$0xff] %v290
    %301 = vst [vmem:[#allocation2 + $0x38] sm:$0xff] %v292
    %v302 = vld [vmem:[#allocation7] sm:$0xff]
    %v303 = vld [vmem:[#allocation7 + $0x8] sm:$0xff]
    %v304 = vld [vmem:[#allocation7 + $0x10] sm:$0xff]
    %v305 = vld [vmem:[#allocation7 + $0x18] sm:$0xff]
    %v306 = vld [vmem:[#allocation7 + $0x20] sm:$0xff]
    %v307 = vld [vmem:[#allocation7 + $0x28] sm:$0xff]
    %v308 = vld [vmem:[#allocation7 + $0x30] sm:$0xff]
    %v309 = vld [vmem:[#allocation7 + $0x38] sm:$0xff]
    %v310 = vld [vmem:[#allocation7 + $0x40] sm:$0xff]
    %v311 = vld [vmem:[#allocation7 + $0x48] sm:$0xff]
    %v312 = vld [vmem:[#allocation7 + $0x50] sm:$0xff]
    %v313 = vld [vmem:[#allocation7 + $0x58] sm:$0xff]
    %v314 = vld [vmem:[#allocation7 + $0x60] sm:$0xff]
    %v315 = vld [vmem:[#allocation7 + $0x68] sm:$0xff]
    %v316 = vld [vmem:[#allocation7 + $0x70] sm:$0xff]
    %v317 = vld [vmem:[#allocation7 + $0x78] sm:$0xff]
    %v318 = vld [vmem:[#allocation7 + $0x80] sm:$0xff]
    %v319 = vld [vmem:[#allocation7 + $0x88] sm:$0xff]
    %v320 = vld [vmem:[#allocation7 + $0x90] sm:$0xff]
    %v321 = vld [vmem:[#allocation7 + $0x98] sm:$0xff]
    %v322 = vld [vmem:[#allocation7 + $0xa0] sm:$0xff]
    %v323 = vld [vmem:[#allocation7 + $0xa8] sm:$0xff]
    %v324 = vld [vmem:[#allocation7 + $0xb0] sm:$0xff]
    %v325 = vld [vmem:[#allocation7 + $0xb8] sm:$0xff]
    %v326 = vld [vmem:[#allocation7 + $0xc0] sm:$0xff]
    %v327 = vld [vmem:[#allocation7 + $0xc8] sm:$0xff]
    %v328 = vld [vmem:[#allocation7 + $0xd0] sm:$0xff]
    %v329 = vld [vmem:[#allocation7 + $0xd8] sm:$0xff]
    %v330 = vld [vmem:[#allocation7 + $0xe0] sm:$0xff]
    %v331 = vld [vmem:[#allocation7 + $0xe8] sm:$0xff]
    %v332 = vld [vmem:[#allocation7 + $0xf0] sm:$0xff]
    %v333 = vld [vmem:[#allocation7 + $0xf8] sm:$0xff]
    %v334 = vld [vmem:[#allocation7 + $0x100] sm:$0xff]
    %v335 = vld [vmem:[#allocation7 + $0x108] sm:$0xff]
    %v336 = vld [vmem:[#allocation7 + $0x110] sm:$0xff]
    %v337 = vld [vmem:[#allocation7 + $0x118] sm:$0xff]
    %v338 = vld [vmem:[#allocation7 + $0x120] sm:$0xff]
    %v339 = vld [vmem:[#allocation7 + $0x128] sm:$0xff]
    %v340 = vld [vmem:[#allocation7 + $0x130] sm:$0xff]
    %v341 = vld [vmem:[#allocation7 + $0x138] sm:$0xff]
    %v342 = vld [vmem:[#allocation7 + $0x140] sm:$0xff]
    %v343 = vld [vmem:[#allocation7 + $0x148] sm:$0xff]
    %v344 = vld [vmem:[#allocation7 + $0x150] sm:$0xff]
    %v345 = vld [vmem:[#allocation7 + $0x158] sm:$0xff]
    %v346 = vld [vmem:[#allocation7 + $0x160] sm:$0xff]
    %v347 = vld [vmem:[#allocation7 + $0x168] sm:$0xff]
    %v348 = vld [vmem:[#allocation7 + $0x170] sm:$0xff]
    %v349 = vld [vmem:[#allocation7 + $0x178] sm:$0xff]
    %v350 = vld [vmem:[#allocation7 + $0x180] sm:$0xff]
    %v351 = vld [vmem:[#allocation7 + $0x188] sm:$0xff]
    %v352 = vld [vmem:[#allocation7 + $0x190] sm:$0xff]
    %v353 = vld [vmem:[#allocation7 + $0x198] sm:$0xff]
    %v354 = vld [vmem:[#allocation7 + $0x1a0] sm:$0xff]
    %v355 = vld [vmem:[#allocation7 + $0x1a8] sm:$0xff]
    %v356 = vld [vmem:[#allocation7 + $0x1b0] sm:$0xff]
    %v357 = vld [vmem:[#allocation7 + $0x1b8] sm:$0xff]
    %v358 = vld [vmem:[#allocation7 + $0x1c0] sm:$0xff]
    %v359 = vld [vmem:[#allocation7 + $0x1c8] sm:$0xff]
    %v360 = vld [vmem:[#allocation7 + $0x1d0] sm:$0xff]
    %v361 = vld [vmem:[#allocation7 + $0x1d8] sm:$0xff]
    %v362 = vld [vmem:[#allocation7 + $0x1e0] sm:$0xff]
    %v363 = vld [vmem:[#allocation7 + $0x1e8] sm:$0xff]
    %v364 = vld [vmem:[#allocation7 + $0x1f0] sm:$0xff]
    %v365 = vld [vmem:[#allocation7 + $0x1f8] sm:$0xff]
    %v366 = vld [vmem:[#allocation2] ss:$8 sm:$0xf]
    %367 = vmatprep.subr.mxu0 %v363
    %368 = vmatpush1.msra.mxu0 %v362
    %369 = vmatprep.subr.mxu0 %v359
    %370 = vmatpush1.msra.mxu0 %v358
    %371 = vmatprep.subr.mxu0 %v355
    %372 = vmatpush1.msra.mxu0 %v354
    %373 = vmatprep.subr.mxu0 %v351
    %374 = vmatpush1.msra.mxu0 %v350
    %375 = vmatprep.subr.mxu0 %v347
    %376 = vmatpush1.msra.mxu0 %v346
    %377 = vmatprep.subr.mxu0 %v343
    %378 = vmatpush1.msra.mxu0 %v342
    %379 = vmatprep.subr.mxu0 %v339
    %380 = vmatpush1.msra.mxu0 %v338
    %381 = vmatprep.subr.mxu0 %v335
    %382 = vmatpush1.msra.mxu0 %v334
    %383 = vmatprep.subr.mxu0 %v331
    %384 = vmatpush1.msra.mxu0 %v330
    %385 = vmatprep.subr.mxu0 %v327
    %386 = vmatpush1.msra.mxu0 %v326
    %387 = vmatprep.subr.mxu0 %v323
    %388 = vmatpush1.msra.mxu0 %v322
    %389 = vmatprep.subr.mxu0 %v319
    %390 = vmatpush1.msra.mxu0 %v318
    %391 = vmatprep.subr.mxu0 %v315
    %392 = vmatpush1.msra.mxu0 %v314
    %393 = vmatprep.subr.mxu0 %v311
    %394 = vmatpush1.msra.mxu0 %v310
    %395 = vmatprep.subr.mxu0 %v307
    %396 = vmatpush1.msra.mxu0 %v306
    %397 = vmatprep.subr.mxu0 %v303
    %398 = vmatpush1.msra.mxu0 %v302
    %399 = vmatprep.subr.mxu0 0.0
    %400 = vmatpush2.msra.mxu0 0.0
    %401 = vmatprep.subr.mxu0 0.0
    %402 = vmatpush2.msra.mxu0 0.0
    %403 = vmatprep.subr.mxu0 0.0
    %404 = vmatpush2.msra.mxu0 0.0
    %405 = vmatprep.subr.mxu0 0.0
    %406 = vmatpush2.msra.mxu0 0.0
    %407 = vmatprep.subr.mxu0 0.0
    %408 = vmatpush2.msra.mxu0 0.0
    %409 = vmatprep.subr.mxu0 0.0
    %410 = vmatpush2.msra.mxu0 0.0
    %411 = vmatprep.subr.mxu0 0.0
    %412 = vmatpush2.msra.mxu0 0.0
    %413 = vmatprep.subr.mxu0 0.0
    %414 = vmatpush2.msra.mxu0 0.0
    %415 = vmatprep.subr.mxu0 0.0
    %416 = vmatpush2.msra.mxu0 0.0
    %417 = vmatprep.subr.mxu0 0.0
    %418 = vmatpush2.msra.mxu0 0.0
    %419 = vmatprep.subr.mxu0 0.0
    %420 = vmatpush2.msra.mxu0 0.0
    %421 = vmatprep.subr.mxu0 0.0
    %422 = vmatpush2.msra.mxu0 0.0
    %423 = vmatprep.subr.mxu0 0.0
    %424 = vmatpush2.msra.mxu0 0.0
    %425 = vmatprep.subr.mxu0 0.0
    %426 = vmatpush2.msra.mxu0 0.0
    %427 = vmatprep.subr.mxu0 0.0
    %428 = vmatpush2.msra.mxu0 0.0
    %429 = vmatprep.subr.mxu0 0.0
    %430 = vmatpush2.msra.mxu0 0.0
    %431 = vmatprep.mubr.f32.mxu0 0.0
    %432 = vmatmul.mubr.f32.gmra.mxu0 0.0
    %v433 = vpop.f32.mrf.mxu0
    %v434 = vadd.f32 0.0, %v433
    %v435 = vpop.f32.mrf.mxu0
    %v436 = vadd.f32 0.0, %v435
    %437 = vdwg.mxu0
    %438 = vmatprep.subr.mxu0 %v365
    %439 = vmatpush1.msra.mxu0 %v364
    %440 = vmatprep.subr.mxu0 %v361
    %441 = vmatpush1.msra.mxu0 %v360
    %442 = vmatprep.subr.mxu0 %v357
    %443 = vmatpush1.msra.mxu0 %v356
    %444 = vmatprep.subr.mxu0 %v353
    %445 = vmatpush1.msra.mxu0 %v352
    %446 = vmatprep.subr.mxu0 %v349
    %447 = vmatpush1.msra.mxu0 %v348
    %448 = vmatprep.subr.mxu0 %v345
    %449 = vmatpush1.msra.mxu0 %v344
    %450 = vmatprep.subr.mxu0 %v341
    %451 = vmatpush1.msra.mxu0 %v340
    %452 = vmatprep.subr.mxu0 %v337
    %453 = vmatpush1.msra.mxu0 %v336
    %454 = vmatprep.subr.mxu0 %v333
    %455 = vmatpush1.msra.mxu0 %v332
    %456 = vmatprep.subr.mxu0 %v329
    %457 = vmatpush1.msra.mxu0 %v328
    %458 = vmatprep.subr.mxu0 %v325
    %459 = vmatpush1.msra.mxu0 %v324
    %460 = vmatprep.subr.mxu0 %v321
    %461 = vmatpush1.msra.mxu0 %v320
    %462 = vmatprep.subr.mxu0 %v317
    %463 = vmatpush1.msra.mxu0 %v316
    %464 = vmatprep.subr.mxu0 %v313
    %465 = vmatpush1.msra.mxu0 %v312
    %466 = vmatprep.subr.mxu0 %v309
    %467 = vmatpush1.msra.mxu0 %v308
    %468 = vmatprep.subr.mxu0 %v305
    %469 = vmatpush1.msra.mxu0 %v304
    %470 = vmatprep.subr.mxu0 0.0
    %471 = vmatpush2.msra.mxu0 0.0
    %472 = vmatprep.subr.mxu0 0.0
    %473 = vmatpush2.msra.mxu0 0.0
    %474 = vmatprep.subr.mxu0 0.0
    %475 = vmatpush2.msra.mxu0 0.0
    %476 = vmatprep.subr.mxu0 0.0
    %477 = vmatpush2.msra.mxu0 0.0
    %478 = vmatprep.subr.mxu0 0.0
    %479 = vmatpush2.msra.mxu0 0.0
    %480 = vmatprep.subr.mxu0 0.0
    %481 = vmatpush2.msra.mxu0 0.0
    %482 = vmatprep.subr.mxu0 0.0
    %483 = vmatpush2.msra.mxu0 0.0
    %484 = vmatprep.subr.mxu0 0.0
    %485 = vmatpush2.msra.mxu0 0.0
    %486 = vmatprep.subr.mxu0 0.0
    %487 = vmatpush2.msra.mxu0 0.0
    %488 = vmatprep.subr.mxu0 0.0
    %489 = vmatpush2.msra.mxu0 0.0
    %490 = vmatprep.subr.mxu0 0.0
    %491 = vmatpush2.msra.mxu0 0.0
    %492 = vmatprep.subr.mxu0 0.0
    %493 = vmatpush2.msra.mxu0 0.0
    %494 = vmatprep.subr.mxu0 0.0
    %495 = vmatpush2.msra.mxu0 0.0
    %496 = vmatprep.subr.mxu0 0.0
    %497 = vmatpush2.msra.mxu0 0.0
    %498 = vmatprep.subr.mxu0 0.0
    %499 = vmatpush2.msra.mxu0 0.0
    %500 = vmatprep.subr.mxu0 0.0
    %501 = vmatpush2.msra.mxu0 0.0
    %502 = vmatprep.mubr.f32.mxu0 0.0
    %503 = vmatmul.mubr.f32.gmra.mxu0 0.0
    %v504 = vpop.f32.mrf.mxu0
    %v505 = vadd.f32 0.0, %v504
    %v506 = vpop.f32.mrf.mxu0
    %v507 = vadd.f32 0.0, %v506
    %508 = vdwg.mxu0
    %v513 = vcombine.low %v434, %v436
    %v514 = vcombine.low %v505, %v507
    %v516 = vunpack.c.l.s4 1966171168
    %v517 = vunpack.c.0.s8 %v516
    %v518 = vlaneseq
    %v519 = vshrl.u32 %v518, 7
    %v520 = vsub.s32 %v517, %v519
    %v521 = vrot.slane %v513, %v520
    %v523 = vunpack.c.l.s4 1966171168
    %v524 = vunpack.c.0.s8 %v523
    %v525 = vlaneseq
    %v526 = vshrl.u32 %v525, 7
    %v527 = vsub.s32 %v524, %v526
    %v528 = vrot.slane %v514, %v527
    %v529 = vcombine.low %v521, %v528
    %v531 = vunpack.c.l.s4 1966171168
    %v532 = vunpack.c.0.s8 %v531
    %v533 = vlaneseq
    %v534 = vshrl.u32 %v533, 7
    %v535 = vsub.s32 %v532, %v534
    %v536 = vrot.slane %v529, %v535
    %v538 = vadd.f32 %v366, %v536
    %v539 = vxor.u32 %v538, 2147483648
    %v540 = vmul.f32 %v539, 1.442695
    %v541 = vpow.pop %v540
    %v542 = vadd.f32 %v541, 1.0
    %v543 = vrcp.pop %v542
    %v544 = vmul.f32 1.0, %v543
    %v546 = vrot.slane %v538, 3
    %v548 = vtanh.pop %v546
    %v550 = vrot.slane %v544, 1
    %v552 = vmul.f32 %v550, 0.0
    %v553 = vmul.f32 %v544, %v548
    %v554 = vadd.f32 %v552, %v553
    %v555 = vtanh.pop %v554
    %v556 = vrot.slane %v544, 2
    %v558 = vmul.f32 %v556, %v555
    %559 = vst [vmem:[#allocation3] sm:$0x1] %v558
    %s560 = scalar_lea.vmem [#allocation2], 1
    %v561 = vld [vmem:[%s560] ss:$8 sm:$0xf]
    %562 = vmatprep.subr.mxu0 %v363
    %563 = vmatpush1.msra.mxu0 %v362
    %564 = vmatprep.subr.mxu0 %v359
    %565 = vmatpush1.msra.mxu0 %v358
    %566 = vmatprep.subr.mxu0 %v355
    %567 = vmatpush1.msra.mxu0 %v354
    %568 = vmatprep.subr.mxu0 %v351
    %569 = vmatpush1.msra.mxu0 %v350
    %570 = vmatprep.subr.mxu0 %v347
    %571 = vmatpush1.msra.mxu0 %v346
    %572 = vmatprep.subr.mxu0 %v343
    %573 = vmatpush1.msra.mxu0 %v342
    %574 = vmatprep.subr.mxu0 %v339
    %575 = vmatpush1.msra.mxu0 %v338
    %576 = vmatprep.subr.mxu0 %v335
    %577 = vmatpush1.msra.mxu0 %v334
    %578 = vmatprep.subr.mxu0 %v331
    %579 = vmatpush1.msra.mxu0 %v330
    %580 = vmatprep.subr.mxu0 %v327
    %581 = vmatpush1.msra.mxu0 %v326
    %582 = vmatprep.subr.mxu0 %v323
    %583 = vmatpush1.msra.mxu0 %v322
    %584 = vmatprep.subr.mxu0 %v319
    %585 = vmatpush1.msra.mxu0 %v318
    %586 = vmatprep.subr.mxu0 %v315
    %587 = vmatpush1.msra.mxu0 %v314
    %588 = vmatprep.subr.mxu0 %v311
    %589 = vmatpush1.msra.mxu0 %v310
    %590 = vmatprep.subr.mxu0 %v307
    %591 = vmatpush1.msra.mxu0 %v306
    %592 = vmatprep.subr.mxu0 %v303
    %593 = vmatpush1.msra.mxu0 %v302
    %594 = vmatprep.subr.mxu0 0.0
    %595 = vmatpush2.msra.mxu0 0.0
    %596 = vmatprep.subr.mxu0 0.0
    %597 = vmatpush2.msra.mxu0 0.0
    %598 = vmatprep.subr.mxu0 0.0
    %599 = vmatpush2.msra.mxu0 0.0
    %600 = vmatprep.subr.mxu0 0.0
    %601 = vmatpush2.msra.mxu0 0.0
    %602 = vmatprep.subr.mxu0 0.0
    %603 = vmatpush2.msra.mxu0 0.0
    %604 = vmatprep.subr.mxu0 0.0
    %605 = vmatpush2.msra.mxu0 0.0
    %606 = vmatprep.subr.mxu0 0.0
    %607 = vmatpush2.msra.mxu0 0.0
    %608 = vmatprep.subr.mxu0 0.0
    %609 = vmatpush2.msra.mxu0 0.0
    %610 = vmatprep.subr.mxu0 0.0
    %611 = vmatpush2.msra.mxu0 0.0
    %612 = vmatprep.subr.mxu0 0.0
    %613 = vmatpush2.msra.mxu0 0.0
    %614 = vmatprep.subr.mxu0 0.0
    %615 = vmatpush2.msra.mxu0 0.0
    %616 = vmatprep.subr.mxu0 0.0
    %617 = vmatpush2.msra.mxu0 0.0
    %618 = vmatprep.subr.mxu0 0.0
    %619 = vmatpush2.msra.mxu0 0.0
    %620 = vmatprep.subr.mxu0 0.0
    %621 = vmatpush2.msra.mxu0 0.0
    %622 = vmatprep.subr.mxu0 0.0
    %623 = vmatpush2.msra.mxu0 0.0
    %624 = vmatprep.subr.mxu0 0.0
    %625 = vmatpush2.msra.mxu0 0.0
    %626 = vmatprep.mubr.f32.mxu0 0.0
    %627 = vmatmul.mubr.f32.gmra.mxu0 %v558
    %v628 = vpop.f32.mrf.mxu0
    %v629 = vadd.f32 0.0, %v628
    %v630 = vpop.f32.mrf.mxu0
    %v631 = vadd.f32 0.0, %v630
    %632 = vdwg.mxu0
    %633 = vmatprep.subr.mxu0 %v365
    %634 = vmatpush1.msra.mxu0 %v364
    %635 = vmatprep.subr.mxu0 %v361
    %636 = vmatpush1.msra.mxu0 %v360
    %637 = vmatprep.subr.mxu0 %v357
    %638 = vmatpush1.msra.mxu0 %v356
    %639 = vmatprep.subr.mxu0 %v353
    %640 = vmatpush1.msra.mxu0 %v352
    %641 = vmatprep.subr.mxu0 %v349
    %642 = vmatpush1.msra.mxu0 %v348
    %643 = vmatprep.subr.mxu0 %v345
    %644 = vmatpush1.msra.mxu0 %v344
    %645 = vmatprep.subr.mxu0 %v341
    %646 = vmatpush1.msra.mxu0 %v340
    %647 = vmatprep.subr.mxu0 %v337
    %648 = vmatpush1.msra.mxu0 %v336
    %649 = vmatprep.subr.mxu0 %v333
    %650 = vmatpush1.msra.mxu0 %v332
    %651 = vmatprep.subr.mxu0 %v329
    %652 = vmatpush1.msra.mxu0 %v328
    %653 = vmatprep.subr.mxu0 %v325
    %654 = vmatpush1.msra.mxu0 %v324
    %655 = vmatprep.subr.mxu0 %v321
    %656 = vmatpush1.msra.mxu0 %v320
    %657 = vmatprep.subr.mxu0 %v317
    %658 = vmatpush1.msra.mxu0 %v316
    %659 = vmatprep.subr.mxu0 %v313
    %660 = vmatpush1.msra.mxu0 %v312
    %661 = vmatprep.subr.mxu0 %v309
    %662 = vmatpush1.msra.mxu0 %v308
    %663 = vmatprep.subr.mxu0 %v305
    %664 = vmatpush1.msra.mxu0 %v304
    %665 = vmatprep.subr.mxu0 0.0
    %666 = vmatpush2.msra.mxu0 0.0
    %667 = vmatprep.subr.mxu0 0.0
    %668 = vmatpush2.msra.mxu0 0.0
    %669 = vmatprep.subr.mxu0 0.0
    %670 = vmatpush2.msra.mxu0 0.0
    %671 = vmatprep.subr.mxu0 0.0
    %672 = vmatpush2.msra.mxu0 0.0
    %673 = vmatprep.subr.mxu0 0.0
    %674 = vmatpush2.msra.mxu0 0.0
    %675 = vmatprep.subr.mxu0 0.0
    %676 = vmatpush2.msra.mxu0 0.0
    %677 = vmatprep.subr.mxu0 0.0
    %678 = vmatpush2.msra.mxu0 0.0
    %679 = vmatprep.subr.mxu0 0.0
    %680 = vmatpush2.msra.mxu0 0.0
    %681 = vmatprep.subr.mxu0 0.0
    %682 = vmatpush2.msra.mxu0 0.0
    %683 = vmatprep.subr.mxu0 0.0
    %684 = vmatpush2.msra.mxu0 0.0
    %685 = vmatprep.subr.mxu0 0.0
    %686 = vmatpush2.msra.mxu0 0.0
    %687 = vmatprep.subr.mxu0 0.0
    %688 = vmatpush2.msra.mxu0 0.0
    %689 = vmatprep.subr.mxu0 0.0
    %690 = vmatpush2.msra.mxu0 0.0
    %691 = vmatprep.subr.mxu0 0.0
    %692 = vmatpush2.msra.mxu0 0.0
    %693 = vmatprep.subr.mxu0 0.0
    %694 = vmatpush2.msra.mxu0 0.0
    %695 = vmatprep.subr.mxu0 0.0
    %696 = vmatpush2.msra.mxu0 0.0
    %697 = vmatprep.mubr.f32.mxu0 0.0
    %698 = vmatmul.mubr.f32.gmra.mxu0 %v558
    %v699 = vpop.f32.mrf.mxu0
    %v700 = vadd.f32 0.0, %v699
    %v701 = vpop.f32.mrf.mxu0
    %v702 = vadd.f32 0.0, %v701
    %703 = vdwg.mxu0
    %v708 = vcombine.low %v629, %v631
    %v709 = vcombine.low %v700, %v702
    %v711 = vunpack.c.l.s4 1966171168
    %v712 = vunpack.c.0.s8 %v711
    %v713 = vlaneseq
    %v714 = vshrl.u32 %v713, 7
    %v715 = vsub.s32 %v712, %v714
    %v716 = vrot.slane %v708, %v715
    %v718 = vunpack.c.l.s4 1966171168
    %v719 = vunpack.c.0.s8 %v718
    %v720 = vlaneseq
    %v721 = vshrl.u32 %v720, 7
    %v722 = vsub.s32 %v719, %v721
    %v723 = vrot.slane %v709, %v722
    %v724 = vcombine.low %v716, %v723
    %v726 = vunpack.c.l.s4 1966171168
    %v727 = vunpack.c.0.s8 %v726
    %v728 = vlaneseq
    %v729 = vshrl.u32 %v728, 7
    %v730 = vsub.s32 %v727, %v729
    %v731 = vrot.slane %v724, %v730
    %v733 = vadd.f32 %v561, %v731
    %v734 = vxor.u32 %v733, 2147483648
    %v735 = vmul.f32 %v734, 1.442695
    %v736 = vpow.pop %v735
    %v737 = vadd.f32 %v736, 1.0
    %v738 = vrcp.pop %v737
    %v739 = vmul.f32 1.0, %v738
    %v741 = vrot.slane %v733, 3
    %v743 = vtanh.pop %v741
    %v745 = vrot.slane %v739, 1
    %v747 = vmul.f32 %v745, %v554
    %v748 = vmul.f32 %v739, %v743
    %v749 = vadd.f32 %v747, %v748
    %v750 = vtanh.pop %v749
    %v751 = vrot.slane %v739, 2
    %v753 = vmul.f32 %v751, %v750
    %754 = vst [vmem:[#allocation3 + $0x1] sm:$0x1] %v753
    %s755 = scalar_lea.vmem [#allocation2], 2
    %v756 = vld [vmem:[%s755] ss:$8 sm:$0xf]
    %757 = vmatprep.subr.mxu0 %v363
    %758 = vmatpush1.msra.mxu0 %v362
    %759 = vmatprep.subr.mxu0 %v359
    %760 = vmatpush1.msra.mxu0 %v358
    %761 = vmatprep.subr.mxu0 %v355
    %762 = vmatpush1.msra.mxu0 %v354
    %763 = vmatprep.subr.mxu0 %v351
    %764 = vmatpush1.msra.mxu0 %v350
    %765 = vmatprep.subr.mxu0 %v347
    %766 = vmatpush1.msra.mxu0 %v346
    %767 = vmatprep.subr.mxu0 %v343
    %768 = vmatpush1.msra.mxu0 %v342
    %769 = vmatprep.subr.mxu0 %v339
    %770 = vmatpush1.msra.mxu0 %v338
    %771 = vmatprep.subr.mxu0 %v335
    %772 = vmatpush1.msra.mxu0 %v334
    %773 = vmatprep.subr.mxu0 %v331
    %774 = vmatpush1.msra.mxu0 %v330
    %775 = vmatprep.subr.mxu0 %v327
    %776 = vmatpush1.msra.mxu0 %v326
    %777 = vmatprep.subr.mxu0 %v323
    %778 = vmatpush1.msra.mxu0 %v322
    %779 = vmatprep.subr.mxu0 %v319
    %780 = vmatpush1.msra.mxu0 %v318
    %781 = vmatprep.subr.mxu0 %v315
    %782 = vmatpush1.msra.mxu0 %v314
    %783 = vmatprep.subr.mxu0 %v311
    %784 = vmatpush1.msra.mxu0 %v310
    %785 = vmatprep.subr.mxu0 %v307
    %786 = vmatpush1.msra.mxu0 %v306
    %787 = vmatprep.subr.mxu0 %v303
    %788 = vmatpush1.msra.mxu0 %v302
    %789 = vmatprep.subr.mxu0 0.0
    %790 = vmatpush2.msra.mxu0 0.0
    %791 = vmatprep.subr.mxu0 0.0
    %792 = vmatpush2.msra.mxu0 0.0
    %793 = vmatprep.subr.mxu0 0.0
    %794 = vmatpush2.msra.mxu0 0.0
    %795 = vmatprep.subr.mxu0 0.0
    %796 = vmatpush2.msra.mxu0 0.0
    %797 = vmatprep.subr.mxu0 0.0
    %798 = vmatpush2.msra.mxu0 0.0
    %799 = vmatprep.subr.mxu0 0.0
    %800 = vmatpush2.msra.mxu0 0.0
    %801 = vmatprep.subr.mxu0 0.0
    %802 = vmatpush2.msra.mxu0 0.0
    %803 = vmatprep.subr.mxu0 0.0
    %804 = vmatpush2.msra.mxu0 0.0
    %805 = vmatprep.subr.mxu0 0.0
    %806 = vmatpush2.msra.mxu0 0.0
    %807 = vmatprep.subr.mxu0 0.0
    %808 = vmatpush2.msra.mxu0 0.0
    %809 = vmatprep.subr.mxu0 0.0
    %810 = vmatpush2.msra.mxu0 0.0
    %811 = vmatprep.subr.mxu0 0.0
    %812 = vmatpush2.msra.mxu0 0.0
    %813 = vmatprep.subr.mxu0 0.0
    %814 = vmatpush2.msra.mxu0 0.0
    %815 = vmatprep.subr.mxu0 0.0
    %816 = vmatpush2.msra.mxu0 0.0
    %817 = vmatprep.subr.mxu0 0.0
    %818 = vmatpush2.msra.mxu0 0.0
    %819 = vmatprep.subr.mxu0 0.0
    %820 = vmatpush2.msra.mxu0 0.0
    %821 = vmatprep.mubr.f32.mxu0 0.0
    %822 = vmatmul.mubr.f32.gmra.mxu0 %v753
    %v823 = vpop.f32.mrf.mxu0
    %v824 = vadd.f32 0.0, %v823
    %v825 = vpop.f32.mrf.mxu0
    %v826 = vadd.f32 0.0, %v825
    %827 = vdwg.mxu0
    %828 = vmatprep.subr.mxu0 %v365
    %829 = vmatpush1.msra.mxu0 %v364
    %830 = vmatprep.subr.mxu0 %v361
    %831 = vmatpush1.msra.mxu0 %v360
    %832 = vmatprep.subr.mxu0 %v357
    %833 = vmatpush1.msra.mxu0 %v356
    %834 = vmatprep.subr.mxu0 %v353
    %835 = vmatpush1.msra.mxu0 %v352
    %836 = vmatprep.subr.mxu0 %v349
    %837 = vmatpush1.msra.mxu0 %v348
    %838 = vmatprep.subr.mxu0 %v345
    %839 = vmatpush1.msra.mxu0 %v344
    %840 = vmatprep.subr.mxu0 %v341
    %841 = vmatpush1.msra.mxu0 %v340
    %842 = vmatprep.subr.mxu0 %v337
    %843 = vmatpush1.msra.mxu0 %v336
    %844 = vmatprep.subr.mxu0 %v333
    %845 = vmatpush1.msra.mxu0 %v332
    %846 = vmatprep.subr.mxu0 %v329
    %847 = vmatpush1.msra.mxu0 %v328
    %848 = vmatprep.subr.mxu0 %v325
    %849 = vmatpush1.msra.mxu0 %v324
    %850 = vmatprep.subr.mxu0 %v321
    %851 = vmatpush1.msra.mxu0 %v320
    %852 = vmatprep.subr.mxu0 %v317
    %853 = vmatpush1.msra.mxu0 %v316
    %854 = vmatprep.subr.mxu0 %v313
    %855 = vmatpush1.msra.mxu0 %v312
    %856 = vmatprep.subr.mxu0 %v309
    %857 = vmatpush1.msra.mxu0 %v308
    %858 = vmatprep.subr.mxu0 %v305
    %859 = vmatpush1.msra.mxu0 %v304
    %860 = vmatprep.subr.mxu0 0.0
    %861 = vmatpush2.msra.mxu0 0.0
    %862 = vmatprep.subr.mxu0 0.0
    %863 = vmatpush2.msra.mxu0 0.0
    %864 = vmatprep.subr.mxu0 0.0
    %865 = vmatpush2.msra.mxu0 0.0
    %866 = vmatprep.subr.mxu0 0.0
    %867 = vmatpush2.msra.mxu0 0.0
    %868 = vmatprep.subr.mxu0 0.0
    %869 = vmatpush2.msra.mxu0 0.0
    %870 = vmatprep.subr.mxu0 0.0
    %871 = vmatpush2.msra.mxu0 0.0
    %872 = vmatprep.subr.mxu0 0.0
    %873 = vmatpush2.msra.mxu0 0.0
    %874 = vmatprep.subr.mxu0 0.0
    %875 = vmatpush2.msra.mxu0 0.0
    %876 = vmatprep.subr.mxu0 0.0
    %877 = vmatpush2.msra.mxu0 0.0
    %878 = vmatprep.subr.mxu0 0.0
    %879 = vmatpush2.msra.mxu0 0.0
    %880 = vmatprep.subr.mxu0 0.0
    %881 = vmatpush2.msra.mxu0 0.0
    %882 = vmatprep.subr.mxu0 0.0
    %883 = vmatpush2.msra.mxu0 0.0
    %884 = vmatprep.subr.mxu0 0.0
    %885 = vmatpush2.msra.mxu0 0.0
    %886 = vmatprep.subr.mxu0 0.0
    %887 = vmatpush2.msra.mxu0 0.0
    %888 = vmatprep.subr.mxu0 0.0
    %889 = vmatpush2.msra.mxu0 0.0
    %890 = vmatprep.subr.mxu0 0.0
    %891 = vmatpush2.msra.mxu0 0.0
    %892 = vmatprep.mubr.f32.mxu0 0.0
    %893 = vmatmul.mubr.f32.gmra.mxu0 %v753
    %v894 = vpop.f32.mrf.mxu0
    %v895 = vadd.f32 0.0, %v894
    %v896 = vpop.f32.mrf.mxu0
    %v897 = vadd.f32 0.0, %v896
    %898 = vdwg.mxu0
    %v903 = vcombine.low %v824, %v826
    %v904 = vcombine.low %v895, %v897
    %v906 = vunpack.c.l.s4 1966171168
    %v907 = vunpack.c.0.s8 %v906
    %v908 = vlaneseq
    %v909 = vshrl.u32 %v908, 7
    %v910 = vsub.s32 %v907, %v909
    %v911 = vrot.slane %v903, %v910
    %v913 = vunpack.c.l.s4 1966171168
    %v914 = vunpack.c.0.s8 %v913
    %v915 = vlaneseq
    %v916 = vshrl.u32 %v915, 7
    %v917 = vsub.s32 %v914, %v916
    %v918 = vrot.slane %v904, %v917
    %v919 = vcombine.low %v911, %v918
    %v921 = vunpack.c.l.s4 1966171168
    %v922 = vunpack.c.0.s8 %v921
    %v923 = vlaneseq
    %v924 = vshrl.u32 %v923, 7
    %v925 = vsub.s32 %v922, %v924
    %v926 = vrot.slane %v919, %v925
    %v928 = vadd.f32 %v756, %v926
    %v929 = vxor.u32 %v928, 2147483648
    %v930 = vmul.f32 %v929, 1.442695
    %v931 = vpow.pop %v930
    %v932 = vadd.f32 %v931, 1.0
    %v933 = vrcp.pop %v932
    %v934 = vmul.f32 1.0, %v933
    %v936 = vrot.slane %v928, 3
    %v938 = vtanh.pop %v936
    %v940 = vrot.slane %v934, 1
    %v942 = vmul.f32 %v940, %v749
    %v943 = vmul.f32 %v934, %v938
    %v944 = vadd.f32 %v942, %v943
    %v945 = vtanh.pop %v944
    %v946 = vrot.slane %v934, 2
    %v948 = vmul.f32 %v946, %v945
    %949 = vst [vmem:[#allocation3 + $0x2] sm:$0x1] %v948
    %s950 = scalar_lea.vmem [#allocation2], 3
    %v951 = vld [vmem:[%s950] ss:$8 sm:$0xf]
    %952 = vmatprep.subr.mxu0 %v363
    %953 = vmatpush1.msra.mxu0 %v362
    %954 = vmatprep.subr.mxu0 %v359
    %955 = vmatpush1.msra.mxu0 %v358
    %956 = vmatprep.subr.mxu0 %v355
    %957 = vmatpush1.msra.mxu0 %v354
    %958 = vmatprep.subr.mxu0 %v351
    %959 = vmatpush1.msra.mxu0 %v350
    %960 = vmatprep.subr.mxu0 %v347
    %961 = vmatpush1.msra.mxu0 %v346
    %962 = vmatprep.subr.mxu0 %v343
    %963 = vmatpush1.msra.mxu0 %v342
    %964 = vmatprep.subr.mxu0 %v339
    %965 = vmatpush1.msra.mxu0 %v338
    %966 = vmatprep.subr.mxu0 %v335
    %967 = vmatpush1.msra.mxu0 %v334
    %968 = vmatprep.subr.mxu0 %v331
    %969 = vmatpush1.msra.mxu0 %v330
    %970 = vmatprep.subr.mxu0 %v327
    %971 = vmatpush1.msra.mxu0 %v326
    %972 = vmatprep.subr.mxu0 %v323
    %973 = vmatpush1.msra.mxu0 %v322
    %974 = vmatprep.subr.mxu0 %v319
    %975 = vmatpush1.msra.mxu0 %v318
    %976 = vmatprep.subr.mxu0 %v315
    %977 = vmatpush1.msra.mxu0 %v314
    %978 = vmatprep.subr.mxu0 %v311
    %979 = vmatpush1.msra.mxu0 %v310
    %980 = vmatprep.subr.mxu0 %v307
    %981 = vmatpush1.msra.mxu0 %v306
    %982 = vmatprep.subr.mxu0 %v303
    %983 = vmatpush1.msra.mxu0 %v302
    %984 = vmatprep.subr.mxu0 0.0
    %985 = vmatpush2.msra.mxu0 0.0
    %986 = vmatprep.subr.mxu0 0.0
    %987 = vmatpush2.msra.mxu0 0.0
    %988 = vmatprep.subr.mxu0 0.0
    %989 = vmatpush2.msra.mxu0 0.0
    %990 = vmatprep.subr.mxu0 0.0
    %991 = vmatpush2.msra.mxu0 0.0
    %992 = vmatprep.subr.mxu0 0.0
    %993 = vmatpush2.msra.mxu0 0.0
    %994 = vmatprep.subr.mxu0 0.0
    %995 = vmatpush2.msra.mxu0 0.0
    %996 = vmatprep.subr.mxu0 0.0
    %997 = vmatpush2.msra.mxu0 0.0
    %998 = vmatprep.subr.mxu0 0.0
    %999 = vmatpush2.msra.mxu0 0.0
    %1000 = vmatprep.subr.mxu0 0.0
    %1001 = vmatpush2.msra.mxu0 0.0
    %1002 = vmatprep.subr.mxu0 0.0
    %1003 = vmatpush2.msra.mxu0 0.0
    %1004 = vmatprep.subr.mxu0 0.0
    %1005 = vmatpush2.msra.mxu0 0.0
    %1006 = vmatprep.subr.mxu0 0.0
    %1007 = vmatpush2.msra.mxu0 0.0
    %1008 = vmatprep.subr.mxu0 0.0
    %1009 = vmatpush2.msra.mxu0 0.0
    %1010 = vmatprep.subr.mxu0 0.0
    %1011 = vmatpush2.msra.mxu0 0.0
    %1012 = vmatprep.subr.mxu0 0.0
    %1013 = vmatpush2.msra.mxu0 0.0
    %1014 = vmatprep.subr.mxu0 0.0
    %1015 = vmatpush2.msra.mxu0 0.0
    %1016 = vmatprep.mubr.f32.mxu0 0.0
    %1017 = vmatmul.mubr.f32.gmra.mxu0 %v948
    %v1018 = vpop.f32.mrf.mxu0
    %v1019 = vadd.f32 0.0, %v1018
    %v1020 = vpop.f32.mrf.mxu0
    %v1021 = vadd.f32 0.0, %v1020
    %1022 = vdwg.mxu0
    %1023 = vmatprep.subr.mxu0 %v365
    %1024 = vmatpush1.msra.mxu0 %v364
    %1025 = vmatprep.subr.mxu0 %v361
    %1026 = vmatpush1.msra.mxu0 %v360
    %1027 = vmatprep.subr.mxu0 %v357
    %1028 = vmatpush1.msra.mxu0 %v356
    %1029 = vmatprep.subr.mxu0 %v353
    %1030 = vmatpush1.msra.mxu0 %v352
    %1031 = vmatprep.subr.mxu0 %v349
    %1032 = vmatpush1.msra.mxu0 %v348
    %1033 = vmatprep.subr.mxu0 %v345
    %1034 = vmatpush1.msra.mxu0 %v344
    %1035 = vmatprep.subr.mxu0 %v341
    %1036 = vmatpush1.msra.mxu0 %v340
    %1037 = vmatprep.subr.mxu0 %v337
    %1038 = vmatpush1.msra.mxu0 %v336
    %1039 = vmatprep.subr.mxu0 %v333
    %1040 = vmatpush1.msra.mxu0 %v332
    %1041 = vmatprep.subr.mxu0 %v329
    %1042 = vmatpush1.msra.mxu0 %v328
    %1043 = vmatprep.subr.mxu0 %v325
    %1044 = vmatpush1.msra.mxu0 %v324
    %1045 = vmatprep.subr.mxu0 %v321
    %1046 = vmatpush1.msra.mxu0 %v320
    %1047 = vmatprep.subr.mxu0 %v317
    %1048 = vmatpush1.msra.mxu0 %v316
    %1049 = vmatprep.subr.mxu0 %v313
    %1050 = vmatpush1.msra.mxu0 %v312
    %1051 = vmatprep.subr.mxu0 %v309
    %1052 = vmatpush1.msra.mxu0 %v308
    %1053 = vmatprep.subr.mxu0 %v305
    %1054 = vmatpush1.msra.mxu0 %v304
    %1055 = vmatprep.subr.mxu0 0.0
    %1056 = vmatpush2.msra.mxu0 0.0
    %1057 = vmatprep.subr.mxu0 0.0
    %1058 = vmatpush2.msra.mxu0 0.0
    %1059 = vmatprep.subr.mxu0 0.0
    %1060 = vmatpush2.msra.mxu0 0.0
    %1061 = vmatprep.subr.mxu0 0.0
    %1062 = vmatpush2.msra.mxu0 0.0
    %1063 = vmatprep.subr.mxu0 0.0
    %1064 = vmatpush2.msra.mxu0 0.0
    %1065 = vmatprep.subr.mxu0 0.0
    %1066 = vmatpush2.msra.mxu0 0.0
    %1067 = vmatprep.subr.mxu0 0.0
    %1068 = vmatpush2.msra.mxu0 0.0
    %1069 = vmatprep.subr.mxu0 0.0
    %1070 = vmatpush2.msra.mxu0 0.0
    %1071 = vmatprep.subr.mxu0 0.0
    %1072 = vmatpush2.msra.mxu0 0.0
    %1073 = vmatprep.subr.mxu0 0.0
    %1074 = vmatpush2.msra.mxu0 0.0
    %1075 = vmatprep.subr.mxu0 0.0
    %1076 = vmatpush2.msra.mxu0 0.0
    %1077 = vmatprep.subr.mxu0 0.0
    %1078 = vmatpush2.msra.mxu0 0.0
    %1079 = vmatprep.subr.mxu0 0.0
    %1080 = vmatpush2.msra.mxu0 0.0
    %1081 = vmatprep.subr.mxu0 0.0
    %1082 = vmatpush2.msra.mxu0 0.0
    %1083 = vmatprep.subr.mxu0 0.0
    %1084 = vmatpush2.msra.mxu0 0.0
    %1085 = vmatprep.subr.mxu0 0.0
    %1086 = vmatpush2.msra.mxu0 0.0
    %1087 = vmatprep.mubr.f32.mxu0 0.0
    %1088 = vmatmul.mubr.f32.gmra.mxu0 %v948
    %v1089 = vpop.f32.mrf.mxu0
    %v1090 = vadd.f32 0.0, %v1089
    %v1091 = vpop.f32.mrf.mxu0
    %v1092 = vadd.f32 0.0, %v1091
    %1093 = vdwg.mxu0
    %v1098 = vcombine.low %v1019, %v1021
    %v1099 = vcombine.low %v1090, %v1092
    %v1101 = vunpack.c.l.s4 1966171168
    %v1102 = vunpack.c.0.s8 %v1101
    %v1103 = vlaneseq
    %v1104 = vshrl.u32 %v1103, 7
    %v1105 = vsub.s32 %v1102, %v1104
    %v1106 = vrot.slane %v1098, %v1105
    %v1108 = vunpack.c.l.s4 1966171168
    %v1109 = vunpack.c.0.s8 %v1108
    %v1110 = vlaneseq
    %v1111 = vshrl.u32 %v1110, 7
    %v1112 = vsub.s32 %v1109, %v1111
    %v1113 = vrot.slane %v1099, %v1112
    %v1114 = vcombine.low %v1106, %v1113
    %v1116 = vunpack.c.l.s4 1966171168
    %v1117 = vunpack.c.0.s8 %v1116
    %v1118 = vlaneseq
    %v1119 = vshrl.u32 %v1118, 7
    %v1120 = vsub.s32 %v1117, %v1119
    %v1121 = vrot.slane %v1114, %v1120
    %v1123 = vadd.f32 %v951, %v1121
    %v1124 = vxor.u32 %v1123, 2147483648
    %v1125 = vmul.f32 %v1124, 1.442695
    %v1126 = vpow.pop %v1125
    %v1127 = vadd.f32 %v1126, 1.0
    %v1128 = vrcp.pop %v1127
    %v1129 = vmul.f32 1.0, %v1128
    %v1131 = vrot.slane %v1123, 3
    %v1133 = vtanh.pop %v1131
    %v1135 = vrot.slane %v1129, 1
    %v1137 = vmul.f32 %v1135, %v944
    %v1138 = vmul.f32 %v1129, %v1133
    %v1139 = vadd.f32 %v1137, %v1138
    %v1140 = vtanh.pop %v1139
    %v1141 = vrot.slane %v1129, 2
    %v1143 = vmul.f32 %v1141, %v1140
    %1144 = vst [vmem:[#allocation3 + $0x3] sm:$0x1] %v1143
    %s1145 = scalar_lea.vmem [#allocation2], 4
    %v1146 = vld [vmem:[%s1145] ss:$8 sm:$0xf]
    %1147 = vmatprep.subr.mxu0 %v363
    %1148 = vmatpush1.msra.mxu0 %v362
    %1149 = vmatprep.subr.mxu0 %v359
    %1150 = vmatpush1.msra.mxu0 %v358
    %1151 = vmatprep.subr.mxu0 %v355
    %1152 = vmatpush1.msra.mxu0 %v354
    %1153 = vmatprep.subr.mxu0 %v351
    %1154 = vmatpush1.msra.mxu0 %v350
    %1155 = vmatprep.subr.mxu0 %v347
    %1156 = vmatpush1.msra.mxu0 %v346
    %1157 = vmatprep.subr.mxu0 %v343
    %1158 = vmatpush1.msra.mxu0 %v342
    %1159 = vmatprep.subr.mxu0 %v339
    %1160 = vmatpush1.msra.mxu0 %v338
    %1161 = vmatprep.subr.mxu0 %v335
    %1162 = vmatpush1.msra.mxu0 %v334
    %1163 = vmatprep.subr.mxu0 %v331
    %1164 = vmatpush1.msra.mxu0 %v330
    %1165 = vmatprep.subr.mxu0 %v327
    %1166 = vmatpush1.msra.mxu0 %v326
    %1167 = vmatprep.subr.mxu0 %v323
    %1168 = vmatpush1.msra.mxu0 %v322
    %1169 = vmatprep.subr.mxu0 %v319
    %1170 = vmatpush1.msra.mxu0 %v318
    %1171 = vmatprep.subr.mxu0 %v315
    %1172 = vmatpush1.msra.mxu0 %v314
    %1173 = vmatprep.subr.mxu0 %v311
    %1174 = vmatpush1.msra.mxu0 %v310
    %1175 = vmatprep.subr.mxu0 %v307
    %1176 = vmatpush1.msra.mxu0 %v306
    %1177 = vmatprep.subr.mxu0 %v303
    %1178 = vmatpush1.msra.mxu0 %v302
    %1179 = vmatprep.subr.mxu0 0.0
    %1180 = vmatpush2.msra.mxu0 0.0
    %1181 = vmatprep.subr.mxu0 0.0
    %1182 = vmatpush2.msra.mxu0 0.0
    %1183 = vmatprep.subr.mxu0 0.0
    %1184 = vmatpush2.msra.mxu0 0.0
    %1185 = vmatprep.subr.mxu0 0.0
    %1186 = vmatpush2.msra.mxu0 0.0
    %1187 = vmatprep.subr.mxu0 0.0
    %1188 = vmatpush2.msra.mxu0 0.0
    %1189 = vmatprep.subr.mxu0 0.0
    %1190 = vmatpush2.msra.mxu0 0.0
    %1191 = vmatprep.subr.mxu0 0.0
    %1192 = vmatpush2.msra.mxu0 0.0
    %1193 = vmatprep.subr.mxu0 0.0
    %1194 = vmatpush2.msra.mxu0 0.0
    %1195 = vmatprep.subr.mxu0 0.0
    %1196 = vmatpush2.msra.mxu0 0.0
    %1197 = vmatprep.subr.mxu0 0.0
    %1198 = vmatpush2.msra.mxu0 0.0
    %1199 = vmatprep.subr.mxu0 0.0
    %1200 = vmatpush2.msra.mxu0 0.0
    %1201 = vmatprep.subr.mxu0 0.0
    %1202 = vmatpush2.msra.mxu0 0.0
    %1203 = vmatprep.subr.mxu0 0.0
    %1204 = vmatpush2.msra.mxu0 0.0
    %1205 = vmatprep.subr.mxu0 0.0
    %1206 = vmatpush2.msra.mxu0 0.0
    %1207 = vmatprep.subr.mxu0 0.0
    %1208 = vmatpush2.msra.mxu0 0.0
    %1209 = vmatprep.subr.mxu0 0.0
    %1210 = vmatpush2.msra.mxu0 0.0
    %1211 = vmatprep.mubr.f32.mxu0 0.0
    %1212 = vmatmul.mubr.f32.gmra.mxu0 %v1143
    %v1213 = vpop.f32.mrf.mxu0
    %v1214 = vadd.f32 0.0, %v1213
    %v1215 = vpop.f32.mrf.mxu0
    %v1216 = vadd.f32 0.0, %v1215
    %1217 = vdwg.mxu0
    %1218 = vmatprep.subr.mxu0 %v365
    %1219 = vmatpush1.msra.mxu0 %v364
    %1220 = vmatprep.subr.mxu0 %v361
    %1221 = vmatpush1.msra.mxu0 %v360
    %1222 = vmatprep.subr.mxu0 %v357
    %1223 = vmatpush1.msra.mxu0 %v356
    %1224 = vmatprep.subr.mxu0 %v353
    %1225 = vmatpush1.msra.mxu0 %v352
    %1226 = vmatprep.subr.mxu0 %v349
    %1227 = vmatpush1.msra.mxu0 %v348
    %1228 = vmatprep.subr.mxu0 %v345
    %1229 = vmatpush1.msra.mxu0 %v344
    %1230 = vmatprep.subr.mxu0 %v341
    %1231 = vmatpush1.msra.mxu0 %v340
    %1232 = vmatprep.subr.mxu0 %v337
    %1233 = vmatpush1.msra.mxu0 %v336
    %1234 = vmatprep.subr.mxu0 %v333
    %1235 = vmatpush1.msra.mxu0 %v332
    %1236 = vmatprep.subr.mxu0 %v329
    %1237 = vmatpush1.msra.mxu0 %v328
    %1238 = vmatprep.subr.mxu0 %v325
    %1239 = vmatpush1.msra.mxu0 %v324
    %1240 = vmatprep.subr.mxu0 %v321
    %1241 = vmatpush1.msra.mxu0 %v320
    %1242 = vmatprep.subr.mxu0 %v317
    %1243 = vmatpush1.msra.mxu0 %v316
    %1244 = vmatprep.subr.mxu0 %v313
    %1245 = vmatpush1.msra.mxu0 %v312
    %1246 = vmatprep.subr.mxu0 %v309
    %1247 = vmatpush1.msra.mxu0 %v308
    %1248 = vmatprep.subr.mxu0 %v305
    %1249 = vmatpush1.msra.mxu0 %v304
    %1250 = vmatprep.subr.mxu0 0.0
    %1251 = vmatpush2.msra.mxu0 0.0
    %1252 = vmatprep.subr.mxu0 0.0
    %1253 = vmatpush2.msra.mxu0 0.0
    %1254 = vmatprep.subr.mxu0 0.0
    %1255 = vmatpush2.msra.mxu0 0.0
    %1256 = vmatprep.subr.mxu0 0.0
    %1257 = vmatpush2.msra.mxu0 0.0
    %1258 = vmatprep.subr.mxu0 0.0
    %1259 = vmatpush2.msra.mxu0 0.0
    %1260 = vmatprep.subr.mxu0 0.0
    %1261 = vmatpush2.msra.mxu0 0.0
    %1262 = vmatprep.subr.mxu0 0.0
    %1263 = vmatpush2.msra.mxu0 0.0
    %1264 = vmatprep.subr.mxu0 0.0
    %1265 = vmatpush2.msra.mxu0 0.0
    %1266 = vmatprep.subr.mxu0 0.0
    %1267 = vmatpush2.msra.mxu0 0.0
    %1268 = vmatprep.subr.mxu0 0.0
    %1269 = vmatpush2.msra.mxu0 0.0
    %1270 = vmatprep.subr.mxu0 0.0
    %1271 = vmatpush2.msra.mxu0 0.0
    %1272 = vmatprep.subr.mxu0 0.0
    %1273 = vmatpush2.msra.mxu0 0.0
    %1274 = vmatprep.subr.mxu0 0.0
    %1275 = vmatpush2.msra.mxu0 0.0
    %1276 = vmatprep.subr.mxu0 0.0
    %1277 = vmatpush2.msra.mxu0 0.0
    %1278 = vmatprep.subr.mxu0 0.0
    %1279 = vmatpush2.msra.mxu0 0.0
    %1280 = vmatprep.subr.mxu0 0.0
    %1281 = vmatpush2.msra.mxu0 0.0
    %1282 = vmatprep.mubr.f32.mxu0 0.0
    %1283 = vmatmul.mubr.f32.gmra.mxu0 %v1143
    %v1284 = vpop.f32.mrf.mxu0
    %v1285 = vadd.f32 0.0, %v1284
    %v1286 = vpop.f32.mrf.mxu0
    %v1287 = vadd.f32 0.0, %v1286
    %1288 = vdwg.mxu0
    %v1293 = vcombine.low %v1214, %v1216
    %v1294 = vcombine.low %v1285, %v1287
    %v1296 = vunpack.c.l.s4 1966171168
    %v1297 = vunpack.c.0.s8 %v1296
    %v1298 = vlaneseq
    %v1299 = vshrl.u32 %v1298, 7
    %v1300 = vsub.s32 %v1297, %v1299
    %v1301 = vrot.slane %v1293, %v1300
    %v1303 = vunpack.c.l.s4 1966171168
    %v1304 = vunpack.c.0.s8 %v1303
    %v1305 = vlaneseq
    %v1306 = vshrl.u32 %v1305, 7
    %v1307 = vsub.s32 %v1304, %v1306
    %v1308 = vrot.slane %v1294, %v1307
    %v1309 = vcombine.low %v1301, %v1308
    %v1311 = vunpack.c.l.s4 1966171168
    %v1312 = vunpack.c.0.s8 %v1311
    %v1313 = vlaneseq
    %v1314 = vshrl.u32 %v1313, 7
    %v1315 = vsub.s32 %v1312, %v1314
    %v1316 = vrot.slane %v1309, %v1315
    %v1318 = vadd.f32 %v1146, %v1316
    %v1319 = vxor.u32 %v1318, 2147483648
    %v1320 = vmul.f32 %v1319, 1.442695
    %v1321 = vpow.pop %v1320
    %v1322 = vadd.f32 %v1321, 1.0
    %v1323 = vrcp.pop %v1322
    %v1324 = vmul.f32 1.0, %v1323
    %v1326 = vrot.slane %v1318, 3
    %v1328 = vtanh.pop %v1326
    %v1330 = vrot.slane %v1324, 1
    %v1332 = vmul.f32 %v1330, %v1139
    %v1333 = vmul.f32 %v1324, %v1328
    %v1334 = vadd.f32 %v1332, %v1333
    %v1335 = vtanh.pop %v1334
    %v1336 = vrot.slane %v1324, 2
    %v1338 = vmul.f32 %v1336, %v1335
    %1339 = vst [vmem:[#allocation3 + $0x4] sm:$0x1] %v1338
    %s1340 = scalar_lea.vmem [#allocation2], 5
    %v1341 = vld [vmem:[%s1340] ss:$8 sm:$0xf]
    %1342 = vmatprep.subr.mxu0 %v363
    %1343 = vmatpush1.msra.mxu0 %v362
    %1344 = vmatprep.subr.mxu0 %v359
    %1345 = vmatpush1.msra.mxu0 %v358
    %1346 = vmatprep.subr.mxu0 %v355
    %1347 = vmatpush1.msra.mxu0 %v354
    %1348 = vmatprep.subr.mxu0 %v351
    %1349 = vmatpush1.msra.mxu0 %v350
    %1350 = vmatprep.subr.mxu0 %v347
    %1351 = vmatpush1.msra.mxu0 %v346
    %1352 = vmatprep.subr.mxu0 %v343
    %1353 = vmatpush1.msra.mxu0 %v342
    %1354 = vmatprep.subr.mxu0 %v339
    %1355 = vmatpush1.msra.mxu0 %v338
    %1356 = vmatprep.subr.mxu0 %v335
    %1357 = vmatpush1.msra.mxu0 %v334
    %1358 = vmatprep.subr.mxu0 %v331
    %1359 = vmatpush1.msra.mxu0 %v330
    %1360 = vmatprep.subr.mxu0 %v327
    %1361 = vmatpush1.msra.mxu0 %v326
    %1362 = vmatprep.subr.mxu0 %v323
    %1363 = vmatpush1.msra.mxu0 %v322
    %1364 = vmatprep.subr.mxu0 %v319
    %1365 = vmatpush1.msra.mxu0 %v318
    %1366 = vmatprep.subr.mxu0 %v315
    %1367 = vmatpush1.msra.mxu0 %v314
    %1368 = vmatprep.subr.mxu0 %v311
    %1369 = vmatpush1.msra.mxu0 %v310
    %1370 = vmatprep.subr.mxu0 %v307
    %1371 = vmatpush1.msra.mxu0 %v306
    %1372 = vmatprep.subr.mxu0 %v303
    %1373 = vmatpush1.msra.mxu0 %v302
    %1374 = vmatprep.subr.mxu0 0.0
    %1375 = vmatpush2.msra.mxu0 0.0
    %1376 = vmatprep.subr.mxu0 0.0
    %1377 = vmatpush2.msra.mxu0 0.0
    %1378 = vmatprep.subr.mxu0 0.0
    %1379 = vmatpush2.msra.mxu0 0.0
    %1380 = vmatprep.subr.mxu0 0.0
    %1381 = vmatpush2.msra.mxu0 0.0
    %1382 = vmatprep.subr.mxu0 0.0
    %1383 = vmatpush2.msra.mxu0 0.0
    %1384 = vmatprep.subr.mxu0 0.0
    %1385 = vmatpush2.msra.mxu0 0.0
    %1386 = vmatprep.subr.mxu0 0.0
    %1387 = vmatpush2.msra.mxu0 0.0
    %1388 = vmatprep.subr.mxu0 0.0
    %1389 = vmatpush2.msra.mxu0 0.0
    %1390 = vmatprep.subr.mxu0 0.0
    %1391 = vmatpush2.msra.mxu0 0.0
    %1392 = vmatprep.subr.mxu0 0.0
    %1393 = vmatpush2.msra.mxu0 0.0
    %1394 = vmatprep.subr.mxu0 0.0
    %1395 = vmatpush2.msra.mxu0 0.0
    %1396 = vmatprep.subr.mxu0 0.0
    %1397 = vmatpush2.msra.mxu0 0.0
    %1398 = vmatprep.subr.mxu0 0.0
    %1399 = vmatpush2.msra.mxu0 0.0
    %1400 = vmatprep.subr.mxu0 0.0
    %1401 = vmatpush2.msra.mxu0 0.0
    %1402 = vmatprep.subr.mxu0 0.0
    %1403 = vmatpush2.msra.mxu0 0.0
    %1404 = vmatprep.subr.mxu0 0.0
    %1405 = vmatpush2.msra.mxu0 0.0
    %1406 = vmatprep.mubr.f32.mxu0 0.0
    %1407 = vmatmul.mubr.f32.gmra.mxu0 %v1338
    %v1408 = vpop.f32.mrf.mxu0
    %v1409 = vadd.f32 0.0, %v1408
    %v1410 = vpop.f32.mrf.mxu0
    %v1411 = vadd.f32 0.0, %v1410
    %1412 = vdwg.mxu0
    %1413 = vmatprep.subr.mxu0 %v365
    %1414 = vmatpush1.msra.mxu0 %v364
    %1415 = vmatprep.subr.mxu0 %v361
    %1416 = vmatpush1.msra.mxu0 %v360
    %1417 = vmatprep.subr.mxu0 %v357
    %1418 = vmatpush1.msra.mxu0 %v356
    %1419 = vmatprep.subr.mxu0 %v353
    %1420 = vmatpush1.msra.mxu0 %v352
    %1421 = vmatprep.subr.mxu0 %v349
    %1422 = vmatpush1.msra.mxu0 %v348
    %1423 = vmatprep.subr.mxu0 %v345
    %1424 = vmatpush1.msra.mxu0 %v344
    %1425 = vmatprep.subr.mxu0 %v341
    %1426 = vmatpush1.msra.mxu0 %v340
    %1427 = vmatprep.subr.mxu0 %v337
    %1428 = vmatpush1.msra.mxu0 %v336
    %1429 = vmatprep.subr.mxu0 %v333
    %1430 = vmatpush1.msra.mxu0 %v332
    %1431 = vmatprep.subr.mxu0 %v329
    %1432 = vmatpush1.msra.mxu0 %v328
    %1433 = vmatprep.subr.mxu0 %v325
    %1434 = vmatpush1.msra.mxu0 %v324
    %1435 = vmatprep.subr.mxu0 %v321
    %1436 = vmatpush1.msra.mxu0 %v320
    %1437 = vmatprep.subr.mxu0 %v317
    %1438 = vmatpush1.msra.mxu0 %v316
    %1439 = vmatprep.subr.mxu0 %v313
    %1440 = vmatpush1.msra.mxu0 %v312
    %1441 = vmatprep.subr.mxu0 %v309
    %1442 = vmatpush1.msra.mxu0 %v308
    %1443 = vmatprep.subr.mxu0 %v305
    %1444 = vmatpush1.msra.mxu0 %v304
    %1445 = vmatprep.subr.mxu0 0.0
    %1446 = vmatpush2.msra.mxu0 0.0
    %1447 = vmatprep.subr.mxu0 0.0
    %1448 = vmatpush2.msra.mxu0 0.0
    %1449 = vmatprep.subr.mxu0 0.0
    %1450 = vmatpush2.msra.mxu0 0.0
    %1451 = vmatprep.subr.mxu0 0.0
    %1452 = vmatpush2.msra.mxu0 0.0
    %1453 = vmatprep.subr.mxu0 0.0
    %1454 = vmatpush2.msra.mxu0 0.0
    %1455 = vmatprep.subr.mxu0 0.0
    %1456 = vmatpush2.msra.mxu0 0.0
    %1457 = vmatprep.subr.mxu0 0.0
    %1458 = vmatpush2.msra.mxu0 0.0
    %1459 = vmatprep.subr.mxu0 0.0
    %1460 = vmatpush2.msra.mxu0 0.0
    %1461 = vmatprep.subr.mxu0 0.0
    %1462 = vmatpush2.msra.mxu0 0.0
    %1463 = vmatprep.subr.mxu0 0.0
    %1464 = vmatpush2.msra.mxu0 0.0
    %1465 = vmatprep.subr.mxu0 0.0
    %1466 = vmatpush2.msra.mxu0 0.0
    %1467 = vmatprep.subr.mxu0 0.0
    %1468 = vmatpush2.msra.mxu0 0.0
    %1469 = vmatprep.subr.mxu0 0.0
    %1470 = vmatpush2.msra.mxu0 0.0
    %1471 = vmatprep.subr.mxu0 0.0
    %1472 = vmatpush2.msra.mxu0 0.0
    %1473 = vmatprep.subr.mxu0 0.0
    %1474 = vmatpush2.msra.mxu0 0.0
    %1475 = vmatprep.subr.mxu0 0.0
    %1476 = vmatpush2.msra.mxu0 0.0
    %1477 = vmatprep.mubr.f32.mxu0 0.0
    %1478 = vmatmul.mubr.f32.gmra.mxu0 %v1338
    %v1479 = vpop.f32.mrf.mxu0
    %v1480 = vadd.f32 0.0, %v1479
    %v1481 = vpop.f32.mrf.mxu0
    %v1482 = vadd.f32 0.0, %v1481
    %1483 = vdwg.mxu0
    %v1488 = vcombine.low %v1409, %v1411
    %v1489 = vcombine.low %v1480, %v1482
    %v1491 = vunpack.c.l.s4 1966171168
    %v1492 = vunpack.c.0.s8 %v1491
    %v1493 = vlaneseq
    %v1494 = vshrl.u32 %v1493, 7
    %v1495 = vsub.s32 %v1492, %v1494
    %v1496 = vrot.slane %v1488, %v1495
    %v1498 = vunpack.c.l.s4 1966171168
    %v1499 = vunpack.c.0.s8 %v1498
    %v1500 = vlaneseq
    %v1501 = vshrl.u32 %v1500, 7
    %v1502 = vsub.s32 %v1499, %v1501
    %v1503 = vrot.slane %v1489, %v1502
    %v1504 = vcombine.low %v1496, %v1503
    %v1506 = vunpack.c.l.s4 1966171168
    %v1507 = vunpack.c.0.s8 %v1506
    %v1508 = vlaneseq
    %v1509 = vshrl.u32 %v1508, 7
    %v1510 = vsub.s32 %v1507, %v1509
    %v1511 = vrot.slane %v1504, %v1510
    %v1513 = vadd.f32 %v1341, %v1511
    %v1514 = vxor.u32 %v1513, 2147483648
    %v1515 = vmul.f32 %v1514, 1.442695
    %v1516 = vpow.pop %v1515
    %v1517 = vadd.f32 %v1516, 1.0
    %v1518 = vrcp.pop %v1517
    %v1519 = vmul.f32 1.0, %v1518
    %v1521 = vrot.slane %v1513, 3
    %v1523 = vtanh.pop %v1521
    %v1525 = vrot.slane %v1519, 1
    %v1527 = vmul.f32 %v1525, %v1334
    %v1528 = vmul.f32 %v1519, %v1523
    %v1529 = vadd.f32 %v1527, %v1528
    %v1530 = vtanh.pop %v1529
    %v1531 = vrot.slane %v1519, 2
    %v1533 = vmul.f32 %v1531, %v1530
    %1534 = vst [vmem:[#allocation3 + $0x5] sm:$0x1] %v1533
    %s1535 = scalar_lea.vmem [#allocation2], 6
    %v1536 = vld [vmem:[%s1535] ss:$8 sm:$0xf]
    %1537 = vmatprep.subr.mxu0 %v363
    %1538 = vmatpush1.msra.mxu0 %v362
    %1539 = vmatprep.subr.mxu0 %v359
    %1540 = vmatpush1.msra.mxu0 %v358
    %1541 = vmatprep.subr.mxu0 %v355
    %1542 = vmatpush1.msra.mxu0 %v354
    %1543 = vmatprep.subr.mxu0 %v351
    %1544 = vmatpush1.msra.mxu0 %v350
    %1545 = vmatprep.subr.mxu0 %v347
    %1546 = vmatpush1.msra.mxu0 %v346
    %1547 = vmatprep.subr.mxu0 %v343
    %1548 = vmatpush1.msra.mxu0 %v342
    %1549 = vmatprep.subr.mxu0 %v339
    %1550 = vmatpush1.msra.mxu0 %v338
    %1551 = vmatprep.subr.mxu0 %v335
    %1552 = vmatpush1.msra.mxu0 %v334
    %1553 = vmatprep.subr.mxu0 %v331
    %1554 = vmatpush1.msra.mxu0 %v330
    %1555 = vmatprep.subr.mxu0 %v327
    %1556 = vmatpush1.msra.mxu0 %v326
    %1557 = vmatprep.subr.mxu0 %v323
    %1558 = vmatpush1.msra.mxu0 %v322
    %1559 = vmatprep.subr.mxu0 %v319
    %1560 = vmatpush1.msra.mxu0 %v318
    %1561 = vmatprep.subr.mxu0 %v315
    %1562 = vmatpush1.msra.mxu0 %v314
    %1563 = vmatprep.subr.mxu0 %v311
    %1564 = vmatpush1.msra.mxu0 %v310
    %1565 = vmatprep.subr.mxu0 %v307
    %1566 = vmatpush1.msra.mxu0 %v306
    %1567 = vmatprep.subr.mxu0 %v303
    %1568 = vmatpush1.msra.mxu0 %v302
    %1569 = vmatprep.subr.mxu0 0.0
    %1570 = vmatpush2.msra.mxu0 0.0
    %1571 = vmatprep.subr.mxu0 0.0
    %1572 = vmatpush2.msra.mxu0 0.0
    %1573 = vmatprep.subr.mxu0 0.0
    %1574 = vmatpush2.msra.mxu0 0.0
    %1575 = vmatprep.subr.mxu0 0.0
    %1576 = vmatpush2.msra.mxu0 0.0
    %1577 = vmatprep.subr.mxu0 0.0
    %1578 = vmatpush2.msra.mxu0 0.0
    %1579 = vmatprep.subr.mxu0 0.0
    %1580 = vmatpush2.msra.mxu0 0.0
    %1581 = vmatprep.subr.mxu0 0.0
    %1582 = vmatpush2.msra.mxu0 0.0
    %1583 = vmatprep.subr.mxu0 0.0
    %1584 = vmatpush2.msra.mxu0 0.0
    %1585 = vmatprep.subr.mxu0 0.0
    %1586 = vmatpush2.msra.mxu0 0.0
    %1587 = vmatprep.subr.mxu0 0.0
    %1588 = vmatpush2.msra.mxu0 0.0
    %1589 = vmatprep.subr.mxu0 0.0
    %1590 = vmatpush2.msra.mxu0 0.0
    %1591 = vmatprep.subr.mxu0 0.0
    %1592 = vmatpush2.msra.mxu0 0.0
    %1593 = vmatprep.subr.mxu0 0.0
    %1594 = vmatpush2.msra.mxu0 0.0
    %1595 = vmatprep.subr.mxu0 0.0
    %1596 = vmatpush2.msra.mxu0 0.0
    %1597 = vmatprep.subr.mxu0 0.0
    %1598 = vmatpush2.msra.mxu0 0.0
    %1599 = vmatprep.subr.mxu0 0.0
    %1600 = vmatpush2.msra.mxu0 0.0
    %1601 = vmatprep.mubr.f32.mxu0 0.0
    %1602 = vmatmul.mubr.f32.gmra.mxu0 %v1533
    %v1603 = vpop.f32.mrf.mxu0
    %v1604 = vadd.f32 0.0, %v1603
    %v1605 = vpop.f32.mrf.mxu0
    %v1606 = vadd.f32 0.0, %v1605
    %1607 = vdwg.mxu0
    %1608 = vmatprep.subr.mxu0 %v365
    %1609 = vmatpush1.msra.mxu0 %v364
    %1610 = vmatprep.subr.mxu0 %v361
    %1611 = vmatpush1.msra.mxu0 %v360
    %1612 = vmatprep.subr.mxu0 %v357
    %1613 = vmatpush1.msra.mxu0 %v356
    %1614 = vmatprep.subr.mxu0 %v353
    %1615 = vmatpush1.msra.mxu0 %v352
    %1616 = vmatprep.subr.mxu0 %v349
    %1617 = vmatpush1.msra.mxu0 %v348
    %1618 = vmatprep.subr.mxu0 %v345
    %1619 = vmatpush1.msra.mxu0 %v344
    %1620 = vmatprep.subr.mxu0 %v341
    %1621 = vmatpush1.msra.mxu0 %v340
    %1622 = vmatprep.subr.mxu0 %v337
    %1623 = vmatpush1.msra.mxu0 %v336
    %1624 = vmatprep.subr.mxu0 %v333
    %1625 = vmatpush1.msra.mxu0 %v332
    %1626 = vmatprep.subr.mxu0 %v329
    %1627 = vmatpush1.msra.mxu0 %v328
    %1628 = vmatprep.subr.mxu0 %v325
    %1629 = vmatpush1.msra.mxu0 %v324
    %1630 = vmatprep.subr.mxu0 %v321
    %1631 = vmatpush1.msra.mxu0 %v320
    %1632 = vmatprep.subr.mxu0 %v317
    %1633 = vmatpush1.msra.mxu0 %v316
    %1634 = vmatprep.subr.mxu0 %v313
    %1635 = vmatpush1.msra.mxu0 %v312
    %1636 = vmatprep.subr.mxu0 %v309
    %1637 = vmatpush1.msra.mxu0 %v308
    %1638 = vmatprep.subr.mxu0 %v305
    %1639 = vmatpush1.msra.mxu0 %v304
    %1640 = vmatprep.subr.mxu0 0.0
    %1641 = vmatpush2.msra.mxu0 0.0
    %1642 = vmatprep.subr.mxu0 0.0
    %1643 = vmatpush2.msra.mxu0 0.0
    %1644 = vmatprep.subr.mxu0 0.0
    %1645 = vmatpush2.msra.mxu0 0.0
    %1646 = vmatprep.subr.mxu0 0.0
    %1647 = vmatpush2.msra.mxu0 0.0
    %1648 = vmatprep.subr.mxu0 0.0
    %1649 = vmatpush2.msra.mxu0 0.0
    %1650 = vmatprep.subr.mxu0 0.0
    %1651 = vmatpush2.msra.mxu0 0.0
    %1652 = vmatprep.subr.mxu0 0.0
    %1653 = vmatpush2.msra.mxu0 0.0
    %1654 = vmatprep.subr.mxu0 0.0
    %1655 = vmatpush2.msra.mxu0 0.0
    %1656 = vmatprep.subr.mxu0 0.0
    %1657 = vmatpush2.msra.mxu0 0.0
    %1658 = vmatprep.subr.mxu0 0.0
    %1659 = vmatpush2.msra.mxu0 0.0
    %1660 = vmatprep.subr.mxu0 0.0
    %1661 = vmatpush2.msra.mxu0 0.0
    %1662 = vmatprep.subr.mxu0 0.0
    %1663 = vmatpush2.msra.mxu0 0.0
    %1664 = vmatprep.subr.mxu0 0.0
    %1665 = vmatpush2.msra.mxu0 0.0
    %1666 = vmatprep.subr.mxu0 0.0
    %1667 = vmatpush2.msra.mxu0 0.0
    %1668 = vmatprep.subr.mxu0 0.0
    %1669 = vmatpush2.msra.mxu0 0.0
    %1670 = vmatprep.subr.mxu0 0.0
    %1671 = vmatpush2.msra.mxu0 0.0
    %1672 = vmatprep.mubr.f32.mxu0 0.0
    %1673 = vmatmul.mubr.f32.gmra.mxu0 %v1533
    %v1674 = vpop.f32.mrf.mxu0
    %v1675 = vadd.f32 0.0, %v1674
    %v1676 = vpop.f32.mrf.mxu0
    %v1677 = vadd.f32 0.0, %v1676
    %1678 = vdwg.mxu0
    %v1683 = vcombine.low %v1604, %v1606
    %v1684 = vcombine.low %v1675, %v1677
    %v1686 = vunpack.c.l.s4 1966171168
    %v1687 = vunpack.c.0.s8 %v1686
    %v1688 = vlaneseq
    %v1689 = vshrl.u32 %v1688, 7
    %v1690 = vsub.s32 %v1687, %v1689
    %v1691 = vrot.slane %v1683, %v1690
    %v1693 = vunpack.c.l.s4 1966171168
    %v1694 = vunpack.c.0.s8 %v1693
    %v1695 = vlaneseq
    %v1696 = vshrl.u32 %v1695, 7
    %v1697 = vsub.s32 %v1694, %v1696
    %v1698 = vrot.slane %v1684, %v1697
    %v1699 = vcombine.low %v1691, %v1698
    %v1701 = vunpack.c.l.s4 1966171168
    %v1702 = vunpack.c.0.s8 %v1701
    %v1703 = vlaneseq
    %v1704 = vshrl.u32 %v1703, 7
    %v1705 = vsub.s32 %v1702, %v1704
    %v1706 = vrot.slane %v1699, %v1705
    %v1708 = vadd.f32 %v1536, %v1706
    %v1709 = vxor.u32 %v1708, 2147483648
    %v1710 = vmul.f32 %v1709, 1.442695
    %v1711 = vpow.pop %v1710
    %v1712 = vadd.f32 %v1711, 1.0
    %v1713 = vrcp.pop %v1712
    %v1714 = vmul.f32 1.0, %v1713
    %v1716 = vrot.slane %v1708, 3
    %v1718 = vtanh.pop %v1716
    %v1720 = vrot.slane %v1714, 1
    %v1722 = vmul.f32 %v1720, %v1529
    %v1723 = vmul.f32 %v1714, %v1718
    %v1724 = vadd.f32 %v1722, %v1723
    %v1725 = vtanh.pop %v1724
    %v1726 = vrot.slane %v1714, 2
    %v1728 = vmul.f32 %v1726, %v1725
    %1729 = vst [vmem:[#allocation3 + $0x6] sm:$0x1] %v1728
    %s1730 = scalar_lea.vmem [#allocation2], 7
    %v1731 = vld [vmem:[%s1730] ss:$8 sm:$0xf]
    %1732 = vmatprep.subr.mxu0 %v363
    %1733 = vmatpush1.msra.mxu0 %v362
    %1734 = vmatprep.subr.mxu0 %v359
    %1735 = vmatpush1.msra.mxu0 %v358
    %1736 = vmatprep.subr.mxu0 %v355
    %1737 = vmatpush1.msra.mxu0 %v354
    %1738 = vmatprep.subr.mxu0 %v351
    %1739 = vmatpush1.msra.mxu0 %v350
    %1740 = vmatprep.subr.mxu0 %v347
    %1741 = vmatpush1.msra.mxu0 %v346
    %1742 = vmatprep.subr.mxu0 %v343
    %1743 = vmatpush1.msra.mxu0 %v342
    %1744 = vmatprep.subr.mxu0 %v339
    %1745 = vmatpush1.msra.mxu0 %v338
    %1746 = vmatprep.subr.mxu0 %v335
    %1747 = vmatpush1.msra.mxu0 %v334
    %1748 = vmatprep.subr.mxu0 %v331
    %1749 = vmatpush1.msra.mxu0 %v330
    %1750 = vmatprep.subr.mxu0 %v327
    %1751 = vmatpush1.msra.mxu0 %v326
    %1752 = vmatprep.subr.mxu0 %v323
    %1753 = vmatpush1.msra.mxu0 %v322
    %1754 = vmatprep.subr.mxu0 %v319
    %1755 = vmatpush1.msra.mxu0 %v318
    %1756 = vmatprep.subr.mxu0 %v315
    %1757 = vmatpush1.msra.mxu0 %v314
    %1758 = vmatprep.subr.mxu0 %v311
    %1759 = vmatpush1.msra.mxu0 %v310
    %1760 = vmatprep.subr.mxu0 %v307
    %1761 = vmatpush1.msra.mxu0 %v306
    %1762 = vmatprep.subr.mxu0 %v303
    %1763 = vmatpush1.msra.mxu0 %v302
    %1764 = vmatprep.subr.mxu0 0.0
    %1765 = vmatpush2.msra.mxu0 0.0
    %1766 = vmatprep.subr.mxu0 0.0
    %1767 = vmatpush2.msra.mxu0 0.0
    %1768 = vmatprep.subr.mxu0 0.0
    %1769 = vmatpush2.msra.mxu0 0.0
    %1770 = vmatprep.subr.mxu0 0.0
    %1771 = vmatpush2.msra.mxu0 0.0
    %1772 = vmatprep.subr.mxu0 0.0
    %1773 = vmatpush2.msra.mxu0 0.0
    %1774 = vmatprep.subr.mxu0 0.0
    %1775 = vmatpush2.msra.mxu0 0.0
    %1776 = vmatprep.subr.mxu0 0.0
    %1777 = vmatpush2.msra.mxu0 0.0
    %1778 = vmatprep.subr.mxu0 0.0
    %1779 = vmatpush2.msra.mxu0 0.0
    %1780 = vmatprep.subr.mxu0 0.0
    %1781 = vmatpush2.msra.mxu0 0.0
    %1782 = vmatprep.subr.mxu0 0.0
    %1783 = vmatpush2.msra.mxu0 0.0
    %1784 = vmatprep.subr.mxu0 0.0
    %1785 = vmatpush2.msra.mxu0 0.0
    %1786 = vmatprep.subr.mxu0 0.0
    %1787 = vmatpush2.msra.mxu0 0.0
    %1788 = vmatprep.subr.mxu0 0.0
    %1789 = vmatpush2.msra.mxu0 0.0
    %1790 = vmatprep.subr.mxu0 0.0
    %1791 = vmatpush2.msra.mxu0 0.0
    %1792 = vmatprep.subr.mxu0 0.0
    %1793 = vmatpush2.msra.mxu0 0.0
    %1794 = vmatprep.subr.mxu0 0.0
    %1795 = vmatpush2.msra.mxu0 0.0
    %1796 = vmatprep.mubr.f32.mxu0 0.0
    %1797 = vmatmul.mubr.f32.gmra.mxu0 %v1728
    %v1798 = vpop.f32.mrf.mxu0
    %v1799 = vadd.f32 0.0, %v1798
    %v1800 = vpop.f32.mrf.mxu0
    %v1801 = vadd.f32 0.0, %v1800
    %1802 = vdwg.mxu0
    %1803 = vmatprep.subr.mxu0 %v365
    %1804 = vmatpush1.msra.mxu0 %v364
    %1805 = vmatprep.subr.mxu0 %v361
    %1806 = vmatpush1.msra.mxu0 %v360
    %1807 = vmatprep.subr.mxu0 %v357
    %1808 = vmatpush1.msra.mxu0 %v356
    %1809 = vmatprep.subr.mxu0 %v353
    %1810 = vmatpush1.msra.mxu0 %v352
    %1811 = vmatprep.subr.mxu0 %v349
    %1812 = vmatpush1.msra.mxu0 %v348
    %1813 = vmatprep.subr.mxu0 %v345
    %1814 = vmatpush1.msra.mxu0 %v344
    %1815 = vmatprep.subr.mxu0 %v341
    %1816 = vmatpush1.msra.mxu0 %v340
    %1817 = vmatprep.subr.mxu0 %v337
    %1818 = vmatpush1.msra.mxu0 %v336
    %1819 = vmatprep.subr.mxu0 %v333
    %1820 = vmatpush1.msra.mxu0 %v332
    %1821 = vmatprep.subr.mxu0 %v329
    %1822 = vmatpush1.msra.mxu0 %v328
    %1823 = vmatprep.subr.mxu0 %v325
    %1824 = vmatpush1.msra.mxu0 %v324
    %1825 = vmatprep.subr.mxu0 %v321
    %1826 = vmatpush1.msra.mxu0 %v320
    %1827 = vmatprep.subr.mxu0 %v317
    %1828 = vmatpush1.msra.mxu0 %v316
    %1829 = vmatprep.subr.mxu0 %v313
    %1830 = vmatpush1.msra.mxu0 %v312
    %1831 = vmatprep.subr.mxu0 %v309
    %1832 = vmatpush1.msra.mxu0 %v308
    %1833 = vmatprep.subr.mxu0 %v305
    %1834 = vmatpush1.msra.mxu0 %v304
    %1835 = vmatprep.subr.mxu0 0.0
    %1836 = vmatpush2.msra.mxu0 0.0
    %1837 = vmatprep.subr.mxu0 0.0
    %1838 = vmatpush2.msra.mxu0 0.0
    %1839 = vmatprep.subr.mxu0 0.0
    %1840 = vmatpush2.msra.mxu0 0.0
    %1841 = vmatprep.subr.mxu0 0.0
    %1842 = vmatpush2.msra.mxu0 0.0
    %1843 = vmatprep.subr.mxu0 0.0
    %1844 = vmatpush2.msra.mxu0 0.0
    %1845 = vmatprep.subr.mxu0 0.0
    %1846 = vmatpush2.msra.mxu0 0.0
    %1847 = vmatprep.subr.mxu0 0.0
    %1848 = vmatpush2.msra.mxu0 0.0
    %1849 = vmatprep.subr.mxu0 0.0
    %1850 = vmatpush2.msra.mxu0 0.0
    %1851 = vmatprep.subr.mxu0 0.0
    %1852 = vmatpush2.msra.mxu0 0.0
    %1853 = vmatprep.subr.mxu0 0.0
    %1854 = vmatpush2.msra.mxu0 0.0
    %1855 = vmatprep.subr.mxu0 0.0
    %1856 = vmatpush2.msra.mxu0 0.0
    %1857 = vmatprep.subr.mxu0 0.0
    %1858 = vmatpush2.msra.mxu0 0.0
    %1859 = vmatprep.subr.mxu0 0.0
    %1860 = vmatpush2.msra.mxu0 0.0
    %1861 = vmatprep.subr.mxu0 0.0
    %1862 = vmatpush2.msra.mxu0 0.0
    %1863 = vmatprep.subr.mxu0 0.0
    %1864 = vmatpush2.msra.mxu0 0.0
    %1865 = vmatprep.subr.mxu0 0.0
    %1866 = vmatpush2.msra.mxu0 0.0
    %1867 = vmatprep.mubr.f32.mxu0 0.0
    %1868 = vmatmul.mubr.f32.gmra.mxu0 %v1728
    %v1869 = vpop.f32.mrf.mxu0
    %v1870 = vadd.f32 0.0, %v1869
    %v1871 = vpop.f32.mrf.mxu0
    %v1872 = vadd.f32 0.0, %v1871
    %1873 = vdwg.mxu0
    %v1878 = vcombine.low %v1799, %v1801
    %v1879 = vcombine.low %v1870, %v1872
    %v1881 = vunpack.c.l.s4 1966171168
    %v1882 = vunpack.c.0.s8 %v1881
    %v1883 = vlaneseq
    %v1884 = vshrl.u32 %v1883, 7
    %v1885 = vsub.s32 %v1882, %v1884
    %v1886 = vrot.slane %v1878, %v1885
    %v1888 = vunpack.c.l.s4 1966171168
    %v1889 = vunpack.c.0.s8 %v1888
    %v1890 = vlaneseq
    %v1891 = vshrl.u32 %v1890, 7
    %v1892 = vsub.s32 %v1889, %v1891
    %v1893 = vrot.slane %v1879, %v1892
    %v1894 = vcombine.low %v1886, %v1893
    %v1896 = vunpack.c.l.s4 1966171168
    %v1897 = vunpack.c.0.s8 %v1896
    %v1898 = vlaneseq
    %v1899 = vshrl.u32 %v1898, 7
    %v1900 = vsub.s32 %v1897, %v1899
    %v1901 = vrot.slane %v1894, %v1900
    %v1903 = vadd.f32 %v1731, %v1901
    %v1904 = vxor.u32 %v1903, 2147483648
    %v1905 = vmul.f32 %v1904, 1.442695
    %v1906 = vpow.pop %v1905
    %v1907 = vadd.f32 %v1906, 1.0
    %v1908 = vrcp.pop %v1907
    %v1909 = vmul.f32 1.0, %v1908
    %v1911 = vrot.slane %v1903, 3
    %v1913 = vtanh.pop %v1911
    %v1915 = vrot.slane %v1909, 1
    %v1917 = vmul.f32 %v1915, %v1724
    %v1918 = vmul.f32 %v1909, %v1913
    %v1919 = vadd.f32 %v1917, %v1918
    %v1920 = vtanh.pop %v1919
    %v1921 = vrot.slane %v1909, 2
    %v1923 = vmul.f32 %v1921, %v1920
    %1924 = vst [vmem:[#allocation3 + $0x7] sm:$0x1] %v1923
    %s1925 = scalar_lea.vmem [#allocation2], 32
    %v1926 = vld [vmem:[%s1925] ss:$8 sm:$0xf]
    %1927 = vmatprep.subr.mxu0 %v363
    %1928 = vmatpush1.msra.mxu0 %v362
    %1929 = vmatprep.subr.mxu0 %v359
    %1930 = vmatpush1.msra.mxu0 %v358
    %1931 = vmatprep.subr.mxu0 %v355
    %1932 = vmatpush1.msra.mxu0 %v354
    %1933 = vmatprep.subr.mxu0 %v351
    %1934 = vmatpush1.msra.mxu0 %v350
    %1935 = vmatprep.subr.mxu0 %v347
    %1936 = vmatpush1.msra.mxu0 %v346
    %1937 = vmatprep.subr.mxu0 %v343
    %1938 = vmatpush1.msra.mxu0 %v342
    %1939 = vmatprep.subr.mxu0 %v339
    %1940 = vmatpush1.msra.mxu0 %v338
    %1941 = vmatprep.subr.mxu0 %v335
    %1942 = vmatpush1.msra.mxu0 %v334
    %1943 = vmatprep.subr.mxu0 %v331
    %1944 = vmatpush1.msra.mxu0 %v330
    %1945 = vmatprep.subr.mxu0 %v327
    %1946 = vmatpush1.msra.mxu0 %v326
    %1947 = vmatprep.subr.mxu0 %v323
    %1948 = vmatpush1.msra.mxu0 %v322
    %1949 = vmatprep.subr.mxu0 %v319
    %1950 = vmatpush1.msra.mxu0 %v318
    %1951 = vmatprep.subr.mxu0 %v315
    %1952 = vmatpush1.msra.mxu0 %v314
    %1953 = vmatprep.subr.mxu0 %v311
    %1954 = vmatpush1.msra.mxu0 %v310
    %1955 = vmatprep.subr.mxu0 %v307
    %1956 = vmatpush1.msra.mxu0 %v306
    %1957 = vmatprep.subr.mxu0 %v303
    %1958 = vmatpush1.msra.mxu0 %v302
    %1959 = vmatprep.subr.mxu0 0.0
    %1960 = vmatpush2.msra.mxu0 0.0
    %1961 = vmatprep.subr.mxu0 0.0
    %1962 = vmatpush2.msra.mxu0 0.0
    %1963 = vmatprep.subr.mxu0 0.0
    %1964 = vmatpush2.msra.mxu0 0.0
    %1965 = vmatprep.subr.mxu0 0.0
    %1966 = vmatpush2.msra.mxu0 0.0
    %1967 = vmatprep.subr.mxu0 0.0
    %1968 = vmatpush2.msra.mxu0 0.0
    %1969 = vmatprep.subr.mxu0 0.0
    %1970 = vmatpush2.msra.mxu0 0.0
    %1971 = vmatprep.subr.mxu0 0.0
    %1972 = vmatpush2.msra.mxu0 0.0
    %1973 = vmatprep.subr.mxu0 0.0
    %1974 = vmatpush2.msra.mxu0 0.0
    %1975 = vmatprep.subr.mxu0 0.0
    %1976 = vmatpush2.msra.mxu0 0.0
    %1977 = vmatprep.subr.mxu0 0.0
    %1978 = vmatpush2.msra.mxu0 0.0
    %1979 = vmatprep.subr.mxu0 0.0
    %1980 = vmatpush2.msra.mxu0 0.0
    %1981 = vmatprep.subr.mxu0 0.0
    %1982 = vmatpush2.msra.mxu0 0.0
    %1983 = vmatprep.subr.mxu0 0.0
    %1984 = vmatpush2.msra.mxu0 0.0
    %1985 = vmatprep.subr.mxu0 0.0
    %1986 = vmatpush2.msra.mxu0 0.0
    %1987 = vmatprep.subr.mxu0 0.0
    %1988 = vmatpush2.msra.mxu0 0.0
    %1989 = vmatprep.subr.mxu0 0.0
    %1990 = vmatpush2.msra.mxu0 0.0
    %1991 = vmatprep.mubr.f32.mxu0 0.0
    %1992 = vmatmul.mubr.f32.gmra.mxu0 %v1923
    %v1993 = vpop.f32.mrf.mxu0
    %v1994 = vadd.f32 0.0, %v1993
    %v1995 = vpop.f32.mrf.mxu0
    %v1996 = vadd.f32 0.0, %v1995
    %1997 = vdwg.mxu0
    %1998 = vmatprep.subr.mxu0 %v365
    %1999 = vmatpush1.msra.mxu0 %v364
    %2000 = vmatprep.subr.mxu0 %v361
    %2001 = vmatpush1.msra.mxu0 %v360
    %2002 = vmatprep.subr.mxu0 %v357
    %2003 = vmatpush1.msra.mxu0 %v356
    %2004 = vmatprep.subr.mxu0 %v353
    %2005 = vmatpush1.msra.mxu0 %v352
    %2006 = vmatprep.subr.mxu0 %v349
    %2007 = vmatpush1.msra.mxu0 %v348
    %2008 = vmatprep.subr.mxu0 %v345
    %2009 = vmatpush1.msra.mxu0 %v344
    %2010 = vmatprep.subr.mxu0 %v341
    %2011 = vmatpush1.msra.mxu0 %v340
    %2012 = vmatprep.subr.mxu0 %v337
    %2013 = vmatpush1.msra.mxu0 %v336
    %2014 = vmatprep.subr.mxu0 %v333
    %2015 = vmatpush1.msra.mxu0 %v332
    %2016 = vmatprep.subr.mxu0 %v329
    %2017 = vmatpush1.msra.mxu0 %v328
    %2018 = vmatprep.subr.mxu0 %v325
    %2019 = vmatpush1.msra.mxu0 %v324
    %2020 = vmatprep.subr.mxu0 %v321
    %2021 = vmatpush1.msra.mxu0 %v320
    %2022 = vmatprep.subr.mxu0 %v317
    %2023 = vmatpush1.msra.mxu0 %v316
    %2024 = vmatprep.subr.mxu0 %v313
    %2025 = vmatpush1.msra.mxu0 %v312
    %2026 = vmatprep.subr.mxu0 %v309
    %2027 = vmatpush1.msra.mxu0 %v308
    %2028 = vmatprep.subr.mxu0 %v305
    %2029 = vmatpush1.msra.mxu0 %v304
    %2030 = vmatprep.subr.mxu0 0.0
    %2031 = vmatpush2.msra.mxu0 0.0
    %2032 = vmatprep.subr.mxu0 0.0
    %2033 = vmatpush2.msra.mxu0 0.0
    %2034 = vmatprep.subr.mxu0 0.0
    %2035 = vmatpush2.msra.mxu0 0.0
    %2036 = vmatprep.subr.mxu0 0.0
    %2037 = vmatpush2.msra.mxu0 0.0
    %2038 = vmatprep.subr.mxu0 0.0
    %2039 = vmatpush2.msra.mxu0 0.0
    %2040 = vmatprep.subr.mxu0 0.0
    %2041 = vmatpush2.msra.mxu0 0.0
    %2042 = vmatprep.subr.mxu0 0.0
    %2043 = vmatpush2.msra.mxu0 0.0
    %2044 = vmatprep.subr.mxu0 0.0
    %2045 = vmatpush2.msra.mxu0 0.0
    %2046 = vmatprep.subr.mxu0 0.0
    %2047 = vmatpush2.msra.mxu0 0.0
    %2048 = vmatprep.subr.mxu0 0.0
    %2049 = vmatpush2.msra.mxu0 0.0
    %2050 = vmatprep.subr.mxu0 0.0
    %2051 = vmatpush2.msra.mxu0 0.0
    %2052 = vmatprep.subr.mxu0 0.0
    %2053 = vmatpush2.msra.mxu0 0.0
    %2054 = vmatprep.subr.mxu0 0.0
    %2055 = vmatpush2.msra.mxu0 0.0
    %2056 = vmatprep.subr.mxu0 0.0
    %2057 = vmatpush2.msra.mxu0 0.0
    %2058 = vmatprep.subr.mxu0 0.0
    %2059 = vmatpush2.msra.mxu0 0.0
    %2060 = vmatprep.subr.mxu0 0.0
    %2061 = vmatpush2.msra.mxu0 0.0
    %2062 = vmatprep.mubr.f32.mxu0 0.0
    %2063 = vmatmul.mubr.f32.gmra.mxu0 %v1923
    %v2064 = vpop.f32.mrf.mxu0
    %v2065 = vadd.f32 0.0, %v2064
    %v2066 = vpop.f32.mrf.mxu0
    %v2067 = vadd.f32 0.0, %v2066
    %2068 = vdwg.mxu0
    %v2073 = vcombine.low %v1994, %v1996
    %v2074 = vcombine.low %v2065, %v2067
    %v2076 = vunpack.c.l.s4 1966171168
    %v2077 = vunpack.c.0.s8 %v2076
    %v2078 = vlaneseq
    %v2079 = vshrl.u32 %v2078, 7
    %v2080 = vsub.s32 %v2077, %v2079
    %v2081 = vrot.slane %v2073, %v2080
    %v2083 = vunpack.c.l.s4 1966171168
    %v2084 = vunpack.c.0.s8 %v2083
    %v2085 = vlaneseq
    %v2086 = vshrl.u32 %v2085, 7
    %v2087 = vsub.s32 %v2084, %v2086
    %v2088 = vrot.slane %v2074, %v2087
    %v2089 = vcombine.low %v2081, %v2088
    %v2091 = vunpack.c.l.s4 1966171168
    %v2092 = vunpack.c.0.s8 %v2091
    %v2093 = vlaneseq
    %v2094 = vshrl.u32 %v2093, 7
    %v2095 = vsub.s32 %v2092, %v2094
    %v2096 = vrot.slane %v2089, %v2095
    %v2098 = vadd.f32 %v1926, %v2096
    %v2099 = vxor.u32 %v2098, 2147483648
    %v2100 = vmul.f32 %v2099, 1.442695
    %v2101 = vpow.pop %v2100
    %v2102 = vadd.f32 %v2101, 1.0
    %v2103 = vrcp.pop %v2102
    %v2104 = vmul.f32 1.0, %v2103
    %v2106 = vrot.slane %v2098, 3
    %v2108 = vtanh.pop %v2106
    %v2110 = vrot.slane %v2104, 1
    %v2112 = vmul.f32 %v2110, %v1919
    %v2113 = vmul.f32 %v2104, %v2108
    %v2114 = vadd.f32 %v2112, %v2113
    %v2115 = vtanh.pop %v2114
    %v2116 = vrot.slane %v2104, 2
    %v2118 = vmul.f32 %v2116, %v2115
    %2119 = vst [vmem:[#allocation3 + $0x8] sm:$0x1] %v2118
    %s2120 = scalar_lea.vmem [#allocation2], 33
    %v2121 = vld [vmem:[%s2120] ss:$8 sm:$0xf]
    %2122 = vmatprep.subr.mxu0 %v363
    %2123 = vmatpush1.msra.mxu0 %v362
    %2124 = vmatprep.subr.mxu0 %v359
    %2125 = vmatpush1.msra.mxu0 %v358
    %2126 = vmatprep.subr.mxu0 %v355
    %2127 = vmatpush1.msra.mxu0 %v354
    %2128 = vmatprep.subr.mxu0 %v351
    %2129 = vmatpush1.msra.mxu0 %v350
    %2130 = vmatprep.subr.mxu0 %v347
    %2131 = vmatpush1.msra.mxu0 %v346
    %2132 = vmatprep.subr.mxu0 %v343
    %2133 = vmatpush1.msra.mxu0 %v342
    %2134 = vmatprep.subr.mxu0 %v339
    %2135 = vmatpush1.msra.mxu0 %v338
    %2136 = vmatprep.subr.mxu0 %v335
    %2137 = vmatpush1.msra.mxu0 %v334
    %2138 = vmatprep.subr.mxu0 %v331
    %2139 = vmatpush1.msra.mxu0 %v330
    %2140 = vmatprep.subr.mxu0 %v327
    %2141 = vmatpush1.msra.mxu0 %v326
    %2142 = vmatprep.subr.mxu0 %v323
    %2143 = vmatpush1.msra.mxu0 %v322
    %2144 = vmatprep.subr.mxu0 %v319
    %2145 = vmatpush1.msra.mxu0 %v318
    %2146 = vmatprep.subr.mxu0 %v315
    %2147 = vmatpush1.msra.mxu0 %v314
    %2148 = vmatprep.subr.mxu0 %v311
    %2149 = vmatpush1.msra.mxu0 %v310
    %2150 = vmatprep.subr.mxu0 %v307
    %2151 = vmatpush1.msra.mxu0 %v306
    %2152 = vmatprep.subr.mxu0 %v303
    %2153 = vmatpush1.msra.mxu0 %v302
    %2154 = vmatprep.subr.mxu0 0.0
    %2155 = vmatpush2.msra.mxu0 0.0
    %2156 = vmatprep.subr.mxu0 0.0
    %2157 = vmatpush2.msra.mxu0 0.0
    %2158 = vmatprep.subr.mxu0 0.0
    %2159 = vmatpush2.msra.mxu0 0.0
    %2160 = vmatprep.subr.mxu0 0.0
    %2161 = vmatpush2.msra.mxu0 0.0
    %2162 = vmatprep.subr.mxu0 0.0
    %2163 = vmatpush2.msra.mxu0 0.0
    %2164 = vmatprep.subr.mxu0 0.0
    %2165 = vmatpush2.msra.mxu0 0.0
    %2166 = vmatprep.subr.mxu0 0.0
    %2167 = vmatpush2.msra.mxu0 0.0
    %2168 = vmatprep.subr.mxu0 0.0
    %2169 = vmatpush2.msra.mxu0 0.0
    %2170 = vmatprep.subr.mxu0 0.0
    %2171 = vmatpush2.msra.mxu0 0.0
    %2172 = vmatprep.subr.mxu0 0.0
    %2173 = vmatpush2.msra.mxu0 0.0
    %2174 = vmatprep.subr.mxu0 0.0
    %2175 = vmatpush2.msra.mxu0 0.0
    %2176 = vmatprep.subr.mxu0 0.0
    %2177 = vmatpush2.msra.mxu0 0.0
    %2178 = vmatprep.subr.mxu0 0.0
    %2179 = vmatpush2.msra.mxu0 0.0
    %2180 = vmatprep.subr.mxu0 0.0
    %2181 = vmatpush2.msra.mxu0 0.0
    %2182 = vmatprep.subr.mxu0 0.0
    %2183 = vmatpush2.msra.mxu0 0.0
    %2184 = vmatprep.subr.mxu0 0.0
    %2185 = vmatpush2.msra.mxu0 0.0
    %2186 = vmatprep.mubr.f32.mxu0 0.0
    %2187 = vmatmul.mubr.f32.gmra.mxu0 %v2118
    %v2188 = vpop.f32.mrf.mxu0
    %v2189 = vadd.f32 0.0, %v2188
    %v2190 = vpop.f32.mrf.mxu0
    %v2191 = vadd.f32 0.0, %v2190
    %2192 = vdwg.mxu0
    %2193 = vmatprep.subr.mxu0 %v365
    %2194 = vmatpush1.msra.mxu0 %v364
    %2195 = vmatprep.subr.mxu0 %v361
    %2196 = vmatpush1.msra.mxu0 %v360
    %2197 = vmatprep.subr.mxu0 %v357
    %2198 = vmatpush1.msra.mxu0 %v356
    %2199 = vmatprep.subr.mxu0 %v353
    %2200 = vmatpush1.msra.mxu0 %v352
    %2201 = vmatprep.subr.mxu0 %v349
    %2202 = vmatpush1.msra.mxu0 %v348
    %2203 = vmatprep.subr.mxu0 %v345
    %2204 = vmatpush1.msra.mxu0 %v344
    %2205 = vmatprep.subr.mxu0 %v341
    %2206 = vmatpush1.msra.mxu0 %v340
    %2207 = vmatprep.subr.mxu0 %v337
    %2208 = vmatpush1.msra.mxu0 %v336
    %2209 = vmatprep.subr.mxu0 %v333
    %2210 = vmatpush1.msra.mxu0 %v332
    %2211 = vmatprep.subr.mxu0 %v329
    %2212 = vmatpush1.msra.mxu0 %v328
    %2213 = vmatprep.subr.mxu0 %v325
    %2214 = vmatpush1.msra.mxu0 %v324
    %2215 = vmatprep.subr.mxu0 %v321
    %2216 = vmatpush1.msra.mxu0 %v320
    %2217 = vmatprep.subr.mxu0 %v317
    %2218 = vmatpush1.msra.mxu0 %v316
    %2219 = vmatprep.subr.mxu0 %v313
    %2220 = vmatpush1.msra.mxu0 %v312
    %2221 = vmatprep.subr.mxu0 %v309
    %2222 = vmatpush1.msra.mxu0 %v308
    %2223 = vmatprep.subr.mxu0 %v305
    %2224 = vmatpush1.msra.mxu0 %v304
    %2225 = vmatprep.subr.mxu0 0.0
    %2226 = vmatpush2.msra.mxu0 0.0
    %2227 = vmatprep.subr.mxu0 0.0
    %2228 = vmatpush2.msra.mxu0 0.0
    %2229 = vmatprep.subr.mxu0 0.0
    %2230 = vmatpush2.msra.mxu0 0.0
    %2231 = vmatprep.subr.mxu0 0.0
    %2232 = vmatpush2.msra.mxu0 0.0
    %2233 = vmatprep.subr.mxu0 0.0
    %2234 = vmatpush2.msra.mxu0 0.0
    %2235 = vmatprep.subr.mxu0 0.0
    %2236 = vmatpush2.msra.mxu0 0.0
    %2237 = vmatprep.subr.mxu0 0.0
    %2238 = vmatpush2.msra.mxu0 0.0
    %2239 = vmatprep.subr.mxu0 0.0
    %2240 = vmatpush2.msra.mxu0 0.0
    %2241 = vmatprep.subr.mxu0 0.0
    %2242 = vmatpush2.msra.mxu0 0.0
    %2243 = vmatprep.subr.mxu0 0.0
    %2244 = vmatpush2.msra.mxu0 0.0
    %2245 = vmatprep.subr.mxu0 0.0
    %2246 = vmatpush2.msra.mxu0 0.0
    %2247 = vmatprep.subr.mxu0 0.0
    %2248 = vmatpush2.msra.mxu0 0.0
    %2249 = vmatprep.subr.mxu0 0.0
    %2250 = vmatpush2.msra.mxu0 0.0
    %2251 = vmatprep.subr.mxu0 0.0
    %2252 = vmatpush2.msra.mxu0 0.0
    %2253 = vmatprep.subr.mxu0 0.0
    %2254 = vmatpush2.msra.mxu0 0.0
    %2255 = vmatprep.subr.mxu0 0.0
    %2256 = vmatpush2.msra.mxu0 0.0
    %2257 = vmatprep.mubr.f32.mxu0 0.0
    %2258 = vmatmul.mubr.f32.gmra.mxu0 %v2118
    %v2259 = vpop.f32.mrf.mxu0
    %v2260 = vadd.f32 0.0, %v2259
    %v2261 = vpop.f32.mrf.mxu0
    %v2262 = vadd.f32 0.0, %v2261
    %2263 = vdwg.mxu0
    %v2268 = vcombine.low %v2189, %v2191
    %v2269 = vcombine.low %v2260, %v2262
    %v2271 = vunpack.c.l.s4 1966171168
    %v2272 = vunpack.c.0.s8 %v2271
    %v2273 = vlaneseq
    %v2274 = vshrl.u32 %v2273, 7
    %v2275 = vsub.s32 %v2272, %v2274
    %v2276 = vrot.slane %v2268, %v2275
    %v2278 = vunpack.c.l.s4 1966171168
    %v2279 = vunpack.c.0.s8 %v2278
    %v2280 = vlaneseq
    %v2281 = vshrl.u32 %v2280, 7
    %v2282 = vsub.s32 %v2279, %v2281
    %v2283 = vrot.slane %v2269, %v2282
    %v2284 = vcombine.low %v2276, %v2283
    %v2286 = vunpack.c.l.s4 1966171168
    %v2287 = vunpack.c.0.s8 %v2286
    %v2288 = vlaneseq
    %v2289 = vshrl.u32 %v2288, 7
    %v2290 = vsub.s32 %v2287, %v2289
    %v2291 = vrot.slane %v2284, %v2290
    %v2293 = vadd.f32 %v2121, %v2291
    %v2294 = vxor.u32 %v2293, 2147483648
    %v2295 = vmul.f32 %v2294, 1.442695
    %v2296 = vpow.pop %v2295
    %v2297 = vadd.f32 %v2296, 1.0
    %v2298 = vrcp.pop %v2297
    %v2299 = vmul.f32 1.0, %v2298
    %v2301 = vrot.slane %v2293, 3
    %v2303 = vtanh.pop %v2301
    %v2305 = vrot.slane %v2299, 1
    %v2307 = vmul.f32 %v2305, %v2114
    %v2308 = vmul.f32 %v2299, %v2303
    %v2309 = vadd.f32 %v2307, %v2308
    %v2310 = vtanh.pop %v2309
    %v2311 = vrot.slane %v2299, 2
    %v2313 = vmul.f32 %v2311, %v2310
    %2314 = vst [vmem:[#allocation3 + $0x9] sm:$0x1] %v2313
    %s2315 = scalar_lea.vmem [#allocation2], 34
    %v2316 = vld [vmem:[%s2315] ss:$8 sm:$0xf]
    %2317 = vmatprep.subr.mxu0 %v363
    %2318 = vmatpush1.msra.mxu0 %v362
    %2319 = vmatprep.subr.mxu0 %v359
    %2320 = vmatpush1.msra.mxu0 %v358
    %2321 = vmatprep.subr.mxu0 %v355
    %2322 = vmatpush1.msra.mxu0 %v354
    %2323 = vmatprep.subr.mxu0 %v351
    %2324 = vmatpush1.msra.mxu0 %v350
    %2325 = vmatprep.subr.mxu0 %v347
    %2326 = vmatpush1.msra.mxu0 %v346
    %2327 = vmatprep.subr.mxu0 %v343
    %2328 = vmatpush1.msra.mxu0 %v342
    %2329 = vmatprep.subr.mxu0 %v339
    %2330 = vmatpush1.msra.mxu0 %v338
    %2331 = vmatprep.subr.mxu0 %v335
    %2332 = vmatpush1.msra.mxu0 %v334
    %2333 = vmatprep.subr.mxu0 %v331
    %2334 = vmatpush1.msra.mxu0 %v330
    %2335 = vmatprep.subr.mxu0 %v327
    %2336 = vmatpush1.msra.mxu0 %v326
    %2337 = vmatprep.subr.mxu0 %v323
    %2338 = vmatpush1.msra.mxu0 %v322
    %2339 = vmatprep.subr.mxu0 %v319
    %2340 = vmatpush1.msra.mxu0 %v318
    %2341 = vmatprep.subr.mxu0 %v315
    %2342 = vmatpush1.msra.mxu0 %v314
    %2343 = vmatprep.subr.mxu0 %v311
    %2344 = vmatpush1.msra.mxu0 %v310
    %2345 = vmatprep.subr.mxu0 %v307
    %2346 = vmatpush1.msra.mxu0 %v306
    %2347 = vmatprep.subr.mxu0 %v303
    %2348 = vmatpush1.msra.mxu0 %v302
    %2349 = vmatprep.subr.mxu0 0.0
    %2350 = vmatpush2.msra.mxu0 0.0
    %2351 = vmatprep.subr.mxu0 0.0
    %2352 = vmatpush2.msra.mxu0 0.0
    %2353 = vmatprep.subr.mxu0 0.0
    %2354 = vmatpush2.msra.mxu0 0.0
    %2355 = vmatprep.subr.mxu0 0.0
    %2356 = vmatpush2.msra.mxu0 0.0
    %2357 = vmatprep.subr.mxu0 0.0
    %2358 = vmatpush2.msra.mxu0 0.0
    %2359 = vmatprep.subr.mxu0 0.0
    %2360 = vmatpush2.msra.mxu0 0.0
    %2361 = vmatprep.subr.mxu0 0.0
    %2362 = vmatpush2.msra.mxu0 0.0
    %2363 = vmatprep.subr.mxu0 0.0
    %2364 = vmatpush2.msra.mxu0 0.0
    %2365 = vmatprep.subr.mxu0 0.0
    %2366 = vmatpush2.msra.mxu0 0.0
    %2367 = vmatprep.subr.mxu0 0.0
    %2368 = vmatpush2.msra.mxu0 0.0
    %2369 = vmatprep.subr.mxu0 0.0
    %2370 = vmatpush2.msra.mxu0 0.0
    %2371 = vmatprep.subr.mxu0 0.0
    %2372 = vmatpush2.msra.mxu0 0.0
    %2373 = vmatprep.subr.mxu0 0.0
    %2374 = vmatpush2.msra.mxu0 0.0
    %2375 = vmatprep.subr.mxu0 0.0
    %2376 = vmatpush2.msra.mxu0 0.0
    %2377 = vmatprep.subr.mxu0 0.0
    %2378 = vmatpush2.msra.mxu0 0.0
    %2379 = vmatprep.subr.mxu0 0.0
    %2380 = vmatpush2.msra.mxu0 0.0
    %2381 = vmatprep.mubr.f32.mxu0 0.0
    %2382 = vmatmul.mubr.f32.gmra.mxu0 %v2313
    %v2383 = vpop.f32.mrf.mxu0
    %v2384 = vadd.f32 0.0, %v2383
    %v2385 = vpop.f32.mrf.mxu0
    %v2386 = vadd.f32 0.0, %v2385
    %2387 = vdwg.mxu0
    %2388 = vmatprep.subr.mxu0 %v365
    %2389 = vmatpush1.msra.mxu0 %v364
    %2390 = vmatprep.subr.mxu0 %v361
    %2391 = vmatpush1.msra.mxu0 %v360
    %2392 = vmatprep.subr.mxu0 %v357
    %2393 = vmatpush1.msra.mxu0 %v356
    %2394 = vmatprep.subr.mxu0 %v353
    %2395 = vmatpush1.msra.mxu0 %v352
    %2396 = vmatprep.subr.mxu0 %v349
    %2397 = vmatpush1.msra.mxu0 %v348
    %2398 = vmatprep.subr.mxu0 %v345
    %2399 = vmatpush1.msra.mxu0 %v344
    %2400 = vmatprep.subr.mxu0 %v341
    %2401 = vmatpush1.msra.mxu0 %v340
    %2402 = vmatprep.subr.mxu0 %v337
    %2403 = vmatpush1.msra.mxu0 %v336
    %2404 = vmatprep.subr.mxu0 %v333
    %2405 = vmatpush1.msra.mxu0 %v332
    %2406 = vmatprep.subr.mxu0 %v329
    %2407 = vmatpush1.msra.mxu0 %v328
    %2408 = vmatprep.subr.mxu0 %v325
    %2409 = vmatpush1.msra.mxu0 %v324
    %2410 = vmatprep.subr.mxu0 %v321
    %2411 = vmatpush1.msra.mxu0 %v320
    %2412 = vmatprep.subr.mxu0 %v317
    %2413 = vmatpush1.msra.mxu0 %v316
    %2414 = vmatprep.subr.mxu0 %v313
    %2415 = vmatpush1.msra.mxu0 %v312
    %2416 = vmatprep.subr.mxu0 %v309
    %2417 = vmatpush1.msra.mxu0 %v308
    %2418 = vmatprep.subr.mxu0 %v305
    %2419 = vmatpush1.msra.mxu0 %v304
    %2420 = vmatprep.subr.mxu0 0.0
    %2421 = vmatpush2.msra.mxu0 0.0
    %2422 = vmatprep.subr.mxu0 0.0
    %2423 = vmatpush2.msra.mxu0 0.0
    %2424 = vmatprep.subr.mxu0 0.0
    %2425 = vmatpush2.msra.mxu0 0.0
    %2426 = vmatprep.subr.mxu0 0.0
    %2427 = vmatpush2.msra.mxu0 0.0
    %2428 = vmatprep.subr.mxu0 0.0
    %2429 = vmatpush2.msra.mxu0 0.0
    %2430 = vmatprep.subr.mxu0 0.0
    %2431 = vmatpush2.msra.mxu0 0.0
    %2432 = vmatprep.subr.mxu0 0.0
    %2433 = vmatpush2.msra.mxu0 0.0
    %2434 = vmatprep.subr.mxu0 0.0
    %2435 = vmatpush2.msra.mxu0 0.0
    %2436 = vmatprep.subr.mxu0 0.0
    %2437 = vmatpush2.msra.mxu0 0.0
    %2438 = vmatprep.subr.mxu0 0.0
    %2439 = vmatpush2.msra.mxu0 0.0
    %2440 = vmatprep.subr.mxu0 0.0
    %2441 = vmatpush2.msra.mxu0 0.0
    %2442 = vmatprep.subr.mxu0 0.0
    %2443 = vmatpush2.msra.mxu0 0.0
    %2444 = vmatprep.subr.mxu0 0.0
    %2445 = vmatpush2.msra.mxu0 0.0
    %2446 = vmatprep.subr.mxu0 0.0
    %2447 = vmatpush2.msra.mxu0 0.0
    %2448 = vmatprep.subr.mxu0 0.0
    %2449 = vmatpush2.msra.mxu0 0.0
    %2450 = vmatprep.subr.mxu0 0.0
    %2451 = vmatpush2.msra.mxu0 0.0
    %2452 = vmatprep.mubr.f32.mxu0 0.0
    %2453 = vmatmul.mubr.f32.gmra.mxu0 %v2313
    %v2454 = vpop.f32.mrf.mxu0
    %v2455 = vadd.f32 0.0, %v2454
    %v2456 = vpop.f32.mrf.mxu0
    %v2457 = vadd.f32 0.0, %v2456
    %2458 = vdwg.mxu0
    %v2463 = vcombine.low %v2384, %v2386
    %v2464 = vcombine.low %v2455, %v2457
    %v2466 = vunpack.c.l.s4 1966171168
    %v2467 = vunpack.c.0.s8 %v2466
    %v2468 = vlaneseq
    %v2469 = vshrl.u32 %v2468, 7
    %v2470 = vsub.s32 %v2467, %v2469
    %v2471 = vrot.slane %v2463, %v2470
    %v2473 = vunpack.c.l.s4 1966171168
    %v2474 = vunpack.c.0.s8 %v2473
    %v2475 = vlaneseq
    %v2476 = vshrl.u32 %v2475, 7
    %v2477 = vsub.s32 %v2474, %v2476
    %v2478 = vrot.slane %v2464, %v2477
    %v2479 = vcombine.low %v2471, %v2478
    %v2481 = vunpack.c.l.s4 1966171168
    %v2482 = vunpack.c.0.s8 %v2481
    %v2483 = vlaneseq
    %v2484 = vshrl.u32 %v2483, 7
    %v2485 = vsub.s32 %v2482, %v2484
    %v2486 = vrot.slane %v2479, %v2485
    %v2488 = vadd.f32 %v2316, %v2486
    %v2489 = vxor.u32 %v2488, 2147483648
    %v2490 = vmul.f32 %v2489, 1.442695
    %v2491 = vpow.pop %v2490
    %v2492 = vadd.f32 %v2491, 1.0
    %v2493 = vrcp.pop %v2492
    %v2494 = vmul.f32 1.0, %v2493
    %v2496 = vrot.slane %v2488, 3
    %v2498 = vtanh.pop %v2496
    %v2500 = vrot.slane %v2494, 1
    %v2502 = vmul.f32 %v2500, %v2309
    %v2503 = vmul.f32 %v2494, %v2498
    %v2504 = vadd.f32 %v2502, %v2503
    %v2505 = vtanh.pop %v2504
    %v2506 = vrot.slane %v2494, 2
    %v2508 = vmul.f32 %v2506, %v2505
    %2509 = vst [vmem:[#allocation3 + $0xa] sm:$0x1] %v2508
    %s2510 = scalar_lea.vmem [#allocation2], 35
    %v2511 = vld [vmem:[%s2510] ss:$8 sm:$0xf]
    %2512 = vmatprep.subr.mxu0 %v363
    %2513 = vmatpush1.msra.mxu0 %v362
    %2514 = vmatprep.subr.mxu0 %v359
    %2515 = vmatpush1.msra.mxu0 %v358
    %2516 = vmatprep.subr.mxu0 %v355
    %2517 = vmatpush1.msra.mxu0 %v354
    %2518 = vmatprep.subr.mxu0 %v351
    %2519 = vmatpush1.msra.mxu0 %v350
    %2520 = vmatprep.subr.mxu0 %v347
    %2521 = vmatpush1.msra.mxu0 %v346
    %2522 = vmatprep.subr.mxu0 %v343
    %2523 = vmatpush1.msra.mxu0 %v342
    %2524 = vmatprep.subr.mxu0 %v339
    %2525 = vmatpush1.msra.mxu0 %v338
    %2526 = vmatprep.subr.mxu0 %v335
    %2527 = vmatpush1.msra.mxu0 %v334
    %2528 = vmatprep.subr.mxu0 %v331
    %2529 = vmatpush1.msra.mxu0 %v330
    %2530 = vmatprep.subr.mxu0 %v327
    %2531 = vmatpush1.msra.mxu0 %v326
    %2532 = vmatprep.subr.mxu0 %v323
    %2533 = vmatpush1.msra.mxu0 %v322
    %2534 = vmatprep.subr.mxu0 %v319
    %2535 = vmatpush1.msra.mxu0 %v318
    %2536 = vmatprep.subr.mxu0 %v315
    %2537 = vmatpush1.msra.mxu0 %v314
    %2538 = vmatprep.subr.mxu0 %v311
    %2539 = vmatpush1.msra.mxu0 %v310
    %2540 = vmatprep.subr.mxu0 %v307
    %2541 = vmatpush1.msra.mxu0 %v306
    %2542 = vmatprep.subr.mxu0 %v303
    %2543 = vmatpush1.msra.mxu0 %v302
    %2544 = vmatprep.subr.mxu0 0.0
    %2545 = vmatpush2.msra.mxu0 0.0
    %2546 = vmatprep.subr.mxu0 0.0
    %2547 = vmatpush2.msra.mxu0 0.0
    %2548 = vmatprep.subr.mxu0 0.0
    %2549 = vmatpush2.msra.mxu0 0.0
    %2550 = vmatprep.subr.mxu0 0.0
    %2551 = vmatpush2.msra.mxu0 0.0
    %2552 = vmatprep.subr.mxu0 0.0
    %2553 = vmatpush2.msra.mxu0 0.0
    %2554 = vmatprep.subr.mxu0 0.0
    %2555 = vmatpush2.msra.mxu0 0.0
    %2556 = vmatprep.subr.mxu0 0.0
    %2557 = vmatpush2.msra.mxu0 0.0
    %2558 = vmatprep.subr.mxu0 0.0
    %2559 = vmatpush2.msra.mxu0 0.0
    %2560 = vmatprep.subr.mxu0 0.0
    %2561 = vmatpush2.msra.mxu0 0.0
    %2562 = vmatprep.subr.mxu0 0.0
    %2563 = vmatpush2.msra.mxu0 0.0
    %2564 = vmatprep.subr.mxu0 0.0
    %2565 = vmatpush2.msra.mxu0 0.0
    %2566 = vmatprep.subr.mxu0 0.0
    %2567 = vmatpush2.msra.mxu0 0.0
    %2568 = vmatprep.subr.mxu0 0.0
    %2569 = vmatpush2.msra.mxu0 0.0
    %2570 = vmatprep.subr.mxu0 0.0
    %2571 = vmatpush2.msra.mxu0 0.0
    %2572 = vmatprep.subr.mxu0 0.0
    %2573 = vmatpush2.msra.mxu0 0.0
    %2574 = vmatprep.subr.mxu0 0.0
    %2575 = vmatpush2.msra.mxu0 0.0
    %2576 = vmatprep.mubr.f32.mxu0 0.0
    %2577 = vmatmul.mubr.f32.gmra.mxu0 %v2508
    %v2578 = vpop.f32.mrf.mxu0
    %v2579 = vadd.f32 0.0, %v2578
    %v2580 = vpop.f32.mrf.mxu0
    %v2581 = vadd.f32 0.0, %v2580
    %2582 = vdwg.mxu0
    %2583 = vmatprep.subr.mxu0 %v365
    %2584 = vmatpush1.msra.mxu0 %v364
    %2585 = vmatprep.subr.mxu0 %v361
    %2586 = vmatpush1.msra.mxu0 %v360
    %2587 = vmatprep.subr.mxu0 %v357
    %2588 = vmatpush1.msra.mxu0 %v356
    %2589 = vmatprep.subr.mxu0 %v353
    %2590 = vmatpush1.msra.mxu0 %v352
    %2591 = vmatprep.subr.mxu0 %v349
    %2592 = vmatpush1.msra.mxu0 %v348
    %2593 = vmatprep.subr.mxu0 %v345
    %2594 = vmatpush1.msra.mxu0 %v344
    %2595 = vmatprep.subr.mxu0 %v341
    %2596 = vmatpush1.msra.mxu0 %v340
    %2597 = vmatprep.subr.mxu0 %v337
    %2598 = vmatpush1.msra.mxu0 %v336
    %2599 = vmatprep.subr.mxu0 %v333
    %2600 = vmatpush1.msra.mxu0 %v332
    %2601 = vmatprep.subr.mxu0 %v329
    %2602 = vmatpush1.msra.mxu0 %v328
    %2603 = vmatprep.subr.mxu0 %v325
    %2604 = vmatpush1.msra.mxu0 %v324
    %2605 = vmatprep.subr.mxu0 %v321
    %2606 = vmatpush1.msra.mxu0 %v320
    %2607 = vmatprep.subr.mxu0 %v317
    %2608 = vmatpush1.msra.mxu0 %v316
    %2609 = vmatprep.subr.mxu0 %v313
    %2610 = vmatpush1.msra.mxu0 %v312
    %2611 = vmatprep.subr.mxu0 %v309
    %2612 = vmatpush1.msra.mxu0 %v308
    %2613 = vmatprep.subr.mxu0 %v305
    %2614 = vmatpush1.msra.mxu0 %v304
    %2615 = vmatprep.subr.mxu0 0.0
    %2616 = vmatpush2.msra.mxu0 0.0
    %2617 = vmatprep.subr.mxu0 0.0
    %2618 = vmatpush2.msra.mxu0 0.0
    %2619 = vmatprep.subr.mxu0 0.0
    %2620 = vmatpush2.msra.mxu0 0.0
    %2621 = vmatprep.subr.mxu0 0.0
    %2622 = vmatpush2.msra.mxu0 0.0
    %2623 = vmatprep.subr.mxu0 0.0
    %2624 = vmatpush2.msra.mxu0 0.0
    %2625 = vmatprep.subr.mxu0 0.0
    %2626 = vmatpush2.msra.mxu0 0.0
    %2627 = vmatprep.subr.mxu0 0.0
    %2628 = vmatpush2.msra.mxu0 0.0
    %2629 = vmatprep.subr.mxu0 0.0
    %2630 = vmatpush2.msra.mxu0 0.0
    %2631 = vmatprep.subr.mxu0 0.0
    %2632 = vmatpush2.msra.mxu0 0.0
    %2633 = vmatprep.subr.mxu0 0.0
    %2634 = vmatpush2.msra.mxu0 0.0
    %2635 = vmatprep.subr.mxu0 0.0
    %2636 = vmatpush2.msra.mxu0 0.0
    %2637 = vmatprep.subr.mxu0 0.0
    %2638 = vmatpush2.msra.mxu0 0.0
    %2639 = vmatprep.subr.mxu0 0.0
    %2640 = vmatpush2.msra.mxu0 0.0
    %2641 = vmatprep.subr.mxu0 0.0
    %2642 = vmatpush2.msra.mxu0 0.0
    %2643 = vmatprep.subr.mxu0 0.0
    %2644 = vmatpush2.msra.mxu0 0.0
    %2645 = vmatprep.subr.mxu0 0.0
    %2646 = vmatpush2.msra.mxu0 0.0
    %2647 = vmatprep.mubr.f32.mxu0 0.0
    %2648 = vmatmul.mubr.f32.gmra.mxu0 %v2508
    %v2649 = vpop.f32.mrf.mxu0
    %v2650 = vadd.f32 0.0, %v2649
    %v2651 = vpop.f32.mrf.mxu0
    %v2652 = vadd.f32 0.0, %v2651
    %2653 = vdwg.mxu0
    %v2658 = vcombine.low %v2579, %v2581
    %v2659 = vcombine.low %v2650, %v2652
    %v2661 = vunpack.c.l.s4 1966171168
    %v2662 = vunpack.c.0.s8 %v2661
    %v2663 = vlaneseq
    %v2664 = vshrl.u32 %v2663, 7
    %v2665 = vsub.s32 %v2662, %v2664
    %v2666 = vrot.slane %v2658, %v2665
    %v2668 = vunpack.c.l.s4 1966171168
    %v2669 = vunpack.c.0.s8 %v2668
    %v2670 = vlaneseq
    %v2671 = vshrl.u32 %v2670, 7
    %v2672 = vsub.s32 %v2669, %v2671
    %v2673 = vrot.slane %v2659, %v2672
    %v2674 = vcombine.low %v2666, %v2673
    %v2676 = vunpack.c.l.s4 1966171168
    %v2677 = vunpack.c.0.s8 %v2676
    %v2678 = vlaneseq
    %v2679 = vshrl.u32 %v2678, 7
    %v2680 = vsub.s32 %v2677, %v2679
    %v2681 = vrot.slane %v2674, %v2680
    %v2683 = vadd.f32 %v2511, %v2681
    %v2684 = vxor.u32 %v2683, 2147483648
    %v2685 = vmul.f32 %v2684, 1.442695
    %v2686 = vpow.pop %v2685
    %v2687 = vadd.f32 %v2686, 1.0
    %v2688 = vrcp.pop %v2687
    %v2689 = vmul.f32 1.0, %v2688
    %v2691 = vrot.slane %v2683, 3
    %v2693 = vtanh.pop %v2691
    %v2695 = vrot.slane %v2689, 1
    %v2697 = vmul.f32 %v2695, %v2504
    %v2698 = vmul.f32 %v2689, %v2693
    %v2699 = vadd.f32 %v2697, %v2698
    %v2700 = vtanh.pop %v2699
    %v2701 = vrot.slane %v2689, 2
    %v2703 = vmul.f32 %v2701, %v2700
    %2704 = vst [vmem:[#allocation3 + $0xb] sm:$0x1] %v2703
    %s2705 = scalar_lea.vmem [#allocation2], 36
    %v2706 = vld [vmem:[%s2705] ss:$8 sm:$0xf]
    %2707 = vmatprep.subr.mxu0 %v363
    %2708 = vmatpush1.msra.mxu0 %v362
    %2709 = vmatprep.subr.mxu0 %v359
    %2710 = vmatpush1.msra.mxu0 %v358
    %2711 = vmatprep.subr.mxu0 %v355
    %2712 = vmatpush1.msra.mxu0 %v354
    %2713 = vmatprep.subr.mxu0 %v351
    %2714 = vmatpush1.msra.mxu0 %v350
    %2715 = vmatprep.subr.mxu0 %v347
    %2716 = vmatpush1.msra.mxu0 %v346
    %2717 = vmatprep.subr.mxu0 %v343
    %2718 = vmatpush1.msra.mxu0 %v342
    %2719 = vmatprep.subr.mxu0 %v339
    %2720 = vmatpush1.msra.mxu0 %v338
    %2721 = vmatprep.subr.mxu0 %v335
    %2722 = vmatpush1.msra.mxu0 %v334
    %2723 = vmatprep.subr.mxu0 %v331
    %2724 = vmatpush1.msra.mxu0 %v330
    %2725 = vmatprep.subr.mxu0 %v327
    %2726 = vmatpush1.msra.mxu0 %v326
    %2727 = vmatprep.subr.mxu0 %v323
    %2728 = vmatpush1.msra.mxu0 %v322
    %2729 = vmatprep.subr.mxu0 %v319
    %2730 = vmatpush1.msra.mxu0 %v318
    %2731 = vmatprep.subr.mxu0 %v315
    %2732 = vmatpush1.msra.mxu0 %v314
    %2733 = vmatprep.subr.mxu0 %v311
    %2734 = vmatpush1.msra.mxu0 %v310
    %2735 = vmatprep.subr.mxu0 %v307
    %2736 = vmatpush1.msra.mxu0 %v306
    %2737 = vmatprep.subr.mxu0 %v303
    %2738 = vmatpush1.msra.mxu0 %v302
    %2739 = vmatprep.subr.mxu0 0.0
    %2740 = vmatpush2.msra.mxu0 0.0
    %2741 = vmatprep.subr.mxu0 0.0
    %2742 = vmatpush2.msra.mxu0 0.0
    %2743 = vmatprep.subr.mxu0 0.0
    %2744 = vmatpush2.msra.mxu0 0.0
    %2745 = vmatprep.subr.mxu0 0.0
    %2746 = vmatpush2.msra.mxu0 0.0
    %2747 = vmatprep.subr.mxu0 0.0
    %2748 = vmatpush2.msra.mxu0 0.0
    %2749 = vmatprep.subr.mxu0 0.0
    %2750 = vmatpush2.msra.mxu0 0.0
    %2751 = vmatprep.subr.mxu0 0.0
    %2752 = vmatpush2.msra.mxu0 0.0
    %2753 = vmatprep.subr.mxu0 0.0
    %2754 = vmatpush2.msra.mxu0 0.0
    %2755 = vmatprep.subr.mxu0 0.0
    %2756 = vmatpush2.msra.mxu0 0.0
    %2757 = vmatprep.subr.mxu0 0.0
    %2758 = vmatpush2.msra.mxu0 0.0
    %2759 = vmatprep.subr.mxu0 0.0
    %2760 = vmatpush2.msra.mxu0 0.0
    %2761 = vmatprep.subr.mxu0 0.0
    %2762 = vmatpush2.msra.mxu0 0.0
    %2763 = vmatprep.subr.mxu0 0.0
    %2764 = vmatpush2.msra.mxu0 0.0
    %2765 = vmatprep.subr.mxu0 0.0
    %2766 = vmatpush2.msra.mxu0 0.0
    %2767 = vmatprep.subr.mxu0 0.0
    %2768 = vmatpush2.msra.mxu0 0.0
    %2769 = vmatprep.subr.mxu0 0.0
    %2770 = vmatpush2.msra.mxu0 0.0
    %2771 = vmatprep.mubr.f32.mxu0 0.0
    %2772 = vmatmul.mubr.f32.gmra.mxu0 %v2703
    %v2773 = vpop.f32.mrf.mxu0
    %v2774 = vadd.f32 0.0, %v2773
    %v2775 = vpop.f32.mrf.mxu0
    %v2776 = vadd.f32 0.0, %v2775
    %2777 = vdwg.mxu0
    %2778 = vmatprep.subr.mxu0 %v365
    %2779 = vmatpush1.msra.mxu0 %v364
    %2780 = vmatprep.subr.mxu0 %v361
    %2781 = vmatpush1.msra.mxu0 %v360
    %2782 = vmatprep.subr.mxu0 %v357
    %2783 = vmatpush1.msra.mxu0 %v356
    %2784 = vmatprep.subr.mxu0 %v353
    %2785 = vmatpush1.msra.mxu0 %v352
    %2786 = vmatprep.subr.mxu0 %v349
    %2787 = vmatpush1.msra.mxu0 %v348
    %2788 = vmatprep.subr.mxu0 %v345
    %2789 = vmatpush1.msra.mxu0 %v344
    %2790 = vmatprep.subr.mxu0 %v341
    %2791 = vmatpush1.msra.mxu0 %v340
    %2792 = vmatprep.subr.mxu0 %v337
    %2793 = vmatpush1.msra.mxu0 %v336
    %2794 = vmatprep.subr.mxu0 %v333
    %2795 = vmatpush1.msra.mxu0 %v332
    %2796 = vmatprep.subr.mxu0 %v329
    %2797 = vmatpush1.msra.mxu0 %v328
    %2798 = vmatprep.subr.mxu0 %v325
    %2799 = vmatpush1.msra.mxu0 %v324
    %2800 = vmatprep.subr.mxu0 %v321
    %2801 = vmatpush1.msra.mxu0 %v320
    %2802 = vmatprep.subr.mxu0 %v317
    %2803 = vmatpush1.msra.mxu0 %v316
    %2804 = vmatprep.subr.mxu0 %v313
    %2805 = vmatpush1.msra.mxu0 %v312
    %2806 = vmatprep.subr.mxu0 %v309
    %2807 = vmatpush1.msra.mxu0 %v308
    %2808 = vmatprep.subr.mxu0 %v305
    %2809 = vmatpush1.msra.mxu0 %v304
    %2810 = vmatprep.subr.mxu0 0.0
    %2811 = vmatpush2.msra.mxu0 0.0
    %2812 = vmatprep.subr.mxu0 0.0
    %2813 = vmatpush2.msra.mxu0 0.0
    %2814 = vmatprep.subr.mxu0 0.0
    %2815 = vmatpush2.msra.mxu0 0.0
    %2816 = vmatprep.subr.mxu0 0.0
    %2817 = vmatpush2.msra.mxu0 0.0
    %2818 = vmatprep.subr.mxu0 0.0
    %2819 = vmatpush2.msra.mxu0 0.0
    %2820 = vmatprep.subr.mxu0 0.0
    %2821 = vmatpush2.msra.mxu0 0.0
    %2822 = vmatprep.subr.mxu0 0.0
    %2823 = vmatpush2.msra.mxu0 0.0
    %2824 = vmatprep.subr.mxu0 0.0
    %2825 = vmatpush2.msra.mxu0 0.0
    %2826 = vmatprep.subr.mxu0 0.0
    %2827 = vmatpush2.msra.mxu0 0.0
    %2828 = vmatprep.subr.mxu0 0.0
    %2829 = vmatpush2.msra.mxu0 0.0
    %2830 = vmatprep.subr.mxu0 0.0
    %2831 = vmatpush2.msra.mxu0 0.0
    %2832 = vmatprep.subr.mxu0 0.0
    %2833 = vmatpush2.msra.mxu0 0.0
    %2834 = vmatprep.subr.mxu0 0.0
    %2835 = vmatpush2.msra.mxu0 0.0
    %2836 = vmatprep.subr.mxu0 0.0
    %2837 = vmatpush2.msra.mxu0 0.0
    %2838 = vmatprep.subr.mxu0 0.0
    %2839 = vmatpush2.msra.mxu0 0.0
    %2840 = vmatprep.subr.mxu0 0.0
    %2841 = vmatpush2.msra.mxu0 0.0
    %2842 = vmatprep.mubr.f32.mxu0 0.0
    %2843 = vmatmul.mubr.f32.gmra.mxu0 %v2703
    %v2844 = vpop.f32.mrf.mxu0
    %v2845 = vadd.f32 0.0, %v2844
    %v2846 = vpop.f32.mrf.mxu0
    %v2847 = vadd.f32 0.0, %v2846
    %2848 = vdwg.mxu0
    %v2853 = vcombine.low %v2774, %v2776
    %v2854 = vcombine.low %v2845, %v2847
    %v2856 = vunpack.c.l.s4 1966171168
    %v2857 = vunpack.c.0.s8 %v2856
    %v2858 = vlaneseq
    %v2859 = vshrl.u32 %v2858, 7
    %v2860 = vsub.s32 %v2857, %v2859
    %v2861 = vrot.slane %v2853, %v2860
    %v2863 = vunpack.c.l.s4 1966171168
    %v2864 = vunpack.c.0.s8 %v2863
    %v2865 = vlaneseq
    %v2866 = vshrl.u32 %v2865, 7
    %v2867 = vsub.s32 %v2864, %v2866
    %v2868 = vrot.slane %v2854, %v2867
    %v2869 = vcombine.low %v2861, %v2868
    %v2871 = vunpack.c.l.s4 1966171168
    %v2872 = vunpack.c.0.s8 %v2871
    %v2873 = vlaneseq
    %v2874 = vshrl.u32 %v2873, 7
    %v2875 = vsub.s32 %v2872, %v2874
    %v2876 = vrot.slane %v2869, %v2875
    %v2878 = vadd.f32 %v2706, %v2876
    %v2879 = vxor.u32 %v2878, 2147483648
    %v2880 = vmul.f32 %v2879, 1.442695
    %v2881 = vpow.pop %v2880
    %v2882 = vadd.f32 %v2881, 1.0
    %v2883 = vrcp.pop %v2882
    %v2884 = vmul.f32 1.0, %v2883
    %v2886 = vrot.slane %v2878, 3
    %v2888 = vtanh.pop %v2886
    %v2890 = vrot.slane %v2884, 1
    %v2892 = vmul.f32 %v2890, %v2699
    %v2893 = vmul.f32 %v2884, %v2888
    %v2894 = vadd.f32 %v2892, %v2893
    %v2895 = vtanh.pop %v2894
    %v2896 = vrot.slane %v2884, 2
    %v2898 = vmul.f32 %v2896, %v2895
    %2899 = vst [vmem:[#allocation3 + $0xc] sm:$0x1] %v2898
    %s2900 = scalar_lea.vmem [#allocation2], 37
    %v2901 = vld [vmem:[%s2900] ss:$8 sm:$0xf]
    %2902 = vmatprep.subr.mxu0 %v363
    %2903 = vmatpush1.msra.mxu0 %v362
    %2904 = vmatprep.subr.mxu0 %v359
    %2905 = vmatpush1.msra.mxu0 %v358
    %2906 = vmatprep.subr.mxu0 %v355
    %2907 = vmatpush1.msra.mxu0 %v354
    %2908 = vmatprep.subr.mxu0 %v351
    %2909 = vmatpush1.msra.mxu0 %v350
    %2910 = vmatprep.subr.mxu0 %v347
    %2911 = vmatpush1.msra.mxu0 %v346
    %2912 = vmatprep.subr.mxu0 %v343
    %2913 = vmatpush1.msra.mxu0 %v342
    %2914 = vmatprep.subr.mxu0 %v339
    %2915 = vmatpush1.msra.mxu0 %v338
    %2916 = vmatprep.subr.mxu0 %v335
    %2917 = vmatpush1.msra.mxu0 %v334
    %2918 = vmatprep.subr.mxu0 %v331
    %2919 = vmatpush1.msra.mxu0 %v330
    %2920 = vmatprep.subr.mxu0 %v327
    %2921 = vmatpush1.msra.mxu0 %v326
    %2922 = vmatprep.subr.mxu0 %v323
    %2923 = vmatpush1.msra.mxu0 %v322
    %2924 = vmatprep.subr.mxu0 %v319
    %2925 = vmatpush1.msra.mxu0 %v318
    %2926 = vmatprep.subr.mxu0 %v315
    %2927 = vmatpush1.msra.mxu0 %v314
    %2928 = vmatprep.subr.mxu0 %v311
    %2929 = vmatpush1.msra.mxu0 %v310
    %2930 = vmatprep.subr.mxu0 %v307
    %2931 = vmatpush1.msra.mxu0 %v306
    %2932 = vmatprep.subr.mxu0 %v303
    %2933 = vmatpush1.msra.mxu0 %v302
    %2934 = vmatprep.subr.mxu0 0.0
    %2935 = vmatpush2.msra.mxu0 0.0
    %2936 = vmatprep.subr.mxu0 0.0
    %2937 = vmatpush2.msra.mxu0 0.0
    %2938 = vmatprep.subr.mxu0 0.0
    %2939 = vmatpush2.msra.mxu0 0.0
    %2940 = vmatprep.subr.mxu0 0.0
    %2941 = vmatpush2.msra.mxu0 0.0
    %2942 = vmatprep.subr.mxu0 0.0
    %2943 = vmatpush2.msra.mxu0 0.0
    %2944 = vmatprep.subr.mxu0 0.0
    %2945 = vmatpush2.msra.mxu0 0.0
    %2946 = vmatprep.subr.mxu0 0.0
    %2947 = vmatpush2.msra.mxu0 0.0
    %2948 = vmatprep.subr.mxu0 0.0
    %2949 = vmatpush2.msra.mxu0 0.0
    %2950 = vmatprep.subr.mxu0 0.0
    %2951 = vmatpush2.msra.mxu0 0.0
    %2952 = vmatprep.subr.mxu0 0.0
    %2953 = vmatpush2.msra.mxu0 0.0
    %2954 = vmatprep.subr.mxu0 0.0
    %2955 = vmatpush2.msra.mxu0 0.0
    %2956 = vmatprep.subr.mxu0 0.0
    %2957 = vmatpush2.msra.mxu0 0.0
    %2958 = vmatprep.subr.mxu0 0.0
    %2959 = vmatpush2.msra.mxu0 0.0
    %2960 = vmatprep.subr.mxu0 0.0
    %2961 = vmatpush2.msra.mxu0 0.0
    %2962 = vmatprep.subr.mxu0 0.0
    %2963 = vmatpush2.msra.mxu0 0.0
    %2964 = vmatprep.subr.mxu0 0.0
    %2965 = vmatpush2.msra.mxu0 0.0
    %2966 = vmatprep.mubr.f32.mxu0 0.0
    %2967 = vmatmul.mubr.f32.gmra.mxu0 %v2898
    %v2968 = vpop.f32.mrf.mxu0
    %v2969 = vadd.f32 0.0, %v2968
    %v2970 = vpop.f32.mrf.mxu0
    %v2971 = vadd.f32 0.0, %v2970
    %2972 = vdwg.mxu0
    %2973 = vmatprep.subr.mxu0 %v365
    %2974 = vmatpush1.msra.mxu0 %v364
    %2975 = vmatprep.subr.mxu0 %v361
    %2976 = vmatpush1.msra.mxu0 %v360
    %2977 = vmatprep.subr.mxu0 %v357
    %2978 = vmatpush1.msra.mxu0 %v356
    %2979 = vmatprep.subr.mxu0 %v353
    %2980 = vmatpush1.msra.mxu0 %v352
    %2981 = vmatprep.subr.mxu0 %v349
    %2982 = vmatpush1.msra.mxu0 %v348
    %2983 = vmatprep.subr.mxu0 %v345
    %2984 = vmatpush1.msra.mxu0 %v344
    %2985 = vmatprep.subr.mxu0 %v341
    %2986 = vmatpush1.msra.mxu0 %v340
    %2987 = vmatprep.subr.mxu0 %v337
    %2988 = vmatpush1.msra.mxu0 %v336
    %2989 = vmatprep.subr.mxu0 %v333
    %2990 = vmatpush1.msra.mxu0 %v332
    %2991 = vmatprep.subr.mxu0 %v329
    %2992 = vmatpush1.msra.mxu0 %v328
    %2993 = vmatprep.subr.mxu0 %v325
    %2994 = vmatpush1.msra.mxu0 %v324
    %2995 = vmatprep.subr.mxu0 %v321
    %2996 = vmatpush1.msra.mxu0 %v320
    %2997 = vmatprep.subr.mxu0 %v317
    %2998 = vmatpush1.msra.mxu0 %v316
    %2999 = vmatprep.subr.mxu0 %v313
    %3000 = vmatpush1.msra.mxu0 %v312
    %3001 = vmatprep.subr.mxu0 %v309
    %3002 = vmatpush1.msra.mxu0 %v308
    %3003 = vmatprep.subr.mxu0 %v305
    %3004 = vmatpush1.msra.mxu0 %v304
    %3005 = vmatprep.subr.mxu0 0.0
    %3006 = vmatpush2.msra.mxu0 0.0
    %3007 = vmatprep.subr.mxu0 0.0
    %3008 = vmatpush2.msra.mxu0 0.0
    %3009 = vmatprep.subr.mxu0 0.0
    %3010 = vmatpush2.msra.mxu0 0.0
    %3011 = vmatprep.subr.mxu0 0.0
    %3012 = vmatpush2.msra.mxu0 0.0
    %3013 = vmatprep.subr.mxu0 0.0
    %3014 = vmatpush2.msra.mxu0 0.0
    %3015 = vmatprep.subr.mxu0 0.0
    %3016 = vmatpush2.msra.mxu0 0.0
    %3017 = vmatprep.subr.mxu0 0.0
    %3018 = vmatpush2.msra.mxu0 0.0
    %3019 = vmatprep.subr.mxu0 0.0
    %3020 = vmatpush2.msra.mxu0 0.0
    %3021 = vmatprep.subr.mxu0 0.0
    %3022 = vmatpush2.msra.mxu0 0.0
    %3023 = vmatprep.subr.mxu0 0.0
    %3024 = vmatpush2.msra.mxu0 0.0
    %3025 = vmatprep.subr.mxu0 0.0
    %3026 = vmatpush2.msra.mxu0 0.0
    %3027 = vmatprep.subr.mxu0 0.0
    %3028 = vmatpush2.msra.mxu0 0.0
    %3029 = vmatprep.subr.mxu0 0.0
    %3030 = vmatpush2.msra.mxu0 0.0
    %3031 = vmatprep.subr.mxu0 0.0
    %3032 = vmatpush2.msra.mxu0 0.0
    %3033 = vmatprep.subr.mxu0 0.0
    %3034 = vmatpush2.msra.mxu0 0.0
    %3035 = vmatprep.subr.mxu0 0.0
    %3036 = vmatpush2.msra.mxu0 0.0
    %3037 = vmatprep.mubr.f32.mxu0 0.0
    %3038 = vmatmul.mubr.f32.gmra.mxu0 %v2898
    %v3039 = vpop.f32.mrf.mxu0
    %v3040 = vadd.f32 0.0, %v3039
    %v3041 = vpop.f32.mrf.mxu0
    %v3042 = vadd.f32 0.0, %v3041
    %3043 = vdwg.mxu0
    %v3048 = vcombine.low %v2969, %v2971
    %v3049 = vcombine.low %v3040, %v3042
    %v3051 = vunpack.c.l.s4 1966171168
    %v3052 = vunpack.c.0.s8 %v3051
    %v3053 = vlaneseq
    %v3054 = vshrl.u32 %v3053, 7
    %v3055 = vsub.s32 %v3052, %v3054
    %v3056 = vrot.slane %v3048, %v3055
    %v3058 = vunpack.c.l.s4 1966171168
    %v3059 = vunpack.c.0.s8 %v3058
    %v3060 = vlaneseq
    %v3061 = vshrl.u32 %v3060, 7
    %v3062 = vsub.s32 %v3059, %v3061
    %v3063 = vrot.slane %v3049, %v3062
    %v3064 = vcombine.low %v3056, %v3063
    %v3066 = vunpack.c.l.s4 1966171168
    %v3067 = vunpack.c.0.s8 %v3066
    %v3068 = vlaneseq
    %v3069 = vshrl.u32 %v3068, 7
    %v3070 = vsub.s32 %v3067, %v3069
    %v3071 = vrot.slane %v3064, %v3070
    %v3073 = vadd.f32 %v2901, %v3071
    %v3074 = vxor.u32 %v3073, 2147483648
    %v3075 = vmul.f32 %v3074, 1.442695
    %v3076 = vpow.pop %v3075
    %v3077 = vadd.f32 %v3076, 1.0
    %v3078 = vrcp.pop %v3077
    %v3079 = vmul.f32 1.0, %v3078
    %v3081 = vrot.slane %v3073, 3
    %v3083 = vtanh.pop %v3081
    %v3085 = vrot.slane %v3079, 1
    %v3087 = vmul.f32 %v3085, %v2894
    %v3088 = vmul.f32 %v3079, %v3083
    %v3089 = vadd.f32 %v3087, %v3088
    %v3090 = vtanh.pop %v3089
    %v3091 = vrot.slane %v3079, 2
    %v3093 = vmul.f32 %v3091, %v3090
    %3094 = vst [vmem:[#allocation3 + $0xd] sm:$0x1] %v3093
    %s3095 = scalar_lea.vmem [#allocation2], 38
    %v3096 = vld [vmem:[%s3095] ss:$8 sm:$0xf]
    %3097 = vmatprep.subr.mxu0 %v363
    %3098 = vmatpush1.msra.mxu0 %v362
    %3099 = vmatprep.subr.mxu0 %v359
    %3100 = vmatpush1.msra.mxu0 %v358
    %3101 = vmatprep.subr.mxu0 %v355
    %3102 = vmatpush1.msra.mxu0 %v354
    %3103 = vmatprep.subr.mxu0 %v351
    %3104 = vmatpush1.msra.mxu0 %v350
    %3105 = vmatprep.subr.mxu0 %v347
    %3106 = vmatpush1.msra.mxu0 %v346
    %3107 = vmatprep.subr.mxu0 %v343
    %3108 = vmatpush1.msra.mxu0 %v342
    %3109 = vmatprep.subr.mxu0 %v339
    %3110 = vmatpush1.msra.mxu0 %v338
    %3111 = vmatprep.subr.mxu0 %v335
    %3112 = vmatpush1.msra.mxu0 %v334
    %3113 = vmatprep.subr.mxu0 %v331
    %3114 = vmatpush1.msra.mxu0 %v330
    %3115 = vmatprep.subr.mxu0 %v327
    %3116 = vmatpush1.msra.mxu0 %v326
    %3117 = vmatprep.subr.mxu0 %v323
    %3118 = vmatpush1.msra.mxu0 %v322
    %3119 = vmatprep.subr.mxu0 %v319
    %3120 = vmatpush1.msra.mxu0 %v318
    %3121 = vmatprep.subr.mxu0 %v315
    %3122 = vmatpush1.msra.mxu0 %v314
    %3123 = vmatprep.subr.mxu0 %v311
    %3124 = vmatpush1.msra.mxu0 %v310
    %3125 = vmatprep.subr.mxu0 %v307
    %3126 = vmatpush1.msra.mxu0 %v306
    %3127 = vmatprep.subr.mxu0 %v303
    %3128 = vmatpush1.msra.mxu0 %v302
    %3129 = vmatprep.subr.mxu0 0.0
    %3130 = vmatpush2.msra.mxu0 0.0
    %3131 = vmatprep.subr.mxu0 0.0
    %3132 = vmatpush2.msra.mxu0 0.0
    %3133 = vmatprep.subr.mxu0 0.0
    %3134 = vmatpush2.msra.mxu0 0.0
    %3135 = vmatprep.subr.mxu0 0.0
    %3136 = vmatpush2.msra.mxu0 0.0
    %3137 = vmatprep.subr.mxu0 0.0
    %3138 = vmatpush2.msra.mxu0 0.0
    %3139 = vmatprep.subr.mxu0 0.0
    %3140 = vmatpush2.msra.mxu0 0.0
    %3141 = vmatprep.subr.mxu0 0.0
    %3142 = vmatpush2.msra.mxu0 0.0
    %3143 = vmatprep.subr.mxu0 0.0
    %3144 = vmatpush2.msra.mxu0 0.0
    %3145 = vmatprep.subr.mxu0 0.0
    %3146 = vmatpush2.msra.mxu0 0.0
    %3147 = vmatprep.subr.mxu0 0.0
    %3148 = vmatpush2.msra.mxu0 0.0
    %3149 = vmatprep.subr.mxu0 0.0
    %3150 = vmatpush2.msra.mxu0 0.0
    %3151 = vmatprep.subr.mxu0 0.0
    %3152 = vmatpush2.msra.mxu0 0.0
    %3153 = vmatprep.subr.mxu0 0.0
    %3154 = vmatpush2.msra.mxu0 0.0
    %3155 = vmatprep.subr.mxu0 0.0
    %3156 = vmatpush2.msra.mxu0 0.0
    %3157 = vmatprep.subr.mxu0 0.0
    %3158 = vmatpush2.msra.mxu0 0.0
    %3159 = vmatprep.subr.mxu0 0.0
    %3160 = vmatpush2.msra.mxu0 0.0
    %3161 = vmatprep.mubr.f32.mxu0 0.0
    %3162 = vmatmul.mubr.f32.gmra.mxu0 %v3093
    %v3163 = vpop.f32.mrf.mxu0
    %v3164 = vadd.f32 0.0, %v3163
    %v3165 = vpop.f32.mrf.mxu0
    %v3166 = vadd.f32 0.0, %v3165
    %3167 = vdwg.mxu0
    %3168 = vmatprep.subr.mxu0 %v365
    %3169 = vmatpush1.msra.mxu0 %v364
    %3170 = vmatprep.subr.mxu0 %v361
    %3171 = vmatpush1.msra.mxu0 %v360
    %3172 = vmatprep.subr.mxu0 %v357
    %3173 = vmatpush1.msra.mxu0 %v356
    %3174 = vmatprep.subr.mxu0 %v353
    %3175 = vmatpush1.msra.mxu0 %v352
    %3176 = vmatprep.subr.mxu0 %v349
    %3177 = vmatpush1.msra.mxu0 %v348
    %3178 = vmatprep.subr.mxu0 %v345
    %3179 = vmatpush1.msra.mxu0 %v344
    %3180 = vmatprep.subr.mxu0 %v341
    %3181 = vmatpush1.msra.mxu0 %v340
    %3182 = vmatprep.subr.mxu0 %v337
    %3183 = vmatpush1.msra.mxu0 %v336
    %3184 = vmatprep.subr.mxu0 %v333
    %3185 = vmatpush1.msra.mxu0 %v332
    %3186 = vmatprep.subr.mxu0 %v329
    %3187 = vmatpush1.msra.mxu0 %v328
    %3188 = vmatprep.subr.mxu0 %v325
    %3189 = vmatpush1.msra.mxu0 %v324
    %3190 = vmatprep.subr.mxu0 %v321
    %3191 = vmatpush1.msra.mxu0 %v320
    %3192 = vmatprep.subr.mxu0 %v317
    %3193 = vmatpush1.msra.mxu0 %v316
    %3194 = vmatprep.subr.mxu0 %v313
    %3195 = vmatpush1.msra.mxu0 %v312
    %3196 = vmatprep.subr.mxu0 %v309
    %3197 = vmatpush1.msra.mxu0 %v308
    %3198 = vmatprep.subr.mxu0 %v305
    %3199 = vmatpush1.msra.mxu0 %v304
    %3200 = vmatprep.subr.mxu0 0.0
    %3201 = vmatpush2.msra.mxu0 0.0
    %3202 = vmatprep.subr.mxu0 0.0
    %3203 = vmatpush2.msra.mxu0 0.0
    %3204 = vmatprep.subr.mxu0 0.0
    %3205 = vmatpush2.msra.mxu0 0.0
    %3206 = vmatprep.subr.mxu0 0.0
    %3207 = vmatpush2.msra.mxu0 0.0
    %3208 = vmatprep.subr.mxu0 0.0
    %3209 = vmatpush2.msra.mxu0 0.0
    %3210 = vmatprep.subr.mxu0 0.0
    %3211 = vmatpush2.msra.mxu0 0.0
    %3212 = vmatprep.subr.mxu0 0.0
    %3213 = vmatpush2.msra.mxu0 0.0
    %3214 = vmatprep.subr.mxu0 0.0
    %3215 = vmatpush2.msra.mxu0 0.0
    %3216 = vmatprep.subr.mxu0 0.0
    %3217 = vmatpush2.msra.mxu0 0.0
    %3218 = vmatprep.subr.mxu0 0.0
    %3219 = vmatpush2.msra.mxu0 0.0
    %3220 = vmatprep.subr.mxu0 0.0
    %3221 = vmatpush2.msra.mxu0 0.0
    %3222 = vmatprep.subr.mxu0 0.0
    %3223 = vmatpush2.msra.mxu0 0.0
    %3224 = vmatprep.subr.mxu0 0.0
    %3225 = vmatpush2.msra.mxu0 0.0
    %3226 = vmatprep.subr.mxu0 0.0
    %3227 = vmatpush2.msra.mxu0 0.0
    %3228 = vmatprep.subr.mxu0 0.0
    %3229 = vmatpush2.msra.mxu0 0.0
    %3230 = vmatprep.subr.mxu0 0.0
    %3231 = vmatpush2.msra.mxu0 0.0
    %3232 = vmatprep.mubr.f32.mxu0 0.0
    %3233 = vmatmul.mubr.f32.gmra.mxu0 %v3093
    %v3234 = vpop.f32.mrf.mxu0
    %v3235 = vadd.f32 0.0, %v3234
    %v3236 = vpop.f32.mrf.mxu0
    %v3237 = vadd.f32 0.0, %v3236
    %3238 = vdwg.mxu0
    %v3243 = vcombine.low %v3164, %v3166
    %v3244 = vcombine.low %v3235, %v3237
    %v3246 = vunpack.c.l.s4 1966171168
    %v3247 = vunpack.c.0.s8 %v3246
    %v3248 = vlaneseq
    %v3249 = vshrl.u32 %v3248, 7
    %v3250 = vsub.s32 %v3247, %v3249
    %v3251 = vrot.slane %v3243, %v3250
    %v3253 = vunpack.c.l.s4 1966171168
    %v3254 = vunpack.c.0.s8 %v3253
    %v3255 = vlaneseq
    %v3256 = vshrl.u32 %v3255, 7
    %v3257 = vsub.s32 %v3254, %v3256
    %v3258 = vrot.slane %v3244, %v3257
    %v3259 = vcombine.low %v3251, %v3258
    %v3261 = vunpack.c.l.s4 1966171168
    %v3262 = vunpack.c.0.s8 %v3261
    %v3263 = vlaneseq
    %v3264 = vshrl.u32 %v3263, 7
    %v3265 = vsub.s32 %v3262, %v3264
    %v3266 = vrot.slane %v3259, %v3265
    %v3268 = vadd.f32 %v3096, %v3266
    %v3269 = vxor.u32 %v3268, 2147483648
    %v3270 = vmul.f32 %v3269, 1.442695
    %v3271 = vpow.pop %v3270
    %v3272 = vadd.f32 %v3271, 1.0
    %v3273 = vrcp.pop %v3272
    %v3274 = vmul.f32 1.0, %v3273
    %v3276 = vrot.slane %v3268, 3
    %v3278 = vtanh.pop %v3276
    %v3280 = vrot.slane %v3274, 1
    %v3282 = vmul.f32 %v3280, %v3089
    %v3283 = vmul.f32 %v3274, %v3278
    %v3284 = vadd.f32 %v3282, %v3283
    %v3285 = vtanh.pop %v3284
    %v3286 = vrot.slane %v3274, 2
    %v3288 = vmul.f32 %v3286, %v3285
    %3289 = vst [vmem:[#allocation3 + $0xe] sm:$0x1] %v3288
    %s3290 = scalar_lea.vmem [#allocation2], 39
    %v3291 = vld [vmem:[%s3290] ss:$8 sm:$0xf]
    %3292 = vmatprep.subr.mxu0 %v363
    %3293 = vmatpush1.msra.mxu0 %v362
    %3294 = vmatprep.subr.mxu0 %v359
    %3295 = vmatpush1.msra.mxu0 %v358
    %3296 = vmatprep.subr.mxu0 %v355
    %3297 = vmatpush1.msra.mxu0 %v354
    %3298 = vmatprep.subr.mxu0 %v351
    %3299 = vmatpush1.msra.mxu0 %v350
    %3300 = vmatprep.subr.mxu0 %v347
    %3301 = vmatpush1.msra.mxu0 %v346
    %3302 = vmatprep.subr.mxu0 %v343
    %3303 = vmatpush1.msra.mxu0 %v342
    %3304 = vmatprep.subr.mxu0 %v339
    %3305 = vmatpush1.msra.mxu0 %v338
    %3306 = vmatprep.subr.mxu0 %v335
    %3307 = vmatpush1.msra.mxu0 %v334
    %3308 = vmatprep.subr.mxu0 %v331
    %3309 = vmatpush1.msra.mxu0 %v330
    %3310 = vmatprep.subr.mxu0 %v327
    %3311 = vmatpush1.msra.mxu0 %v326
    %3312 = vmatprep.subr.mxu0 %v323
    %3313 = vmatpush1.msra.mxu0 %v322
    %3314 = vmatprep.subr.mxu0 %v319
    %3315 = vmatpush1.msra.mxu0 %v318
    %3316 = vmatprep.subr.mxu0 %v315
    %3317 = vmatpush1.msra.mxu0 %v314
    %3318 = vmatprep.subr.mxu0 %v311
    %3319 = vmatpush1.msra.mxu0 %v310
    %3320 = vmatprep.subr.mxu0 %v307
    %3321 = vmatpush1.msra.mxu0 %v306
    %3322 = vmatprep.subr.mxu0 %v303
    %3323 = vmatpush1.msra.mxu0 %v302
    %3324 = vmatprep.subr.mxu0 0.0
    %3325 = vmatpush2.msra.mxu0 0.0
    %3326 = vmatprep.subr.mxu0 0.0
    %3327 = vmatpush2.msra.mxu0 0.0
    %3328 = vmatprep.subr.mxu0 0.0
    %3329 = vmatpush2.msra.mxu0 0.0
    %3330 = vmatprep.subr.mxu0 0.0
    %3331 = vmatpush2.msra.mxu0 0.0
    %3332 = vmatprep.subr.mxu0 0.0
    %3333 = vmatpush2.msra.mxu0 0.0
    %3334 = vmatprep.subr.mxu0 0.0
    %3335 = vmatpush2.msra.mxu0 0.0
    %3336 = vmatprep.subr.mxu0 0.0
    %3337 = vmatpush2.msra.mxu0 0.0
    %3338 = vmatprep.subr.mxu0 0.0
    %3339 = vmatpush2.msra.mxu0 0.0
    %3340 = vmatprep.subr.mxu0 0.0
    %3341 = vmatpush2.msra.mxu0 0.0
    %3342 = vmatprep.subr.mxu0 0.0
    %3343 = vmatpush2.msra.mxu0 0.0
    %3344 = vmatprep.subr.mxu0 0.0
    %3345 = vmatpush2.msra.mxu0 0.0
    %3346 = vmatprep.subr.mxu0 0.0
    %3347 = vmatpush2.msra.mxu0 0.0
    %3348 = vmatprep.subr.mxu0 0.0
    %3349 = vmatpush2.msra.mxu0 0.0
    %3350 = vmatprep.subr.mxu0 0.0
    %3351 = vmatpush2.msra.mxu0 0.0
    %3352 = vmatprep.subr.mxu0 0.0
    %3353 = vmatpush2.msra.mxu0 0.0
    %3354 = vmatprep.subr.mxu0 0.0
    %3355 = vmatpush2.msra.mxu0 0.0
    %3356 = vmatprep.mubr.f32.mxu0 0.0
    %3357 = vmatmul.mubr.f32.gmra.mxu0 %v3288
    %v3358 = vpop.f32.mrf.mxu0
    %v3359 = vadd.f32 0.0, %v3358
    %v3360 = vpop.f32.mrf.mxu0
    %v3361 = vadd.f32 0.0, %v3360
    %3362 = vdwg.mxu0
    %3363 = vmatprep.subr.mxu0 %v365
    %3364 = vmatpush1.msra.mxu0 %v364
    %3365 = vmatprep.subr.mxu0 %v361
    %3366 = vmatpush1.msra.mxu0 %v360
    %3367 = vmatprep.subr.mxu0 %v357
    %3368 = vmatpush1.msra.mxu0 %v356
    %3369 = vmatprep.subr.mxu0 %v353
    %3370 = vmatpush1.msra.mxu0 %v352
    %3371 = vmatprep.subr.mxu0 %v349
    %3372 = vmatpush1.msra.mxu0 %v348
    %3373 = vmatprep.subr.mxu0 %v345
    %3374 = vmatpush1.msra.mxu0 %v344
    %3375 = vmatprep.subr.mxu0 %v341
    %3376 = vmatpush1.msra.mxu0 %v340
    %3377 = vmatprep.subr.mxu0 %v337
    %3378 = vmatpush1.msra.mxu0 %v336
    %3379 = vmatprep.subr.mxu0 %v333
    %3380 = vmatpush1.msra.mxu0 %v332
    %3381 = vmatprep.subr.mxu0 %v329
    %3382 = vmatpush1.msra.mxu0 %v328
    %3383 = vmatprep.subr.mxu0 %v325
    %3384 = vmatpush1.msra.mxu0 %v324
    %3385 = vmatprep.subr.mxu0 %v321
    %3386 = vmatpush1.msra.mxu0 %v320
    %3387 = vmatprep.subr.mxu0 %v317
    %3388 = vmatpush1.msra.mxu0 %v316
    %3389 = vmatprep.subr.mxu0 %v313
    %3390 = vmatpush1.msra.mxu0 %v312
    %3391 = vmatprep.subr.mxu0 %v309
    %3392 = vmatpush1.msra.mxu0 %v308
    %3393 = vmatprep.subr.mxu0 %v305
    %3394 = vmatpush1.msra.mxu0 %v304
    %3395 = vmatprep.subr.mxu0 0.0
    %3396 = vmatpush2.msra.mxu0 0.0
    %3397 = vmatprep.subr.mxu0 0.0
    %3398 = vmatpush2.msra.mxu0 0.0
    %3399 = vmatprep.subr.mxu0 0.0
    %3400 = vmatpush2.msra.mxu0 0.0
    %3401 = vmatprep.subr.mxu0 0.0
    %3402 = vmatpush2.msra.mxu0 0.0
    %3403 = vmatprep.subr.mxu0 0.0
    %3404 = vmatpush2.msra.mxu0 0.0
    %3405 = vmatprep.subr.mxu0 0.0
    %3406 = vmatpush2.msra.mxu0 0.0
    %3407 = vmatprep.subr.mxu0 0.0
    %3408 = vmatpush2.msra.mxu0 0.0
    %3409 = vmatprep.subr.mxu0 0.0
    %3410 = vmatpush2.msra.mxu0 0.0
    %3411 = vmatprep.subr.mxu0 0.0
    %3412 = vmatpush2.msra.mxu0 0.0
    %3413 = vmatprep.subr.mxu0 0.0
    %3414 = vmatpush2.msra.mxu0 0.0
    %3415 = vmatprep.subr.mxu0 0.0
    %3416 = vmatpush2.msra.mxu0 0.0
    %3417 = vmatprep.subr.mxu0 0.0
    %3418 = vmatpush2.msra.mxu0 0.0
    %3419 = vmatprep.subr.mxu0 0.0
    %3420 = vmatpush2.msra.mxu0 0.0
    %3421 = vmatprep.subr.mxu0 0.0
    %3422 = vmatpush2.msra.mxu0 0.0
    %3423 = vmatprep.subr.mxu0 0.0
    %3424 = vmatpush2.msra.mxu0 0.0
    %3425 = vmatprep.subr.mxu0 0.0
    %3426 = vmatpush2.msra.mxu0 0.0
    %3427 = vmatprep.mubr.f32.mxu0 0.0
    %3428 = vmatmul.mubr.f32.gmra.mxu0 %v3288
    %v3429 = vpop.f32.mrf.mxu0
    %v3430 = vadd.f32 0.0, %v3429
    %v3431 = vpop.f32.mrf.mxu0
    %v3432 = vadd.f32 0.0, %v3431
    %3433 = vdwg.mxu0
    %v3438 = vcombine.low %v3359, %v3361
    %v3439 = vcombine.low %v3430, %v3432
    %v3441 = vunpack.c.l.s4 1966171168
    %v3442 = vunpack.c.0.s8 %v3441
    %v3443 = vlaneseq
    %v3444 = vshrl.u32 %v3443, 7
    %v3445 = vsub.s32 %v3442, %v3444
    %v3446 = vrot.slane %v3438, %v3445
    %v3448 = vunpack.c.l.s4 1966171168
    %v3449 = vunpack.c.0.s8 %v3448
    %v3450 = vlaneseq
    %v3451 = vshrl.u32 %v3450, 7
    %v3452 = vsub.s32 %v3449, %v3451
    %v3453 = vrot.slane %v3439, %v3452
    %v3454 = vcombine.low %v3446, %v3453
    %v3456 = vunpack.c.l.s4 1966171168
    %v3457 = vunpack.c.0.s8 %v3456
    %v3458 = vlaneseq
    %v3459 = vshrl.u32 %v3458, 7
    %v3460 = vsub.s32 %v3457, %v3459
    %v3461 = vrot.slane %v3454, %v3460
    %v3463 = vadd.f32 %v3291, %v3461
    %v3464 = vxor.u32 %v3463, 2147483648
    %v3465 = vmul.f32 %v3464, 1.442695
    %v3466 = vpow.pop %v3465
    %v3467 = vadd.f32 %v3466, 1.0
    %v3468 = vrcp.pop %v3467
    %v3469 = vmul.f32 1.0, %v3468
    %v3471 = vrot.slane %v3463, 3
    %v3473 = vtanh.pop %v3471
    %v3475 = vrot.slane %v3469, 1
    %v3477 = vmul.f32 %v3475, %v3284
    %v3478 = vmul.f32 %v3469, %v3473
    %v3479 = vadd.f32 %v3477, %v3478
    %v3480 = vtanh.pop %v3479
    %v3481 = vrot.slane %v3469, 2
    %v3483 = vmul.f32 %v3481, %v3480
    %3484 = vst [vmem:[#allocation3 + $0xf] sm:$0x1] %v3483
    %v3485 = vld [vmem:[#allocation3] sm:$0xff]
    %v3486 = vld [vmem:[#allocation3 + $0x8] sm:$0xff]
    %v3487 = vld [vmem:[%s4] sm:$0xff]
    %v3488 = vld [vmem:[%s4 + $0x8] sm:$0xff]
    %v3489 = vld [vmem:[%s4 + $0x10] sm:$0xff]
    %v3490 = vld [vmem:[%s4 + $0x18] sm:$0xff]
    %v3491 = vld [vmem:[%s4 + $0x20] sm:$0xff]
    %v3492 = vld [vmem:[%s4 + $0x28] sm:$0xff]
    %v3493 = vld [vmem:[%s4 + $0x30] sm:$0xff]
    %v3494 = vld [vmem:[%s4 + $0x38] sm:$0xff]
    %v3495 = vld [vmem:[%s4 + $0x40] sm:$0xff]
    %v3496 = vld [vmem:[%s4 + $0x48] sm:$0xff]
    %v3497 = vld [vmem:[%s4 + $0x50] sm:$0xff]
    %v3498 = vld [vmem:[%s4 + $0x58] sm:$0xff]
    %v3499 = vld [vmem:[%s4 + $0x60] sm:$0xff]
    %v3500 = vld [vmem:[%s4 + $0x68] sm:$0xff]
    %v3501 = vld [vmem:[%s4 + $0x70] sm:$0xff]
    %v3502 = vld [vmem:[%s4 + $0x78] sm:$0xff]
    %s3503 = sld [smem:[#allocation4]]
    %v3504 = vstv %s3503
    %3505 = vmatprep.subr.mxu0 0.0
    %3506 = vmatpush1.msra.mxu0 %v3502
    %3507 = vmatprep.subr.mxu0 0.0
    %3508 = vmatpush1.msra.mxu0 %v3501
    %3509 = vmatprep.subr.mxu0 0.0
    %3510 = vmatpush1.msra.mxu0 %v3500
    %3511 = vmatprep.subr.mxu0 0.0
    %3512 = vmatpush1.msra.mxu0 %v3499
    %3513 = vmatprep.subr.mxu0 0.0
    %3514 = vmatpush1.msra.mxu0 %v3498
    %3515 = vmatprep.subr.mxu0 0.0
    %3516 = vmatpush1.msra.mxu0 %v3497
    %3517 = vmatprep.subr.mxu0 0.0
    %3518 = vmatpush1.msra.mxu0 %v3496
    %3519 = vmatprep.subr.mxu0 0.0
    %3520 = vmatpush1.msra.mxu0 %v3495
    %3521 = vmatprep.subr.mxu0 0.0
    %3522 = vmatpush1.msra.mxu0 %v3494
    %3523 = vmatprep.subr.mxu0 0.0
    %3524 = vmatpush1.msra.mxu0 %v3493
    %3525 = vmatprep.subr.mxu0 0.0
    %3526 = vmatpush1.msra.mxu0 %v3492
    %3527 = vmatprep.subr.mxu0 0.0
    %3528 = vmatpush1.msra.mxu0 %v3491
    %3529 = vmatprep.subr.mxu0 0.0
    %3530 = vmatpush1.msra.mxu0 %v3490
    %3531 = vmatprep.subr.mxu0 0.0
    %3532 = vmatpush1.msra.mxu0 %v3489
    %3533 = vmatprep.subr.mxu0 0.0
    %3534 = vmatpush1.msra.mxu0 %v3488
    %3535 = vmatprep.subr.mxu0 0.0
    %3536 = vmatpush1.msra.mxu0 %v3487
    %3537 = vmatprep.subr.mxu0 0.0
    %3538 = vmatpush2.msra.mxu0 0.0
    %3539 = vmatprep.subr.mxu0 0.0
    %3540 = vmatpush2.msra.mxu0 0.0
    %3541 = vmatprep.subr.mxu0 0.0
    %3542 = vmatpush2.msra.mxu0 0.0
    %3543 = vmatprep.subr.mxu0 0.0
    %3544 = vmatpush2.msra.mxu0 0.0
    %3545 = vmatprep.subr.mxu0 0.0
    %3546 = vmatpush2.msra.mxu0 0.0
    %3547 = vmatprep.subr.mxu0 0.0
    %3548 = vmatpush2.msra.mxu0 0.0
    %3549 = vmatprep.subr.mxu0 0.0
    %3550 = vmatpush2.msra.mxu0 0.0
    %3551 = vmatprep.subr.mxu0 0.0
    %3552 = vmatpush2.msra.mxu0 0.0
    %3553 = vmatprep.subr.mxu0 0.0
    %3554 = vmatpush2.msra.mxu0 0.0
    %3555 = vmatprep.subr.mxu0 0.0
    %3556 = vmatpush2.msra.mxu0 0.0
    %3557 = vmatprep.subr.mxu0 0.0
    %3558 = vmatpush2.msra.mxu0 0.0
    %3559 = vmatprep.subr.mxu0 0.0
    %3560 = vmatpush2.msra.mxu0 0.0
    %3561 = vmatprep.subr.mxu0 0.0
    %3562 = vmatpush2.msra.mxu0 0.0
    %3563 = vmatprep.subr.mxu0 0.0
    %3564 = vmatpush2.msra.mxu0 0.0
    %3565 = vmatprep.subr.mxu0 0.0
    %3566 = vmatpush2.msra.mxu0 0.0
    %3567 = vmatprep.subr.mxu0 0.0
    %3568 = vmatpush2.msra.mxu0 0.0
    %3569 = vmatprep.mubr.f32.mxu0 0.0
    %3570 = vmatmul.mubr.f32.gmra.mxu0 %v3485
    %v3571 = vpop.f32.mrf.mxu0
    %v3572 = vadd.f32 %v3504, %v3571
    %v3573 = vpop.f32.mrf.mxu0
    %3574 = vmatprep.mubr.f32.mxu0 0.0
    %3575 = vmatmul.mubr.f32.gmra.mxu0 %v3486
    %v3576 = vpop.f32.mrf.mxu0
    %v3577 = vadd.f32 %v3504, %v3576
    %v3578 = vpop.f32.mrf.mxu0
    %3579 = vdwg.mxu0
    %vm3580 = vcmask 7168
    %3581 = vst.msk [vmem:[%s6] sm:$0xff] %vm3580, %v3572
    %3582 = vst.msk [vmem:[%s6 + $0x8] sm:$0xff] %vm3580, %v3577
    // Predicated region
    $region34: #{tpu_custom_call.1} parent=1 // pred_check
      _
    $region35: #{tpu_custom_call.1} parent=1 // pred_check_branch
      %3584 = sbr.rel (0) target = $region37
    $region36: #{tpu_custom_call.1} parent=1 // pred_region
      _
    $region37: #{tpu_custom_call.1} parent=1 // pred_fallthru
      _
    // Predicated region
    $region38: #{tpu_custom_call.1} parent=1 // pred_check
      _
    $region39: #{tpu_custom_call.1} parent=1 // pred_check_branch
      %3586 = sbr.rel (0) target = $region41
    $region40: #{tpu_custom_call.1} parent=1 // pred_region
      _
    $region41: #{tpu_custom_call.1} parent=1 // pred_fallthru
      _
    %3587 = vsyncpa [#allocation6], 1
    %3588 = vsyncpa [#allocation8], 1

</llo_original>
